<compile_context>
chip_gen: v6e
topology: v6e:2x2x1
jax: 0.10.0
libtpu: 0.0.40
codegen_flags: <defaults>
</compile_context>

<pallas_src>
import jax
import jax.numpy as jnp
from jax.experimental import pallas as pl
from jax.experimental.pallas import tpu as pltpu


# ----------------------------- in-kernel helpers -----------------------------
def _mish(y):
    # mish(y) = y * tanh(softplus(y)) = y * (e^{2y} + 2 e^y) / (e^{2y} + 2 e^y + 2)
    # evaluated with e = exp(-|y|) in (0, 1] for stability.  One exp (EUP), one
    # divide, and two selects (den reuses num: den = num + select).
    e = jnp.exp(-jnp.abs(y))
    e2 = e * e
    pos = y >= 0
    num = jnp.where(pos, 1.0 + 2.0 * e, e2 + 2.0 * e)
    den = num + jnp.where(pos, 2.0 * e2, 2.0)
    return y * num / den


def _make_kernel(out_h, out_w):
    """Fused UpUnetBlock kernel for one batch element, flat (C, Ht*Wt) layout."""
    P = out_h * out_w
    taps = [(ky, kx) for ky in (-1, 0, 1) for kx in (-1, 0, 1)]

    def kernel(xup_ref, ur_ref, mask_ref,
               wp_ref, sp_ref, w1_ref, s1_ref, w2_ref, s2_ref,
               wsc_ref, bsc_ref, o_ref, taps_ref):

        def conv3x3_bn_mish(x_flat, w_ref, shift_ref):
            # x_flat: (Cin, P); w_ref: (Cout, 9*Cin); shift_ref: (Cout, 1).
            # Stack the 9 masked/rolled taps along the contraction dim in VMEM
            # scratch, then a single MXU matmul with K = 9*Cin.
            cin = x_flat.shape[0]
            for t, (ky, kx) in enumerate(taps):
                if ky == 0 and kx == 0:
                    piece = x_flat
                else:
                    # shifted[p] = x_flat[p + ky*out_w + kx]; the border wrap is
                    # zeroed by the precomputed mask (== zero padding).
                    sh = (-(ky * out_w + kx)) % P
                    piece = mask_ref[t:t + 1, :] * pltpu.roll(
                        x_flat, shift=sh, axis=1)
                taps_ref[t * cin:(t + 1) * cin, :] = piece
            y = jnp.dot(w_ref[...], taps_ref[0:9 * cin, :],
                        preferred_element_type=jnp.float32) + shift_ref[...]
            return _mish(y)

        x_up = xup_ref[...]                                       # (nc1, P)
        prepped = conv3x3_bn_mish(ur_ref[...], wp_ref, sp_ref)    # (nc1, P)
        combined = x_up + prepped                                 # (nc1, P)
        m = conv3x3_bn_mish(combined, w1_ref, s1_ref)             # (nc2, P)
        m = conv3x3_bn_mish(m, w2_ref, s2_ref)                    # (nc2, P)
        # shortcut: 1x1 conv applied AFTER the (single, shared) upsample; the
        # bias passes through the resample because operator rows sum to 1.
        sc = jnp.dot(wsc_ref[...], x_up,
                     preferred_element_type=jnp.float32) + bsc_ref[...]
        o_ref[...] = m + sc

    return kernel


# ----------------------------- host-side operators ---------------------------
def _interp_matrix(out_size, in_size):
    """Bilinear, align_corners=True interpolation operator, shape (out, in)."""
    if out_size == 1:
        src = jnp.zeros((1,), jnp.float32)
    else:
        src = jnp.arange(out_size, dtype=jnp.float32) * (
            (in_size - 1) / (out_size - 1))
    idx = jnp.arange(in_size, dtype=jnp.float32)
    return jnp.maximum(0.0, 1.0 - jnp.abs(src[:, None] - idx[None, :]))


def _bilinear_upsample(x, out_h, out_w):
    """Separable bilinear align_corners=True resize of NCHW x to (out_h, out_w)."""
    ah = _interp_matrix(out_h, x.shape[2])
    aw = _interp_matrix(out_w, x.shape[3])
    y = jnp.einsum("Hh,nchw->ncHw", ah, x)
    return jnp.einsum("Ww,ncHw->ncHW", aw, y)


def _tap_masks(h, w):
    """(9, h*w) f32 validity masks for the 3x3 taps (zero-padded borders)."""
    hh = jnp.arange(h)[:, None]
    ww = jnp.arange(w)[None, :]
    ms = []
    for ky in (-1, 0, 1):
        for kx in (-1, 0, 1):
            ok = ((hh + ky >= 0) & (hh + ky < h) &
                  (ww + kx >= 0) & (ww + kx < w))
            ms.append(ok.reshape(-1))
    return jnp.stack(ms).astype(jnp.float32)


def _fold_conv_bn(p):
    """Fold conv bias + eval-mode BatchNorm into (Cout, 9*Cin) weights + shift.

    y = BN(conv(x, w) + b) = conv(x, w*s) + ((b - mean)*s + beta),
    s = gamma / sqrt(var + eps).  Weight columns are ordered tap-major,
    channel-minor (t*Cin + ci) to match the in-kernel stacked-tap scratch.
    """
    s = p["gamma"] / jnp.sqrt(p["var"] + p["eps"])
    w = p["w"] * s[:, None, None, None]                       # (Cout, Cin, 3, 3)
    cout, cin = w.shape[0], w.shape[1]
    w2d = jnp.transpose(w, (0, 2, 3, 1)).reshape(cout, 9 * cin)
    shift = ((p["b"] - p["mean"]) * s + p["beta"]).reshape(cout, 1)
    return w2d, shift


# ------------------------------- public wrapper -------------------------------
def up_unet_block(x, unet_res, params):
    """x: (N, nc1, H, W), unet_res: (N, nc2, Ht, Wt); NCHW float32."""
    N, nc1, H, W = x.shape
    _, nc2, Ht, Wt = unet_res.shape
    Pout = Ht * Wt

    # Single (separable) upsample of the small low-res input; the shortcut 1x1
    # conv is applied to it *inside* the kernel (review #1 / #2).
    x_up = _bilinear_upsample(x, Ht, Wt).reshape(N, nc1, Pout)
    ur_flat = unet_res.reshape(N, nc2, Pout)

    masks = _tap_masks(Ht, Wt)                        # (9, Pout)
    wp, sp = _fold_conv_bn(params["prep"])            # (nc1, 9*nc2), (nc1, 1)
    w1, s1 = _fold_conv_bn(params["main1"])           # (nc2, 9*nc1), (nc2, 1)
    w2, s2 = _fold_conv_bn(params["main2"])           # (nc2, 9*nc2), (nc2, 1)
    wsc = params["sc_w"]                              # (nc2, nc1)
    bsc = params["sc_b"].reshape(nc2, 1)

    cmax = max(nc1, nc2)
    const2 = lambda n: (0, 0)

    out = pl.pallas_call(
        _make_kernel(Ht, Wt),
        out_shape=jax.ShapeDtypeStruct((N, nc2, Pout), jnp.float32),
        grid_spec=pltpu.PrefetchScalarGridSpec(
            num_scalar_prefetch=0,
            grid=(N,),
            in_specs=[
                pl.BlockSpec((None, nc1, Pout), lambda n: (n, 0, 0)),
                pl.BlockSpec((None, nc2, Pout), lambda n: (n, 0, 0)),
                pl.BlockSpec((9, Pout), const2),
                pl.BlockSpec((nc1, 9 * nc2), const2),
                pl.BlockSpec((nc1, 1), const2),
                pl.BlockSpec((nc2, 9 * nc1), const2),
                pl.BlockSpec((nc2, 1), const2),
                pl.BlockSpec((nc2, 9 * nc2), const2),
                pl.BlockSpec((nc2, 1), const2),
                pl.BlockSpec((nc2, nc1), const2),
                pl.BlockSpec((nc2, 1), const2),
            ],
            out_specs=pl.BlockSpec((None, nc2, Pout), lambda n: (n, 0, 0)),
            scratch_shapes=[pltpu.VMEM((9 * cmax, Pout), jnp.float32)],
        ),
        compiler_params=pltpu.CompilerParams(
            dimension_semantics=("parallel",),
            vmem_limit_bytes=64 * 1024 * 1024),
    )(x_up, ur_flat, masks, wp, sp, w1, s1, w2, s2, wsc, bsc)

    return out.reshape(N, nc2, Ht, Wt)


# ------------------------------ pure-JAX reference ----------------------------
def _ref_mish(y):
    sp = jnp.maximum(y, 0.0) + jnp.log1p(jnp.exp(-jnp.abs(y)))
    return y * jnp.tanh(sp)


def _ref_conv_block(x, p):
    y = jax.lax.conv_general_dilated(
        x, p["w"], (1, 1), "SAME", dimension_numbers=("NCHW", "OIHW", "NCHW"))
    y = y + p["b"].reshape(1, -1, 1, 1)
    y = (y - p["mean"].reshape(1, -1, 1, 1)) * (
        p["gamma"].reshape(1, -1, 1, 1)
        / jnp.sqrt(p["var"].reshape(1, -1, 1, 1) + p["eps"]))
    y = y + p["beta"].reshape(1, -1, 1, 1)
    return _ref_mish(y)


def _ref_upsample_add(x, y):
    up = _bilinear_upsample(x, y.shape[2], y.shape[3])
    return up + y


def _ref_forward(x, unet_res, params):
    prepped = _ref_conv_block(unet_res, params["prep"])
    combined = _ref_upsample_add(x, prepped)
    m = _ref_conv_block(combined, params["main1"])
    m = _ref_conv_block(m, params["main2"])
    sc = (jnp.einsum("oc,nchw->nohw", params["sc_w"], x)
          + params["sc_b"].reshape(1, -1, 1, 1))
    return _ref_upsample_add(sc, m)


# -------------------------------------- test ----------------------------------
if __name__ == "__main__":
    key = jax.random.PRNGKey(0)
    nc1, nc2 = 4, 8
    N, H, W = 2, 16, 16
    k_prep, k_m1, k_m2, k_scw, k_scb, k_x, k_ur = jax.random.split(key, 7)

    def conv_block_params(k, cin, cout):
        kw, kb, kg, kbeta, km, kv = jax.random.split(k, 6)
        return dict(
            w=0.1 * jax.random.normal(kw, (cout, cin, 3, 3), jnp.float32),
            b=0.1 * jax.random.normal(kb, (cout,), jnp.float32),
            gamma=1.0 + 0.1 * jax.random.normal(kg, (cout,), jnp.float32),
            beta=0.1 * jax.random.normal(kbeta, (cout,), jnp.float32),
            mean=0.1 * jax.random.normal(km, (cout,), jnp.float32),
            var=0.5 + jax.random.uniform(kv, (cout,), jnp.float32),
            eps=1e-5,
        )

    params = {
        "prep": conv_block_params(k_prep, nc2, nc1),
        "main1": conv_block_params(k_m1, nc1, nc2),
        "main2": conv_block_params(k_m2, nc2, nc2),
        "sc_w": 0.1 * jax.random.normal(k_scw, (nc2, nc1), jnp.float32),
        "sc_b": 0.1 * jax.random.normal(k_scb, (nc2,), jnp.float32),
    }

    x = jax.random.normal(k_x, (N, nc1, H, W), jnp.float32)
    unet_res = jax.random.normal(k_ur, (N, nc2, 2 * H, 2 * W), jnp.float32)

    # Precondition for applying the shortcut 1x1 conv after the shared upsample:
    # every row of the align_corners interpolation operator sums to 1, so the
    # per-channel bias commutes through the resample (review correctness note).
    ah = _interp_matrix(2 * H, H)
    aw = _interp_matrix(2 * W, W)
    assert bool(jnp.allclose(ah.sum(axis=1), 1.0, atol=1e-6))
    assert bool(jnp.allclose(aw.sum(axis=1), 1.0, atol=1e-6))

    out = jax.jit(up_unet_block)(x, unet_res, params)
    out = jax.block_until_ready(out)

    ref = _ref_forward(x, unet_res, params)
    assert out.shape == (N, nc2, 2 * H, 2 * W), out.shape
    err = float(jnp.max(jnp.abs(out - ref)))
    assert jnp.allclose(out, ref, atol=1e-3, rtol=1e-3), err
    print("KERNEL_OK")
</pallas_src>

<mosaic_0001>
module attributes {stable_mosaic.version = 11 : i64} {
  func.func @kernel(%arg0: i32, %arg1: memref<1x4x1024xf32, #tpu.memory_space<vmem>>, %arg2: memref<1x8x1024xf32, #tpu.memory_space<vmem>>, %arg3: memref<9x1024xf32, #tpu.memory_space<vmem>>, %arg4: memref<4x72xf32, #tpu.memory_space<vmem>>, %arg5: memref<4x1xf32, #tpu.memory_space<vmem>>, %arg6: memref<8x36xf32, #tpu.memory_space<vmem>>, %arg7: memref<8x1xf32, #tpu.memory_space<vmem>>, %arg8: memref<8x72xf32, #tpu.memory_space<vmem>>, %arg9: memref<8x1xf32, #tpu.memory_space<vmem>>, %arg10: memref<8x4xf32, #tpu.memory_space<vmem>>, %arg11: memref<8x1xf32, #tpu.memory_space<vmem>>, %arg12: memref<1x8x1024xf32, #tpu.memory_space<vmem>>, %arg13: memref<72x1024xf32, #tpu.memory_space<vmem>>) attributes {dimension_semantics = [#tpu.dimension_semantics<parallel>], iteration_bounds = array<i64: 2>, scalar_prefetch = 0 : i64, scratch_operands = 1 : i64, tpu.core_type = #tpu.core_type<tc>, window_params = [{transform_indices = @transform_0, window_bounds = array<i64: 1, 4, 1024>}, {transform_indices = @transform_1, window_bounds = array<i64: 1, 8, 1024>}, {pipeline_mode = #tpu.pipeline_mode<synchronous>, transform_indices = @transform_2, window_bounds = array<i64: 9, 1024>}, {pipeline_mode = #tpu.pipeline_mode<synchronous>, transform_indices = @transform_3, window_bounds = array<i64: 4, 72>}, {pipeline_mode = #tpu.pipeline_mode<synchronous>, transform_indices = @transform_4, window_bounds = array<i64: 4, 1>}, {pipeline_mode = #tpu.pipeline_mode<synchronous>, transform_indices = @transform_5, window_bounds = array<i64: 8, 36>}, {pipeline_mode = #tpu.pipeline_mode<synchronous>, transform_indices = @transform_6, window_bounds = array<i64: 8, 1>}, {pipeline_mode = #tpu.pipeline_mode<synchronous>, transform_indices = @transform_7, window_bounds = array<i64: 8, 72>}, {pipeline_mode = #tpu.pipeline_mode<synchronous>, transform_indices = @transform_8, window_bounds = array<i64: 8, 1>}, {pipeline_mode = #tpu.pipeline_mode<synchronous>, transform_indices = @transform_9, window_bounds = array<i64: 8, 4>}, {pipeline_mode = #tpu.pipeline_mode<synchronous>, transform_indices = @transform_10, window_bounds = array<i64: 8, 1>}, {transform_indices = @transform_11, window_bounds = array<i64: 1, 8, 1024>}]} {
    %c0 = arith.constant 0 : index
    %c0_0 = arith.constant 0 : index
    %c0_1 = arith.constant 0 : index
    %0 = vector.load %arg1[%c0, %c0_0, %c0_1] : memref<1x4x1024xf32, #tpu.memory_space<vmem>>, vector<1x4x1024xf32>
    %1 = vector.shape_cast %0 : vector<1x4x1024xf32> to vector<4x1024xf32>
    %c0_2 = arith.constant 0 : index
    %c0_3 = arith.constant 0 : index
    %c0_4 = arith.constant 0 : index
    %2 = vector.load %arg2[%c0_2, %c0_3, %c0_4] : memref<1x8x1024xf32, #tpu.memory_space<vmem>>, vector<1x8x1024xf32>
    %3 = vector.shape_cast %2 : vector<1x8x1024xf32> to vector<8x1024xf32>
    %c0_5 = arith.constant 0 : index
    %c0_6 = arith.constant 0 : index
    %4 = vector.load %arg3[%c0_5, %c0_6] : memref<9x1024xf32, #tpu.memory_space<vmem>>, vector<1x1024xf32>
    %c33_i32 = arith.constant 33 : i32
    %5 = tpu.dynamic_rotate %3 by %c33_i32 dim 1 : vector<8x1024xf32>, i32 -> vector<8x1024xf32>
    %6 = vector.broadcast %4 : vector<1x1024xf32> to vector<8x1024xf32>
    %7 = arith.mulf %6, %5 : vector<8x1024xf32>
    %c0_7 = arith.constant 0 : index
    %c0_8 = arith.constant 0 : index
    %8 = vector.load %arg13[%c0_7, %c0_8] : memref<72x1024xf32, #tpu.memory_space<vmem>>, vector<8x1024xf32>
    tpu.vector_store %arg13[%c0_7, %c0_8], %7 {strides = array<i32>} : memref<72x1024xf32, #tpu.memory_space<vmem>>, vector<8x1024xf32>,
    %c1 = arith.constant 1 : index
    %c0_9 = arith.constant 0 : index
    %9 = vector.load %arg3[%c1, %c0_9] : memref<9x1024xf32, #tpu.memory_space<vmem>>, vector<1x1024xf32>
    %c32_i32 = arith.constant 32 : i32
    %10 = tpu.dynamic_rotate %3 by %c32_i32 dim 1 : vector<8x1024xf32>, i32 -> vector<8x1024xf32>
    %11 = vector.broadcast %9 : vector<1x1024xf32> to vector<8x1024xf32>
    %12 = arith.mulf %11, %10 : vector<8x1024xf32>
    %c8 = arith.constant 8 : index
    %c0_10 = arith.constant 0 : index
    %13 = vector.load %arg13[%c8, %c0_10] : memref<72x1024xf32, #tpu.memory_space<vmem>>, vector<8x1024xf32>
    tpu.vector_store %arg13[%c8, %c0_10], %12 {strides = array<i32>} : memref<72x1024xf32, #tpu.memory_space<vmem>>, vector<8x1024xf32>,
    %c2 = arith.constant 2 : index
    %c0_11 = arith.constant 0 : index
    %14 = vector.load %arg3[%c2, %c0_11] : memref<9x1024xf32, #tpu.memory_space<vmem>>, vector<1x1024xf32>
    %c31_i32 = arith.constant 31 : i32
    %15 = tpu.dynamic_rotate %3 by %c31_i32 dim 1 : vector<8x1024xf32>, i32 -> vector<8x1024xf32>
    %16 = vector.broadcast %14 : vector<1x1024xf32> to vector<8x1024xf32>
    %17 = arith.mulf %16, %15 : vector<8x1024xf32>
    %c16 = arith.constant 16 : index
    %c0_12 = arith.constant 0 : index
    %18 = vector.load %arg13[%c16, %c0_12] : memref<72x1024xf32, #tpu.memory_space<vmem>>, vector<8x1024xf32>
    tpu.vector_store %arg13[%c16, %c0_12], %17 {strides = array<i32>} : memref<72x1024xf32, #tpu.memory_space<vmem>>, vector<8x1024xf32>,
    %c3 = arith.constant 3 : index
    %c0_13 = arith.constant 0 : index
    %19 = vector.load %arg3[%c3, %c0_13] : memref<9x1024xf32, #tpu.memory_space<vmem>>, vector<1x1024xf32>
    %c1_i32 = arith.constant 1 : i32
    %20 = tpu.dynamic_rotate %3 by %c1_i32 dim 1 : vector<8x1024xf32>, i32 -> vector<8x1024xf32>
    %21 = vector.broadcast %19 : vector<1x1024xf32> to vector<8x1024xf32>
    %22 = arith.mulf %21, %20 : vector<8x1024xf32>
    %c24 = arith.constant 24 : index
    %c0_14 = arith.constant 0 : index
    %23 = vector.load %arg13[%c24, %c0_14] : memref<72x1024xf32, #tpu.memory_space<vmem>>, vector<8x1024xf32>
    tpu.vector_store %arg13[%c24, %c0_14], %22 {strides = array<i32>} : memref<72x1024xf32, #tpu.memory_space<vmem>>, vector<8x1024xf32>,
    %c32 = arith.constant 32 : index
    %c0_15 = arith.constant 0 : index
    %24 = vector.load %arg13[%c32, %c0_15] : memref<72x1024xf32, #tpu.memory_space<vmem>>, vector<8x1024xf32>
    tpu.vector_store %arg13[%c32, %c0_15], %3 {strides = array<i32>} : memref<72x1024xf32, #tpu.memory_space<vmem>>, vector<8x1024xf32>,
    %c5 = arith.constant 5 : index
    %c0_16 = arith.constant 0 : index
    %25 = vector.load %arg3[%c5, %c0_16] : memref<9x1024xf32, #tpu.memory_space<vmem>>, vector<1x1024xf32>
    %c1023_i32 = arith.constant 1023 : i32
    %26 = tpu.dynamic_rotate %3 by %c1023_i32 dim 1 : vector<8x1024xf32>, i32 -> vector<8x1024xf32>
    %27 = vector.broadcast %25 : vector<1x1024xf32> to vector<8x1024xf32>
    %28 = arith.mulf %27, %26 : vector<8x1024xf32>
    %c40 = arith.constant 40 : index
    %c0_17 = arith.constant 0 : index
    %29 = vector.load %arg13[%c40, %c0_17] : memref<72x1024xf32, #tpu.memory_space<vmem>>, vector<8x1024xf32>
    tpu.vector_store %arg13[%c40, %c0_17], %28 {strides = array<i32>} : memref<72x1024xf32, #tpu.memory_space<vmem>>, vector<8x1024xf32>,
    %c6 = arith.constant 6 : index
    %c0_18 = arith.constant 0 : index
    %30 = vector.load %arg3[%c6, %c0_18] : memref<9x1024xf32, #tpu.memory_space<vmem>>, vector<1x1024xf32>
    %c993_i32 = arith.constant 993 : i32
    %31 = tpu.dynamic_rotate %3 by %c993_i32 dim 1 : vector<8x1024xf32>, i32 -> vector<8x1024xf32>
    %32 = vector.broadcast %30 : vector<1x1024xf32> to vector<8x1024xf32>
    %33 = arith.mulf %32, %31 : vector<8x1024xf32>
    %c48 = arith.constant 48 : index
    %c0_19 = arith.constant 0 : index
    %34 = vector.load %arg13[%c48, %c0_19] : memref<72x1024xf32, #tpu.memory_space<vmem>>, vector<8x1024xf32>
    tpu.vector_store %arg13[%c48, %c0_19], %33 {strides = array<i32>} : memref<72x1024xf32, #tpu.memory_space<vmem>>, vector<8x1024xf32>,
    %c7 = arith.constant 7 : index
    %c0_20 = arith.constant 0 : index
    %35 = vector.load %arg3[%c7, %c0_20] : memref<9x1024xf32, #tpu.memory_space<vmem>>, vector<1x1024xf32>
    %c992_i32 = arith.constant 992 : i32
    %36 = tpu.dynamic_rotate %3 by %c992_i32 dim 1 : vector<8x1024xf32>, i32 -> vector<8x1024xf32>
    %37 = vector.broadcast %35 : vector<1x1024xf32> to vector<8x1024xf32>
    %38 = arith.mulf %37, %36 : vector<8x1024xf32>
    %c56 = arith.constant 56 : index
    %c0_21 = arith.constant 0 : index
    %39 = vector.load %arg13[%c56, %c0_21] : memref<72x1024xf32, #tpu.memory_space<vmem>>, vector<8x1024xf32>
    tpu.vector_store %arg13[%c56, %c0_21], %38 {strides = array<i32>} : memref<72x1024xf32, #tpu.memory_space<vmem>>, vector<8x1024xf32>,
    %c8_22 = arith.constant 8 : index
    %c0_23 = arith.constant 0 : index
    %40 = vector.load %arg3[%c8_22, %c0_23] : memref<9x1024xf32, #tpu.memory_space<vmem>>, vector<1x1024xf32>
    %c991_i32 = arith.constant 991 : i32
    %41 = tpu.dynamic_rotate %3 by %c991_i32 dim 1 : vector<8x1024xf32>, i32 -> vector<8x1024xf32>
    %42 = vector.broadcast %40 : vector<1x1024xf32> to vector<8x1024xf32>
    %43 = arith.mulf %42, %41 : vector<8x1024xf32>
    %c64 = arith.constant 64 : index
    %c0_24 = arith.constant 0 : index
    %44 = vector.load %arg13[%c64, %c0_24] : memref<72x1024xf32, #tpu.memory_space<vmem>>, vector<8x1024xf32>
    tpu.vector_store %arg13[%c64, %c0_24], %43 {strides = array<i32>} : memref<72x1024xf32, #tpu.memory_space<vmem>>, vector<8x1024xf32>,
    %c0_25 = arith.constant 0 : index
    %c0_26 = arith.constant 0 : index
    %45 = vector.load %arg4[%c0_25, %c0_26] : memref<4x72xf32, #tpu.memory_space<vmem>>, vector<4x72xf32>
    %c0_27 = arith.constant 0 : index
    %c0_28 = arith.constant 0 : index
    %46 = vector.load %arg13[%c0_27, %c0_28] : memref<72x1024xf32, #tpu.memory_space<vmem>>, vector<72x1024xf32>
    %cst = arith.constant dense<0.000000e+00> : vector<4x1024xf32>
    %47 = tpu.matmul %45, %46, %cst {dimension_numbers = #tpu.dot_dimension_numbers<[1], [0], [0], [1], [0, 0, 1, 1], [], []>} : vector<4x72xf32>, vector<72x1024xf32>, vector<4x1024xf32> -> vector<4x1024xf32>
    %c0_29 = arith.constant 0 : index
    %c0_30 = arith.constant 0 : index
    %48 = vector.load %arg5[%c0_29, %c0_30] : memref<4x1xf32, #tpu.memory_space<vmem>>, vector<4x1xf32>
    %49 = vector.broadcast %48 : vector<4x1xf32> to vector<4x1024xf32>
    %50 = arith.addf %47, %49 : vector<4x1024xf32>
    %51 = math.absf %50 : vector<4x1024xf32>
    %cst_31 = arith.constant 0.000000e+00 : f32
    %52 = vector.broadcast %cst_31 : f32 to vector<4x1024xf32>
    %53 = arith.subf %52, %51 : vector<4x1024xf32>
    %54 = math.exp %53 : vector<4x1024xf32>
    %55 = arith.mulf %54, %54 : vector<4x1024xf32>
    %cst_32 = arith.constant 0.000000e+00 : f32
    %56 = vector.broadcast %cst_32 : f32 to vector<4x1024xf32>
    %57 = arith.cmpf oge, %50, %56 : vector<4x1024xf32>
    %cst_33 = arith.constant 2.000000e+00 : f32
    %58 = vector.broadcast %cst_33 : f32 to vector<4x1024xf32>
    %59 = arith.mulf %58, %54 : vector<4x1024xf32>
    %cst_34 = arith.constant 1.000000e+00 : f32
    %60 = vector.broadcast %cst_34 : f32 to vector<4x1024xf32>
    %61 = arith.addf %60, %59 : vector<4x1024xf32>
    %cst_35 = arith.constant 2.000000e+00 : f32
    %62 = vector.broadcast %cst_35 : f32 to vector<4x1024xf32>
    %63 = arith.mulf %62, %54 : vector<4x1024xf32>
    %64 = arith.addf %55, %63 : vector<4x1024xf32>
    %65 = arith.select %57, %61, %64 : vector<4x1024xi1>, vector<4x1024xf32>
    %cst_36 = arith.constant 2.000000e+00 : f32
    %66 = vector.broadcast %cst_36 : f32 to vector<4x1024xf32>
    %67 = arith.mulf %66, %55 : vector<4x1024xf32>
    %cst_37 = arith.constant 2.000000e+00 : f32
    %68 = vector.broadcast %cst_37 : f32 to vector<4x1024xf32>
    %69 = arith.select %57, %67, %68 : vector<4x1024xi1>, vector<4x1024xf32>
    %70 = arith.addf %65, %69 : vector<4x1024xf32>
    %71 = arith.mulf %50, %65 : vector<4x1024xf32>
    %72 = arith.divf %71, %70 : vector<4x1024xf32>
    %73 = arith.addf %1, %72 : vector<4x1024xf32>
    %c0_38 = arith.constant 0 : index
    %c0_39 = arith.constant 0 : index
    %74 = vector.load %arg3[%c0_38, %c0_39] : memref<9x1024xf32, #tpu.memory_space<vmem>>, vector<1x1024xf32>
    %c33_i32_40 = arith.constant 33 : i32
    %75 = tpu.dynamic_rotate %73 by %c33_i32_40 dim 1 : vector<4x1024xf32>, i32 -> vector<4x1024xf32>
    %76 = vector.broadcast %74 : vector<1x1024xf32> to vector<4x1024xf32>
    %77 = arith.mulf %76, %75 : vector<4x1024xf32>
    %c0_41 = arith.constant 0 : index
    %c0_42 = arith.constant 0 : index
    %78 = vector.load %arg13[%c0_41, %c0_42] : memref<72x1024xf32, #tpu.memory_space<vmem>>, vector<4x1024xf32>
    tpu.vector_store %arg13[%c0_41, %c0_42], %77 {strides = array<i32>} : memref<72x1024xf32, #tpu.memory_space<vmem>>, vector<4x1024xf32>,
    %c1_43 = arith.constant 1 : index
    %c0_44 = arith.constant 0 : index
    %79 = vector.load %arg3[%c1_43, %c0_44] : memref<9x1024xf32, #tpu.memory_space<vmem>>, vector<1x1024xf32>
    %c32_i32_45 = arith.constant 32 : i32
    %80 = tpu.dynamic_rotate %73 by %c32_i32_45 dim 1 : vector<4x1024xf32>, i32 -> vector<4x1024xf32>
    %81 = vector.broadcast %79 : vector<1x1024xf32> to vector<4x1024xf32>
    %82 = arith.mulf %81, %80 : vector<4x1024xf32>
    %c4 = arith.constant 4 : index
    %c0_46 = arith.constant 0 : index
    %83 = vector.load %arg13[%c4, %c0_46] : memref<72x1024xf32, #tpu.memory_space<vmem>>, vector<4x1024xf32>
    tpu.vector_store %arg13[%c4, %c0_46], %82 {strides = array<i32>} : memref<72x1024xf32, #tpu.memory_space<vmem>>, vector<4x1024xf32>,
    %c2_47 = arith.constant 2 : index
    %c0_48 = arith.constant 0 : index
    %84 = vector.load %arg3[%c2_47, %c0_48] : memref<9x1024xf32, #tpu.memory_space<vmem>>, vector<1x1024xf32>
    %c31_i32_49 = arith.constant 31 : i32
    %85 = tpu.dynamic_rotate %73 by %c31_i32_49 dim 1 : vector<4x1024xf32>, i32 -> vector<4x1024xf32>
    %86 = vector.broadcast %84 : vector<1x1024xf32> to vector<4x1024xf32>
    %87 = arith.mulf %86, %85 : vector<4x1024xf32>
    %c8_50 = arith.constant 8 : index
    %c0_51 = arith.constant 0 : index
    %88 = vector.load %arg13[%c8_50, %c0_51] : memref<72x1024xf32, #tpu.memory_space<vmem>>, vector<4x1024xf32>
    tpu.vector_store %arg13[%c8_50, %c0_51], %87 {strides = array<i32>} : memref<72x1024xf32, #tpu.memory_space<vmem>>, vector<4x1024xf32>,
    %c3_52 = arith.constant 3 : index
    %c0_53 = arith.constant 0 : index
    %89 = vector.load %arg3[%c3_52, %c0_53] : memref<9x1024xf32, #tpu.memory_space<vmem>>, vector<1x1024xf32>
    %c1_i32_54 = arith.constant 1 : i32
    %90 = tpu.dynamic_rotate %73 by %c1_i32_54 dim 1 : vector<4x1024xf32>, i32 -> vector<4x1024xf32>
    %91 = vector.broadcast %89 : vector<1x1024xf32> to vector<4x1024xf32>
    %92 = arith.mulf %91, %90 : vector<4x1024xf32>
    %c12 = arith.constant 12 : index
    %c0_55 = arith.constant 0 : index
    %93 = vector.load %arg13[%c12, %c0_55] : memref<72x1024xf32, #tpu.memory_space<vmem>>, vector<4x1024xf32>
    tpu.vector_store %arg13[%c12, %c0_55], %92 {strides = array<i32>} : memref<72x1024xf32, #tpu.memory_space<vmem>>, vector<4x1024xf32>,
    %c16_56 = arith.constant 16 : index
    %c0_57 = arith.constant 0 : index
    %94 = vector.load %arg13[%c16_56, %c0_57] : memref<72x1024xf32, #tpu.memory_space<vmem>>, vector<4x1024xf32>
    tpu.vector_store %arg13[%c16_56, %c0_57], %73 {strides = array<i32>} : memref<72x1024xf32, #tpu.memory_space<vmem>>, vector<4x1024xf32>,
    %c5_58 = arith.constant 5 : index
    %c0_59 = arith.constant 0 : index
    %95 = vector.load %arg3[%c5_58, %c0_59] : memref<9x1024xf32, #tpu.memory_space<vmem>>, vector<1x1024xf32>
    %c1023_i32_60 = arith.constant 1023 : i32
    %96 = tpu.dynamic_rotate %73 by %c1023_i32_60 dim 1 : vector<4x1024xf32>, i32 -> vector<4x1024xf32>
    %97 = vector.broadcast %95 : vector<1x1024xf32> to vector<4x1024xf32>
    %98 = arith.mulf %97, %96 : vector<4x1024xf32>
    %c20 = arith.constant 20 : index
    %c0_61 = arith.constant 0 : index
    %99 = vector.load %arg13[%c20, %c0_61] : memref<72x1024xf32, #tpu.memory_space<vmem>>, vector<4x1024xf32>
    tpu.vector_store %arg13[%c20, %c0_61], %98 {strides = array<i32>} : memref<72x1024xf32, #tpu.memory_space<vmem>>, vector<4x1024xf32>,
    %c6_62 = arith.constant 6 : index
    %c0_63 = arith.constant 0 : index
    %100 = vector.load %arg3[%c6_62, %c0_63] : memref<9x1024xf32, #tpu.memory_space<vmem>>, vector<1x1024xf32>
    %c993_i32_64 = arith.constant 993 : i32
    %101 = tpu.dynamic_rotate %73 by %c993_i32_64 dim 1 : vector<4x1024xf32>, i32 -> vector<4x1024xf32>
    %102 = vector.broadcast %100 : vector<1x1024xf32> to vector<4x1024xf32>
    %103 = arith.mulf %102, %101 : vector<4x1024xf32>
    %c24_65 = arith.constant 24 : index
    %c0_66 = arith.constant 0 : index
    %104 = vector.load %arg13[%c24_65, %c0_66] : memref<72x1024xf32, #tpu.memory_space<vmem>>, vector<4x1024xf32>
    tpu.vector_store %arg13[%c24_65, %c0_66], %103 {strides = array<i32>} : memref<72x1024xf32, #tpu.memory_space<vmem>>, vector<4x1024xf32>,
    %c7_67 = arith.constant 7 : index
    %c0_68 = arith.constant 0 : index
    %105 = vector.load %arg3[%c7_67, %c0_68] : memref<9x1024xf32, #tpu.memory_space<vmem>>, vector<1x1024xf32>
    %c992_i32_69 = arith.constant 992 : i32
    %106 = tpu.dynamic_rotate %73 by %c992_i32_69 dim 1 : vector<4x1024xf32>, i32 -> vector<4x1024xf32>
    %107 = vector.broadcast %105 : vector<1x1024xf32> to vector<4x1024xf32>
    %108 = arith.mulf %107, %106 : vector<4x1024xf32>
    %c28 = arith.constant 28 : index
    %c0_70 = arith.constant 0 : index
    %109 = vector.load %arg13[%c28, %c0_70] : memref<72x1024xf32, #tpu.memory_space<vmem>>, vector<4x1024xf32>
    tpu.vector_store %arg13[%c28, %c0_70], %108 {strides = array<i32>} : memref<72x1024xf32, #tpu.memory_space<vmem>>, vector<4x1024xf32>,
    %c8_71 = arith.constant 8 : index
    %c0_72 = arith.constant 0 : index
    %110 = vector.load %arg3[%c8_71, %c0_72] : memref<9x1024xf32, #tpu.memory_space<vmem>>, vector<1x1024xf32>
    %c991_i32_73 = arith.constant 991 : i32
    %111 = tpu.dynamic_rotate %73 by %c991_i32_73 dim 1 : vector<4x1024xf32>, i32 -> vector<4x1024xf32>
    %112 = vector.broadcast %110 : vector<1x1024xf32> to vector<4x1024xf32>
    %113 = arith.mulf %112, %111 : vector<4x1024xf32>
    %c32_74 = arith.constant 32 : index
    %c0_75 = arith.constant 0 : index
    %114 = vector.load %arg13[%c32_74, %c0_75] : memref<72x1024xf32, #tpu.memory_space<vmem>>, vector<4x1024xf32>
    tpu.vector_store %arg13[%c32_74, %c0_75], %113 {strides = array<i32>} : memref<72x1024xf32, #tpu.memory_space<vmem>>, vector<4x1024xf32>,
    %c0_76 = arith.constant 0 : index
    %c0_77 = arith.constant 0 : index
    %115 = vector.load %arg6[%c0_76, %c0_77] : memref<8x36xf32, #tpu.memory_space<vmem>>, vector<8x36xf32>
    %c0_78 = arith.constant 0 : index
    %c0_79 = arith.constant 0 : index
    %116 = vector.load %arg13[%c0_78, %c0_79] : memref<72x1024xf32, #tpu.memory_space<vmem>>, vector<36x1024xf32>
    %cst_80 = arith.constant dense<0.000000e+00> : vector<8x1024xf32>
    %117 = tpu.matmul %115, %116, %cst_80 {dimension_numbers = #tpu.dot_dimension_numbers<[1], [0], [0], [1], [0, 0, 1, 1], [], []>} : vector<8x36xf32>, vector<36x1024xf32>, vector<8x1024xf32> -> vector<8x1024xf32>
    %c0_81 = arith.constant 0 : index
    %c0_82 = arith.constant 0 : index
    %118 = vector.load %arg7[%c0_81, %c0_82] : memref<8x1xf32, #tpu.memory_space<vmem>>, vector<8x1xf32>
    %119 = vector.broadcast %118 : vector<8x1xf32> to vector<8x1024xf32>
    %120 = arith.addf %117, %119 : vector<8x1024xf32>
    %121 = math.absf %120 : vector<8x1024xf32>
    %cst_83 = arith.constant 0.000000e+00 : f32
    %122 = vector.broadcast %cst_83 : f32 to vector<8x1024xf32>
    %123 = arith.subf %122, %121 : vector<8x1024xf32>
    %124 = math.exp %123 : vector<8x1024xf32>
    %125 = arith.mulf %124, %124 : vector<8x1024xf32>
    %cst_84 = arith.constant 0.000000e+00 : f32
    %126 = vector.broadcast %cst_84 : f32 to vector<8x1024xf32>
    %127 = arith.cmpf oge, %120, %126 : vector<8x1024xf32>
    %cst_85 = arith.constant 2.000000e+00 : f32
    %128 = vector.broadcast %cst_85 : f32 to vector<8x1024xf32>
    %129 = arith.mulf %128, %124 : vector<8x1024xf32>
    %cst_86 = arith.constant 1.000000e+00 : f32
    %130 = vector.broadcast %cst_86 : f32 to vector<8x1024xf32>
    %131 = arith.addf %130, %129 : vector<8x1024xf32>
    %cst_87 = arith.constant 2.000000e+00 : f32
    %132 = vector.broadcast %cst_87 : f32 to vector<8x1024xf32>
    %133 = arith.mulf %132, %124 : vector<8x1024xf32>
    %134 = arith.addf %125, %133 : vector<8x1024xf32>
    %135 = arith.select %127, %131, %134 : vector<8x1024xi1>, vector<8x1024xf32>
    %cst_88 = arith.constant 2.000000e+00 : f32
    %136 = vector.broadcast %cst_88 : f32 to vector<8x1024xf32>
    %137 = arith.mulf %136, %125 : vector<8x1024xf32>
    %cst_89 = arith.constant 2.000000e+00 : f32
    %138 = vector.broadcast %cst_89 : f32 to vector<8x1024xf32>
    %139 = arith.select %127, %137, %138 : vector<8x1024xi1>, vector<8x1024xf32>
    %140 = arith.addf %135, %139 : vector<8x1024xf32>
    %141 = arith.mulf %120, %135 : vector<8x1024xf32>
    %142 = arith.divf %141, %140 : vector<8x1024xf32>
    %c0_90 = arith.constant 0 : index
    %c0_91 = arith.constant 0 : index
    %143 = vector.load %arg3[%c0_90, %c0_91] : memref<9x1024xf32, #tpu.memory_space<vmem>>, vector<1x1024xf32>
    %c33_i32_92 = arith.constant 33 : i32
    %144 = tpu.dynamic_rotate %142 by %c33_i32_92 dim 1 : vector<8x1024xf32>, i32 -> vector<8x1024xf32>
    %145 = vector.broadcast %143 : vector<1x1024xf32> to vector<8x1024xf32>
    %146 = arith.mulf %145, %144 : vector<8x1024xf32>
    %c0_93 = arith.constant 0 : index
    %c0_94 = arith.constant 0 : index
    %147 = vector.load %arg13[%c0_93, %c0_94] : memref<72x1024xf32, #tpu.memory_space<vmem>>, vector<8x1024xf32>
    tpu.vector_store %arg13[%c0_93, %c0_94], %146 {strides = array<i32>} : memref<72x1024xf32, #tpu.memory_space<vmem>>, vector<8x1024xf32>,
    %c1_95 = arith.constant 1 : index
    %c0_96 = arith.constant 0 : index
    %148 = vector.load %arg3[%c1_95, %c0_96] : memref<9x1024xf32, #tpu.memory_space<vmem>>, vector<1x1024xf32>
    %c32_i32_97 = arith.constant 32 : i32
    %149 = tpu.dynamic_rotate %142 by %c32_i32_97 dim 1 : vector<8x1024xf32>, i32 -> vector<8x1024xf32>
    %150 = vector.broadcast %148 : vector<1x1024xf32> to vector<8x1024xf32>
    %151 = arith.mulf %150, %149 : vector<8x1024xf32>
    %c8_98 = arith.constant 8 : index
    %c0_99 = arith.constant 0 : index
    %152 = vector.load %arg13[%c8_98, %c0_99] : memref<72x1024xf32, #tpu.memory_space<vmem>>, vector<8x1024xf32>
    tpu.vector_store %arg13[%c8_98, %c0_99], %151 {strides = array<i32>} : memref<72x1024xf32, #tpu.memory_space<vmem>>, vector<8x1024xf32>,
    %c2_100 = arith.constant 2 : index
    %c0_101 = arith.constant 0 : index
    %153 = vector.load %arg3[%c2_100, %c0_101] : memref<9x1024xf32, #tpu.memory_space<vmem>>, vector<1x1024xf32>
    %c31_i32_102 = arith.constant 31 : i32
    %154 = tpu.dynamic_rotate %142 by %c31_i32_102 dim 1 : vector<8x1024xf32>, i32 -> vector<8x1024xf32>
    %155 = vector.broadcast %153 : vector<1x1024xf32> to vector<8x1024xf32>
    %156 = arith.mulf %155, %154 : vector<8x1024xf32>
    %c16_103 = arith.constant 16 : index
    %c0_104 = arith.constant 0 : index
    %157 = vector.load %arg13[%c16_103, %c0_104] : memref<72x1024xf32, #tpu.memory_space<vmem>>, vector<8x1024xf32>
    tpu.vector_store %arg13[%c16_103, %c0_104], %156 {strides = array<i32>} : memref<72x1024xf32, #tpu.memory_space<vmem>>, vector<8x1024xf32>,
    %c3_105 = arith.constant 3 : index
    %c0_106 = arith.constant 0 : index
    %158 = vector.load %arg3[%c3_105, %c0_106] : memref<9x1024xf32, #tpu.memory_space<vmem>>, vector<1x1024xf32>
    %c1_i32_107 = arith.constant 1 : i32
    %159 = tpu.dynamic_rotate %142 by %c1_i32_107 dim 1 : vector<8x1024xf32>, i32 -> vector<8x1024xf32>
    %160 = vector.broadcast %158 : vector<1x1024xf32> to vector<8x1024xf32>
    %161 = arith.mulf %160, %159 : vector<8x1024xf32>
    %c24_108 = arith.constant 24 : index
    %c0_109 = arith.constant 0 : index
    %162 = vector.load %arg13[%c24_108, %c0_109] : memref<72x1024xf32, #tpu.memory_space<vmem>>, vector<8x1024xf32>
    tpu.vector_store %arg13[%c24_108, %c0_109], %161 {strides = array<i32>} : memref<72x1024xf32, #tpu.memory_space<vmem>>, vector<8x1024xf32>,
    %c32_110 = arith.constant 32 : index
    %c0_111 = arith.constant 0 : index
    %163 = vector.load %arg13[%c32_110, %c0_111] : memref<72x1024xf32, #tpu.memory_space<vmem>>, vector<8x1024xf32>
    tpu.vector_store %arg13[%c32_110, %c0_111], %142 {strides = array<i32>} : memref<72x1024xf32, #tpu.memory_space<vmem>>, vector<8x1024xf32>,
    %c5_112 = arith.constant 5 : index
    %c0_113 = arith.constant 0 : index
    %164 = vector.load %arg3[%c5_112, %c0_113] : memref<9x1024xf32, #tpu.memory_space<vmem>>, vector<1x1024xf32>
    %c1023_i32_114 = arith.constant 1023 : i32
    %165 = tpu.dynamic_rotate %142 by %c1023_i32_114 dim 1 : vector<8x1024xf32>, i32 -> vector<8x1024xf32>
    %166 = vector.broadcast %164 : vector<1x1024xf32> to vector<8x1024xf32>
    %167 = arith.mulf %166, %165 : vector<8x1024xf32>
    %c40_115 = arith.constant 40 : index
    %c0_116 = arith.constant 0 : index
    %168 = vector.load %arg13[%c40_115, %c0_116] : memref<72x1024xf32, #tpu.memory_space<vmem>>, vector<8x1024xf32>
    tpu.vector_store %arg13[%c40_115, %c0_116], %167 {strides = array<i32>} : memref<72x1024xf32, #tpu.memory_space<vmem>>, vector<8x1024xf32>,
    %c6_117 = arith.constant 6 : index
    %c0_118 = arith.constant 0 : index
    %169 = vector.load %arg3[%c6_117, %c0_118] : memref<9x1024xf32, #tpu.memory_space<vmem>>, vector<1x1024xf32>
    %c993_i32_119 = arith.constant 993 : i32
    %170 = tpu.dynamic_rotate %142 by %c993_i32_119 dim 1 : vector<8x1024xf32>, i32 -> vector<8x1024xf32>
    %171 = vector.broadcast %169 : vector<1x1024xf32> to vector<8x1024xf32>
    %172 = arith.mulf %171, %170 : vector<8x1024xf32>
    %c48_120 = arith.constant 48 : index
    %c0_121 = arith.constant 0 : index
    %173 = vector.load %arg13[%c48_120, %c0_121] : memref<72x1024xf32, #tpu.memory_space<vmem>>, vector<8x1024xf32>
    tpu.vector_store %arg13[%c48_120, %c0_121], %172 {strides = array<i32>} : memref<72x1024xf32, #tpu.memory_space<vmem>>, vector<8x1024xf32>,
    %c7_122 = arith.constant 7 : index
    %c0_123 = arith.constant 0 : index
    %174 = vector.load %arg3[%c7_122, %c0_123] : memref<9x1024xf32, #tpu.memory_space<vmem>>, vector<1x1024xf32>
    %c992_i32_124 = arith.constant 992 : i32
    %175 = tpu.dynamic_rotate %142 by %c992_i32_124 dim 1 : vector<8x1024xf32>, i32 -> vector<8x1024xf32>
    %176 = vector.broadcast %174 : vector<1x1024xf32> to vector<8x1024xf32>
    %177 = arith.mulf %176, %175 : vector<8x1024xf32>
    %c56_125 = arith.constant 56 : index
    %c0_126 = arith.constant 0 : index
    %178 = vector.load %arg13[%c56_125, %c0_126] : memref<72x1024xf32, #tpu.memory_space<vmem>>, vector<8x1024xf32>
    tpu.vector_store %arg13[%c56_125, %c0_126], %177 {strides = array<i32>} : memref<72x1024xf32, #tpu.memory_space<vmem>>, vector<8x1024xf32>,
    %c8_127 = arith.constant 8 : index
    %c0_128 = arith.constant 0 : index
    %179 = vector.load %arg3[%c8_127, %c0_128] : memref<9x1024xf32, #tpu.memory_space<vmem>>, vector<1x1024xf32>
    %c991_i32_129 = arith.constant 991 : i32
    %180 = tpu.dynamic_rotate %142 by %c991_i32_129 dim 1 : vector<8x1024xf32>, i32 -> vector<8x1024xf32>
    %181 = vector.broadcast %179 : vector<1x1024xf32> to vector<8x1024xf32>
    %182 = arith.mulf %181, %180 : vector<8x1024xf32>
    %c64_130 = arith.constant 64 : index
    %c0_131 = arith.constant 0 : index
    %183 = vector.load %arg13[%c64_130, %c0_131] : memref<72x1024xf32, #tpu.memory_space<vmem>>, vector<8x1024xf32>
    tpu.vector_store %arg13[%c64_130, %c0_131], %182 {strides = array<i32>} : memref<72x1024xf32, #tpu.memory_space<vmem>>, vector<8x1024xf32>,
    %c0_132 = arith.constant 0 : index
    %c0_133 = arith.constant 0 : index
    %184 = vector.load %arg8[%c0_132, %c0_133] : memref<8x72xf32, #tpu.memory_space<vmem>>, vector<8x72xf32>
    %c0_134 = arith.constant 0 : index
    %c0_135 = arith.constant 0 : index
    %185 = vector.load %arg13[%c0_134, %c0_135] : memref<72x1024xf32, #tpu.memory_space<vmem>>, vector<72x1024xf32>
    %cst_136 = arith.constant dense<0.000000e+00> : vector<8x1024xf32>
    %186 = tpu.matmul %184, %185, %cst_136 {dimension_numbers = #tpu.dot_dimension_numbers<[1], [0], [0], [1], [0, 0, 1, 1], [], []>} : vector<8x72xf32>, vector<72x1024xf32>, vector<8x1024xf32> -> vector<8x1024xf32>
    %c0_137 = arith.constant 0 : index
    %c0_138 = arith.constant 0 : index
    %187 = vector.load %arg9[%c0_137, %c0_138] : memref<8x1xf32, #tpu.memory_space<vmem>>, vector<8x1xf32>
    %188 = vector.broadcast %187 : vector<8x1xf32> to vector<8x1024xf32>
    %189 = arith.addf %186, %188 : vector<8x1024xf32>
    %190 = math.absf %189 : vector<8x1024xf32>
    %cst_139 = arith.constant 0.000000e+00 : f32
    %191 = vector.broadcast %cst_139 : f32 to vector<8x1024xf32>
    %192 = arith.subf %191, %190 : vector<8x1024xf32>
    %193 = math.exp %192 : vector<8x1024xf32>
    %194 = arith.mulf %193, %193 : vector<8x1024xf32>
    %cst_140 = arith.constant 0.000000e+00 : f32
    %195 = vector.broadcast %cst_140 : f32 to vector<8x1024xf32>
    %196 = arith.cmpf oge, %189, %195 : vector<8x1024xf32>
    %cst_141 = arith.constant 2.000000e+00 : f32
    %197 = vector.broadcast %cst_141 : f32 to vector<8x1024xf32>
    %198 = arith.mulf %197, %193 : vector<8x1024xf32>
    %cst_142 = arith.constant 1.000000e+00 : f32
    %199 = vector.broadcast %cst_142 : f32 to vector<8x1024xf32>
    %200 = arith.addf %199, %198 : vector<8x1024xf32>
    %cst_143 = arith.constant 2.000000e+00 : f32
    %201 = vector.broadcast %cst_143 : f32 to vector<8x1024xf32>
    %202 = arith.mulf %201, %193 : vector<8x1024xf32>
    %203 = arith.addf %194, %202 : vector<8x1024xf32>
    %204 = arith.select %196, %200, %203 : vector<8x1024xi1>, vector<8x1024xf32>
    %cst_144 = arith.constant 2.000000e+00 : f32
    %205 = vector.broadcast %cst_144 : f32 to vector<8x1024xf32>
    %206 = arith.mulf %205, %194 : vector<8x1024xf32>
    %cst_145 = arith.constant 2.000000e+00 : f32
    %207 = vector.broadcast %cst_145 : f32 to vector<8x1024xf32>
    %208 = arith.select %196, %206, %207 : vector<8x1024xi1>, vector<8x1024xf32>
    %209 = arith.addf %204, %208 : vector<8x1024xf32>
    %210 = arith.mulf %189, %204 : vector<8x1024xf32>
    %211 = arith.divf %210, %209 : vector<8x1024xf32>
    %c0_146 = arith.constant 0 : index
    %c0_147 = arith.constant 0 : index
    %212 = vector.load %arg10[%c0_146, %c0_147] : memref<8x4xf32, #tpu.memory_space<vmem>>, vector<8x4xf32>
    %cst_148 = arith.constant dense<0.000000e+00> : vector<8x1024xf32>
    %213 = tpu.matmul %212, %1, %cst_148 {dimension_numbers = #tpu.dot_dimension_numbers<[1], [0], [0], [1], [0, 0, 1, 1], [], []>} : vector<8x4xf32>, vector<4x1024xf32>, vector<8x1024xf32> -> vector<8x1024xf32>
    %c0_149 = arith.constant 0 : index
    %c0_150 = arith.constant 0 : index
    %214 = vector.load %arg11[%c0_149, %c0_150] : memref<8x1xf32, #tpu.memory_space<vmem>>, vector<8x1xf32>
    %215 = vector.broadcast %214 : vector<8x1xf32> to vector<8x1024xf32>
    %216 = arith.addf %213, %215 : vector<8x1024xf32>
    %217 = arith.addf %211, %216 : vector<8x1024xf32>
    %c0_151 = arith.constant 0 : index
    %c0_152 = arith.constant 0 : index
    %c0_153 = arith.constant 0 : index
    %218 = vector.load %arg12[%c0_151, %c0_152, %c0_153] : memref<1x8x1024xf32, #tpu.memory_space<vmem>>, vector<1x8x1024xf32>
    %219 = vector.shape_cast %218 : vector<1x8x1024xf32> to vector<8x1024xf32>
    %220 = vector.shape_cast %217 : vector<8x1024xf32> to vector<1x8x1024xf32>
    tpu.vector_store %arg12[%c0_151, %c0_152, %c0_153], %220 {strides = array<i32>} : memref<1x8x1024xf32, #tpu.memory_space<vmem>>, vector<1x8x1024xf32>,
    return
  }
  func.func @transform_0(%arg0: i32) -> (i32, i32, i32) {
    %c0_i32 = arith.constant 0 : i32
    %c0_i32_0 = arith.constant 0 : i32
    %c0_i32_1 = arith.constant 0 : i32
    return %arg0, %c0_i32, %c0_i32_0 : i32, i32, i32
  }
  func.func @transform_1(%arg0: i32) -> (i32, i32, i32) {
    %c0_i32 = arith.constant 0 : i32
    %c0_i32_0 = arith.constant 0 : i32
    %c0_i32_1 = arith.constant 0 : i32
    return %arg0, %c0_i32, %c0_i32_0 : i32, i32, i32
  }
  func.func @transform_2(%arg0: i32) -> (i32, i32) {
    %c0_i32 = arith.constant 0 : i32
    %c0_i32_0 = arith.constant 0 : i32
    %c0_i32_1 = arith.constant 0 : i32
    return %c0_i32, %c0_i32_0 : i32, i32
  }
  func.func @transform_3(%arg0: i32) -> (i32, i32) {
    %c0_i32 = arith.constant 0 : i32
    %c0_i32_0 = arith.constant 0 : i32
    %c0_i32_1 = arith.constant 0 : i32
    return %c0_i32, %c0_i32_0 : i32, i32
  }
  func.func @transform_4(%arg0: i32) -> (i32, i32) {
    %c0_i32 = arith.constant 0 : i32
    %c0_i32_0 = arith.constant 0 : i32
    %c0_i32_1 = arith.constant 0 : i32
    return %c0_i32, %c0_i32_0 : i32, i32
  }
  func.func @transform_5(%arg0: i32) -> (i32, i32) {
    %c0_i32 = arith.constant 0 : i32
    %c0_i32_0 = arith.constant 0 : i32
    %c0_i32_1 = arith.constant 0 : i32
    return %c0_i32, %c0_i32_0 : i32, i32
  }
  func.func @transform_6(%arg0: i32) -> (i32, i32) {
    %c0_i32 = arith.constant 0 : i32
    %c0_i32_0 = arith.constant 0 : i32
    %c0_i32_1 = arith.constant 0 : i32
    return %c0_i32, %c0_i32_0 : i32, i32
  }
  func.func @transform_7(%arg0: i32) -> (i32, i32) {
    %c0_i32 = arith.constant 0 : i32
    %c0_i32_0 = arith.constant 0 : i32
    %c0_i32_1 = arith.constant 0 : i32
    return %c0_i32, %c0_i32_0 : i32, i32
  }
  func.func @transform_8(%arg0: i32) -> (i32, i32) {
    %c0_i32 = arith.constant 0 : i32
    %c0_i32_0 = arith.constant 0 : i32
    %c0_i32_1 = arith.constant 0 : i32
    return %c0_i32, %c0_i32_0 : i32, i32
  }
  func.func @transform_9(%arg0: i32) -> (i32, i32) {
    %c0_i32 = arith.constant 0 : i32
    %c0_i32_0 = arith.constant 0 : i32
    %c0_i32_1 = arith.constant 0 : i32
    return %c0_i32, %c0_i32_0 : i32, i32
  }
  func.func @transform_10(%arg0: i32) -> (i32, i32) {
    %c0_i32 = arith.constant 0 : i32
    %c0_i32_0 = arith.constant 0 : i32
    %c0_i32_1 = arith.constant 0 : i32
    return %c0_i32, %c0_i32_0 : i32, i32
  }
  func.func @transform_11(%arg0: i32) -> (i32, i32, i32) {
    %c0_i32 = arith.constant 0 : i32
    %c0_i32_0 = arith.constant 0 : i32
    %c0_i32_1 = arith.constant 0 : i32
    return %arg0, %c0_i32, %c0_i32_0 : i32, i32, i32
  }
}

</mosaic_0001>

<llo_original>
// kernel: up_unet_block.1
$region0: #{up_unet_block.1}
  #allocation0 [shape = 'u32[]', space=smem, size = 0x4, offset = 0x4, fixed_abs, tag = 'smem constant byte address 0x4 - core index']
  #allocation1 [shape = 'u32[144,128]{1,0:T(1,128)}', space=vmem, size = 0x12000, scoped, tag = 'internal scratch']
  #allocation2 [shape = 'f32[72,1024]{1,0:T(8,128)}', space=vmem, size = 0x48000, scoped, tag = 'scratch operand']
  %s0 = inlined_call_operand.vmem [shape: f32[2,4,1024], index: 0, kind: input, shape index: {}]
  %s1 = inlined_call_operand.vmem [shape: f32[2,8,1024], index: 1, kind: input, shape index: {}]
  %s2 = inlined_call_operand.vmem [shape: f32[9,1024], index: 2, kind: input, shape index: {}]
  %s3 = inlined_call_operand.vmem [shape: f32[4,72], index: 3, kind: input, shape index: {}]
  %s4 = inlined_call_operand.vmem [shape: f32[4,1], index: 4, kind: input, shape index: {}]
  %s5 = inlined_call_operand.vmem [shape: f32[8,36], index: 5, kind: input, shape index: {}]
  %s6 = inlined_call_operand.vmem [shape: f32[8,1], index: 6, kind: input, shape index: {}]
  %s7 = inlined_call_operand.vmem [shape: f32[8,72], index: 7, kind: input, shape index: {}]
  %s8 = inlined_call_operand.vmem [shape: f32[8,1], index: 8, kind: input, shape index: {}]
  %s9 = inlined_call_operand.vmem [shape: f32[8,4], index: 9, kind: input, shape index: {}]
  %s10 = inlined_call_operand.vmem [shape: f32[8,1], index: 10, kind: input, shape index: {}]
  %s11 = inlined_call_operand.vmem [shape: f32[2,8,1024], index: 11, kind: output, shape index: {}]
  %s12 = sld [smem:[#allocation0]]
  $region77: #{up_unet_block.1} parent=0
    _
  %s14 = ssub.s32 1, %s12
  %s15 = scalar_select 0, %s14, %s12
  loop: start=0, step=1, limit=4
  $region2: #{up_unet_block.1} parent=0 // loop_pre_header
    _
  $region3: #{up_unet_block.1} parent=0 // loop_header
    %s17 = sphi 0, %s21
    %p18 = scmp.ge.s32.totalorder %s17, 4
    %s27 = sphi 0, %s29
    %s30 = sphi 0, %s27
    %s31 = sphi 0, %s30
    %s47 = sphi 0, %s31
    %s53 = sphi 0, %s55
    %s56 = sphi 0, %s53
    %s57 = sphi 0, %s56
    %s73 = sphi 0, %s57
    %s77 = sphi 0, %s77
    %s79 = sphi 0, %s77
    %s80 = sphi 0, %s79
    %s94 = sphi 0, %s80
    %s98 = sphi 0, %s98
    %s100 = sphi 0, %s98
    %s101 = sphi 0, %s100
    %s115 = sphi 0, %s101
    %s119 = sphi 0, %s119
    %s121 = sphi 0, %s119
    %s122 = sphi 0, %s121
    %s136 = sphi 0, %s122
    %s140 = sphi 0, %s140
    %s142 = sphi 0, %s140
    %s143 = sphi 0, %s142
    %s157 = sphi 0, %s143
    %s161 = sphi 0, %s161
    %s163 = sphi 0, %s161
    %s164 = sphi 0, %s163
    %s178 = sphi 0, %s164
    %s182 = sphi 0, %s182
    %s184 = sphi 0, %s182
    %s185 = sphi 0, %s184
    %s199 = sphi 0, %s185
    %s203 = sphi 0, %s203
    %s205 = sphi 0, %s203
    %s206 = sphi 0, %s205
    %s220 = sphi 0, %s206
    %s224 = sphi 0, %s224
    %s226 = sphi 0, %s224
    %s227 = sphi 0, %s226
    %s241 = sphi 0, %s227
    %s245 = sphi 0, %s245
    %s247 = sphi 0, %s245
    %s248 = sphi 0, %s247
    %s262 = sphi 0, %s248
    %s268 = sphi 0, %s270
    %s271 = sphi 0, %s268
    %s272 = sphi 0, %s271
    %s288 = sphi 0, %s272
  $region4: #{up_unet_block.1} parent=0 // loop_header_branch
    %20 = sbr.rel (%p18) target = $region8
  $region5: #{up_unet_block.1} parent=0 // loop_body
    %s22 = ssub.s32 %s17, 1
    %s23 = ssub.s32 %s17, 2
    %s24 = sadd.s32 %s17, 1
    %s25 = ssub.s32 %s17, %s24
    %p26 = scmp.eq.s32.totalorder %s25, 0
    %s28 = sadd.s32 %s27, 1
    %s29 = scalar_select %p26, %s27, %s28
    %p32 = pneg %p26
    %p33 = scmp.eq.s32.totalorder %s17, 1
    %p34 = por %p32, %p33
    %p35 = scmp.ne.s32.totalorder %s27, %s30
    %p36 = scmp.eq.s32.totalorder %s17, 0
    %p37 = por %p35, %p36
    %p38 = scmp.ne.s32.totalorder %s27, %s30
    %p39 = scmp.eq.s32.totalorder %s22, 1
    %p40 = por %p38, %p39
    %p41 = scmp.ne.s32.totalorder %s30, %s31
    %p42 = scmp.eq.s32.totalorder %s22, 0
    %p43 = por %p41, %p42
    %p44 = scmp.ne.s32.totalorder %s30, %s31
    %p45 = scmp.eq.s32.totalorder %s23, 1
    %p46 = por %p44, %p45
    %p48 = scmp.ne.s32.totalorder %s31, %s47
    %p49 = scmp.eq.s32.totalorder %s23, 0
    %p50 = por %p48, %p49
    %s51 = ssub.s32 %s17, %s24
    %p52 = scmp.eq.s32.totalorder %s51, 0
    %s54 = sadd.s32 %s53, 1
    %s55 = scalar_select %p52, %s53, %s54
    %p58 = pneg %p52
    %p59 = scmp.eq.s32.totalorder %s17, 1
    %p60 = por %p58, %p59
    %p61 = scmp.ne.s32.totalorder %s53, %s56
    %p62 = scmp.eq.s32.totalorder %s17, 0
    %p63 = por %p61, %p62
    %p64 = scmp.ne.s32.totalorder %s53, %s56
    %p65 = scmp.eq.s32.totalorder %s22, 1
    %p66 = por %p64, %p65
    %p67 = scmp.ne.s32.totalorder %s56, %s57
    %p68 = scmp.eq.s32.totalorder %s22, 0
    %p69 = por %p67, %p68
    %p70 = scmp.ne.s32.totalorder %s56, %s57
    %p71 = scmp.eq.s32.totalorder %s23, 1
    %p72 = por %p70, %p71
    %p74 = scmp.ne.s32.totalorder %s57, %s73
    %p75 = scmp.eq.s32.totalorder %s23, 0
    %p76 = por %p74, %p75
    %s78 = sadd.s32 %s77, 1
    %p81 = scmp.eq.s32.totalorder %s17, 1
    %p82 = scmp.ne.s32.totalorder %s77, %s79
    %p83 = scmp.eq.s32.totalorder %s17, 0
    %p84 = por %p82, %p83
    %p85 = scmp.ne.s32.totalorder %s77, %s79
    %p86 = scmp.eq.s32.totalorder %s22, 1
    %p87 = por %p85, %p86
    %p88 = scmp.ne.s32.totalorder %s79, %s80
    %p89 = scmp.eq.s32.totalorder %s22, 0
    %p90 = por %p88, %p89
    %p91 = scmp.ne.s32.totalorder %s79, %s80
    %p92 = scmp.eq.s32.totalorder %s23, 1
    %p93 = por %p91, %p92
    %p95 = scmp.ne.s32.totalorder %s80, %s94
    %p96 = scmp.eq.s32.totalorder %s23, 0
    %p97 = por %p95, %p96
    %s99 = sadd.s32 %s98, 1
    %p102 = scmp.eq.s32.totalorder %s17, 1
    %p103 = scmp.ne.s32.totalorder %s98, %s100
    %p104 = scmp.eq.s32.totalorder %s17, 0
    %p105 = por %p103, %p104
    %p106 = scmp.ne.s32.totalorder %s98, %s100
    %p107 = scmp.eq.s32.totalorder %s22, 1
    %p108 = por %p106, %p107
    %p109 = scmp.ne.s32.totalorder %s100, %s101
    %p110 = scmp.eq.s32.totalorder %s22, 0
    %p111 = por %p109, %p110
    %p112 = scmp.ne.s32.totalorder %s100, %s101
    %p113 = scmp.eq.s32.totalorder %s23, 1
    %p114 = por %p112, %p113
    %p116 = scmp.ne.s32.totalorder %s101, %s115
    %p117 = scmp.eq.s32.totalorder %s23, 0
    %p118 = por %p116, %p117
    %s120 = sadd.s32 %s119, 1
    %p123 = scmp.eq.s32.totalorder %s17, 1
    %p124 = scmp.ne.s32.totalorder %s119, %s121
    %p125 = scmp.eq.s32.totalorder %s17, 0
    %p126 = por %p124, %p125
    %p127 = scmp.ne.s32.totalorder %s119, %s121
    %p128 = scmp.eq.s32.totalorder %s22, 1
    %p129 = por %p127, %p128
    %p130 = scmp.ne.s32.totalorder %s121, %s122
    %p131 = scmp.eq.s32.totalorder %s22, 0
    %p132 = por %p130, %p131
    %p133 = scmp.ne.s32.totalorder %s121, %s122
    %p134 = scmp.eq.s32.totalorder %s23, 1
    %p135 = por %p133, %p134
    %p137 = scmp.ne.s32.totalorder %s122, %s136
    %p138 = scmp.eq.s32.totalorder %s23, 0
    %p139 = por %p137, %p138
    %s141 = sadd.s32 %s140, 1
    %p144 = scmp.eq.s32.totalorder %s17, 1
    %p145 = scmp.ne.s32.totalorder %s140, %s142
    %p146 = scmp.eq.s32.totalorder %s17, 0
    %p147 = por %p145, %p146
    %p148 = scmp.ne.s32.totalorder %s140, %s142
    %p149 = scmp.eq.s32.totalorder %s22, 1
    %p150 = por %p148, %p149
    %p151 = scmp.ne.s32.totalorder %s142, %s143
    %p152 = scmp.eq.s32.totalorder %s22, 0
    %p153 = por %p151, %p152
    %p154 = scmp.ne.s32.totalorder %s142, %s143
    %p155 = scmp.eq.s32.totalorder %s23, 1
    %p156 = por %p154, %p155
    %p158 = scmp.ne.s32.totalorder %s143, %s157
    %p159 = scmp.eq.s32.totalorder %s23, 0
    %p160 = por %p158, %p159
    %s162 = sadd.s32 %s161, 1
    %p165 = scmp.eq.s32.totalorder %s17, 1
    %p166 = scmp.ne.s32.totalorder %s161, %s163
    %p167 = scmp.eq.s32.totalorder %s17, 0
    %p168 = por %p166, %p167
    %p169 = scmp.ne.s32.totalorder %s161, %s163
    %p170 = scmp.eq.s32.totalorder %s22, 1
    %p171 = por %p169, %p170
    %p172 = scmp.ne.s32.totalorder %s163, %s164
    %p173 = scmp.eq.s32.totalorder %s22, 0
    %p174 = por %p172, %p173
    %p175 = scmp.ne.s32.totalorder %s163, %s164
    %p176 = scmp.eq.s32.totalorder %s23, 1
    %p177 = por %p175, %p176
    %p179 = scmp.ne.s32.totalorder %s164, %s178
    %p180 = scmp.eq.s32.totalorder %s23, 0
    %p181 = por %p179, %p180
    %s183 = sadd.s32 %s182, 1
    %p186 = scmp.eq.s32.totalorder %s17, 1
    %p187 = scmp.ne.s32.totalorder %s182, %s184
    %p188 = scmp.eq.s32.totalorder %s17, 0
    %p189 = por %p187, %p188
    %p190 = scmp.ne.s32.totalorder %s182, %s184
    %p191 = scmp.eq.s32.totalorder %s22, 1
    %p192 = por %p190, %p191
    %p193 = scmp.ne.s32.totalorder %s184, %s185
    %p194 = scmp.eq.s32.totalorder %s22, 0
    %p195 = por %p193, %p194
    %p196 = scmp.ne.s32.totalorder %s184, %s185
    %p197 = scmp.eq.s32.totalorder %s23, 1
    %p198 = por %p196, %p197
    %p200 = scmp.ne.s32.totalorder %s185, %s199
    %p201 = scmp.eq.s32.totalorder %s23, 0
    %p202 = por %p200, %p201
    %s204 = sadd.s32 %s203, 1
    %p207 = scmp.eq.s32.totalorder %s17, 1
    %p208 = scmp.ne.s32.totalorder %s203, %s205
    %p209 = scmp.eq.s32.totalorder %s17, 0
    %p210 = por %p208, %p209
    %p211 = scmp.ne.s32.totalorder %s203, %s205
    %p212 = scmp.eq.s32.totalorder %s22, 1
    %p213 = por %p211, %p212
    %p214 = scmp.ne.s32.totalorder %s205, %s206
    %p215 = scmp.eq.s32.totalorder %s22, 0
    %p216 = por %p214, %p215
    %p217 = scmp.ne.s32.totalorder %s205, %s206
    %p218 = scmp.eq.s32.totalorder %s23, 1
    %p219 = por %p217, %p218
    %p221 = scmp.ne.s32.totalorder %s206, %s220
    %p222 = scmp.eq.s32.totalorder %s23, 0
    %p223 = por %p221, %p222
    %s225 = sadd.s32 %s224, 1
    %p228 = scmp.eq.s32.totalorder %s17, 1
    %p229 = scmp.ne.s32.totalorder %s224, %s226
    %p230 = scmp.eq.s32.totalorder %s17, 0
    %p231 = por %p229, %p230
    %p232 = scmp.ne.s32.totalorder %s224, %s226
    %p233 = scmp.eq.s32.totalorder %s22, 1
    %p234 = por %p232, %p233
    %p235 = scmp.ne.s32.totalorder %s226, %s227
    %p236 = scmp.eq.s32.totalorder %s22, 0
    %p237 = por %p235, %p236
    %p238 = scmp.ne.s32.totalorder %s226, %s227
    %p239 = scmp.eq.s32.totalorder %s23, 1
    %p240 = por %p238, %p239
    %p242 = scmp.ne.s32.totalorder %s227, %s241
    %p243 = scmp.eq.s32.totalorder %s23, 0
    %p244 = por %p242, %p243
    %s246 = sadd.s32 %s245, 1
    %p249 = scmp.eq.s32.totalorder %s17, 1
    %p250 = scmp.ne.s32.totalorder %s245, %s247
    %p251 = scmp.eq.s32.totalorder %s17, 0
    %p252 = por %p250, %p251
    %p253 = scmp.ne.s32.totalorder %s245, %s247
    %p254 = scmp.eq.s32.totalorder %s22, 1
    %p255 = por %p253, %p254
    %p256 = scmp.ne.s32.totalorder %s247, %s248
    %p257 = scmp.eq.s32.totalorder %s22, 0
    %p258 = por %p256, %p257
    %p259 = scmp.ne.s32.totalorder %s247, %s248
    %p260 = scmp.eq.s32.totalorder %s23, 1
    %p261 = por %p259, %p260
    %p263 = scmp.ne.s32.totalorder %s248, %s262
    %p264 = scmp.eq.s32.totalorder %s23, 0
    %p265 = por %p263, %p264
    %s266 = ssub.s32 %s17, %s24
    %p267 = scmp.eq.s32.totalorder %s266, 0
    %s269 = sadd.s32 %s268, 1
    %s270 = scalar_select %p267, %s268, %s269
    %p273 = pneg %p267
    %p274 = scmp.eq.s32.totalorder %s17, 1
    %p275 = por %p273, %p274
    %p276 = scmp.ne.s32.totalorder %s268, %s271
    %p277 = scmp.eq.s32.totalorder %s17, 0
    %p278 = por %p276, %p277
    %p279 = scmp.ne.s32.totalorder %s268, %s271
    %p280 = scmp.eq.s32.totalorder %s22, 1
    %p281 = por %p279, %p280
    %p282 = scmp.ne.s32.totalorder %s271, %s272
    %p283 = scmp.eq.s32.totalorder %s22, 0
    %p284 = por %p282, %p283
    %p285 = scmp.ne.s32.totalorder %s271, %s272
    %p286 = scmp.eq.s32.totalorder %s23, 1
    %p287 = por %p285, %p286
    %p289 = scmp.ne.s32.totalorder %s272, %s288
    %p290 = scmp.eq.s32.totalorder %s23, 0
    %p291 = por %p289, %p290
    %p292 = scmp.le.s32.totalorder 1, %s17
    %p293 = scmp.lt.s32.totalorder %s17, 3
    %p294 = pnand %p292, %p293
    %p295 = pneg %p294
    // Predicated region
    $region9: #{up_unet_block.1} parent=5 // pred_check
      _
    $region10: #{up_unet_block.1} parent=5 // pred_check_branch
      %297 = sbr.rel (%p294) target = $region12
    $region11: #{up_unet_block.1} parent=5 // pred_region
      %s298 = ssub.s32 %s17, 1
      // Predicated region
      $region13: #{up_unet_block.1} parent=11 // pred_check
        %p299 = pneg %p90
      $region14: #{up_unet_block.1} parent=11 // pred_check_branch
        %301 = sbr.rel (%p299) target = $region16
      $region15: #{up_unet_block.1} parent=11 // pred_region
        _
      $region16: #{up_unet_block.1} parent=11 // pred_fallthru
        _
      // Predicated region
      $region17: #{up_unet_block.1} parent=11 // pred_check
        %p302 = pneg %p111
      $region18: #{up_unet_block.1} parent=11 // pred_check_branch
        %304 = sbr.rel (%p302) target = $region20
      $region19: #{up_unet_block.1} parent=11 // pred_region
        _
      $region20: #{up_unet_block.1} parent=11 // pred_fallthru
        _
      // Predicated region
      $region21: #{up_unet_block.1} parent=11 // pred_check
        %p305 = pneg %p132
      $region22: #{up_unet_block.1} parent=11 // pred_check_branch
        %307 = sbr.rel (%p305) target = $region24
      $region23: #{up_unet_block.1} parent=11 // pred_region
        _
      $region24: #{up_unet_block.1} parent=11 // pred_fallthru
        _
      // Predicated region
      $region25: #{up_unet_block.1} parent=11 // pred_check
        %p308 = pneg %p153
      $region26: #{up_unet_block.1} parent=11 // pred_check_branch
        %310 = sbr.rel (%p308) target = $region28
      $region27: #{up_unet_block.1} parent=11 // pred_region
        _
      $region28: #{up_unet_block.1} parent=11 // pred_fallthru
        _
      // Predicated region
      $region29: #{up_unet_block.1} parent=11 // pred_check
        %p311 = pneg %p174
      $region30: #{up_unet_block.1} parent=11 // pred_check_branch
        %313 = sbr.rel (%p311) target = $region32
      $region31: #{up_unet_block.1} parent=11 // pred_region
        _
      $region32: #{up_unet_block.1} parent=11 // pred_fallthru
        _
      // Predicated region
      $region33: #{up_unet_block.1} parent=11 // pred_check
        %p314 = pneg %p195
      $region34: #{up_unet_block.1} parent=11 // pred_check_branch
        %316 = sbr.rel (%p314) target = $region36
      $region35: #{up_unet_block.1} parent=11 // pred_region
        _
      $region36: #{up_unet_block.1} parent=11 // pred_fallthru
        _
      // Predicated region
      $region37: #{up_unet_block.1} parent=11 // pred_check
        %p317 = pneg %p216
      $region38: #{up_unet_block.1} parent=11 // pred_check_branch
        %319 = sbr.rel (%p317) target = $region40
      $region39: #{up_unet_block.1} parent=11 // pred_region
        _
      $region40: #{up_unet_block.1} parent=11 // pred_fallthru
        _
      // Predicated region
      $region41: #{up_unet_block.1} parent=11 // pred_check
        %p320 = pneg %p237
      $region42: #{up_unet_block.1} parent=11 // pred_check_branch
        %322 = sbr.rel (%p320) target = $region44
      $region43: #{up_unet_block.1} parent=11 // pred_region
        _
      $region44: #{up_unet_block.1} parent=11 // pred_fallthru
        _
      // Predicated region
      $region45: #{up_unet_block.1} parent=11 // pred_check
        %p323 = pneg %p258
      $region46: #{up_unet_block.1} parent=11 // pred_check_branch
        %325 = sbr.rel (%p323) target = $region48
      $region47: #{up_unet_block.1} parent=11 // pred_region
        _
      $region48: #{up_unet_block.1} parent=11 // pred_fallthru
        _
    $region12: #{up_unet_block.1} parent=5 // pred_fallthru
      _
    %p326 = scmp.lt.s32.totalorder %s17, 2
    // Predicated region
    $region49: #{up_unet_block.1} parent=5 // pred_check
      %p327 = pneg %p326
    $region50: #{up_unet_block.1} parent=5 // pred_check_branch
      %329 = sbr.rel (%p327) target = $region52
    $region51: #{up_unet_block.1} parent=5 // pred_region
      // Predicated region
      $region53: #{up_unet_block.1} parent=51 // pred_check
        %p330 = pneg %p37
      $region54: #{up_unet_block.1} parent=51 // pred_check_branch
        %332 = sbr.rel (%p330) target = $region56
      $region55: #{up_unet_block.1} parent=51 // pred_region
        %p333 = scmp.lt.s32.totalorder %s17, 1
        %s334 = scalar_select %p333, %s17, 1
        %s335 = smul.addr %s334, 8
        %s336 = smul.addr %s335, 4
        %s337 = scalar_lea.vmem %s0, %s336
      $region56: #{up_unet_block.1} parent=51 // pred_fallthru
        _
      // Predicated region
      $region57: #{up_unet_block.1} parent=51 // pred_check
        %p338 = pneg %p63
      $region58: #{up_unet_block.1} parent=51 // pred_check_branch
        %340 = sbr.rel (%p338) target = $region60
      $region59: #{up_unet_block.1} parent=51 // pred_region
        %p341 = scmp.lt.s32.totalorder %s17, 1
        %s342 = scalar_select %p341, %s17, 1
        %s343 = smul.addr %s342, 8
        %s344 = smul.addr %s343, 8
        %s345 = scalar_lea.vmem %s1, %s344
      $region60: #{up_unet_block.1} parent=51 // pred_fallthru
        _
    $region52: #{up_unet_block.1} parent=5 // pred_fallthru
      _
    %p346 = scmp.le.s32.totalorder 1, %s17
    %p347 = scmp.lt.s32.totalorder %s17, 3
    %p348 = pnand %p346, %p347
    %p349 = pneg %p348
    // Predicated region
    $region61: #{up_unet_block.1} parent=5 // pred_check
      _
    $region62: #{up_unet_block.1} parent=5 // pred_check_branch
      %351 = sbr.rel (%p348) target = $region64
    $region63: #{up_unet_block.1} parent=5 // pred_region
      %s352 = ssub.s32 %s17, 1
      %p353 = scmp.lt.s32.totalorder %s22, 1
      %s354 = scalar_select %p353, %s22, 1
      %s355 = smul.addr %s354, 8
      %s356 = smul.addr %s355, 4
      %s357 = scalar_lea.vmem %s0, %s356
      %p358 = pneg %p43
      %p359 = pneg %p40
      %p360 = scmp.lt.s32.totalorder %s22, 1
      %s361 = scalar_select %p360, %s22, 1
      %s362 = smul.addr %s361, 8
      %s363 = smul.addr %s362, 8
      %s364 = scalar_lea.vmem %s1, %s363
      %p365 = pneg %p69
      %p366 = pneg %p66
      %p367 = pneg %p90
      %p368 = pneg %p87
      %p369 = pneg %p111
      %p370 = pneg %p108
      %p371 = pneg %p132
      %p372 = pneg %p129
      %p373 = pneg %p153
      %p374 = pneg %p150
      %p375 = pneg %p174
      %p376 = pneg %p171
      %p377 = pneg %p195
      %p378 = pneg %p192
      %p379 = pneg %p216
      %p380 = pneg %p213
      %p381 = pneg %p237
      %p382 = pneg %p234
      %p383 = pneg %p258
      %p384 = pneg %p255
      %p385 = pneg %p284
      %p386 = pneg %p281
      %p387 = scmp.lt.s32.totalorder %s22, 1
      %s388 = scalar_select %p387, %s22, 1
      %s389 = smul.addr %s388, 8
      %s390 = smul.addr %s389, 8
      %s391 = scalar_lea.vmem %s11, %s390
      %p392 = scmp.lt.s32.totalorder %s22, 1
      %s393 = scalar_select %p392, %s22, 1
      %s394 = smul.addr %s393, 8
      %s395 = smul.addr %s394, 4
      %s396 = scalar_lea.vmem %s0, %s395
      %p397 = scmp.lt.s32.totalorder %s22, 1
      %s398 = scalar_select %p397, %s22, 1
      %s399 = smul.addr %s398, 8
      %s400 = smul.addr %s399, 8
      %s401 = scalar_lea.vmem %s1, %s400
      %p402 = scmp.lt.s32.totalorder %s22, 1
      %s403 = scalar_select %p402, %s22, 1
      %s404 = smul.addr %s403, 8
      %s405 = smul.addr %s404, 8
      %s406 = scalar_lea.vmem %s11, %s405
      %v407 = vld [vmem:[%s396] sm:$0xff]
      %v408 = vld [vmem:[%s396 + $0x8] sm:$0xff]
      %v409 = vld [vmem:[%s396 + $0x10] sm:$0xff]
      %v410 = vld [vmem:[%s396 + $0x18] sm:$0xff]
      %v411 = vld [vmem:[%s401] sm:$0xff]
      %v412 = vld [vmem:[%s401 + $0x8] sm:$0xff]
      %v413 = vld [vmem:[%s401 + $0x10] sm:$0xff]
      %v414 = vld [vmem:[%s401 + $0x18] sm:$0xff]
      %v415 = vld [vmem:[%s401 + $0x20] sm:$0xff]
      %v416 = vld [vmem:[%s401 + $0x28] sm:$0xff]
      %v417 = vld [vmem:[%s401 + $0x30] sm:$0xff]
      %v418 = vld [vmem:[%s401 + $0x38] sm:$0xff]
      %v419 = vld [vmem:[%s2] ss:$8 sm:$0xf]
      %v420 = vld [vmem:[%s2] ss:$8 sm:$0xf0]
      %v421 = vor.u32 %v419, %v420
      %422 = vrot.lane.b32.xlu0 %v411, 33
      %v423 = vpop.permute.xlu0 %422
      %424 = vrot.lane.b32.xlu0 %v412, 33
      %v425 = vpop.permute.xlu0 %424
      %426 = vrot.lane.b32.xlu0 %v413, 33
      %v427 = vpop.permute.xlu0 %426
      %428 = vrot.lane.b32.xlu0 %v414, 33
      %v429 = vpop.permute.xlu0 %428
      %430 = vrot.lane.b32.xlu0 %v415, 33
      %v431 = vpop.permute.xlu0 %430
      %432 = vrot.lane.b32.xlu0 %v416, 33
      %v433 = vpop.permute.xlu0 %432
      %434 = vrot.lane.b32.xlu0 %v417, 33
      %v435 = vpop.permute.xlu0 %434
      %436 = vrot.lane.b32.xlu0 %v418, 33
      %v437 = vpop.permute.xlu0 %436
      %v438 = vlaneseq
      %v439 = vand.u32 %v438, 127
      %vm440 = vcmp.lt.s32.totalorder %v439, 33
      %v441 = vsel %vm440, %v435, %v437
      %v442 = vsel %vm440, %v433, %v435
      %v443 = vsel %vm440, %v431, %v433
      %v444 = vsel %vm440, %v429, %v431
      %v445 = vsel %vm440, %v427, %v429
      %v446 = vsel %vm440, %v425, %v427
      %v447 = vsel %vm440, %v423, %v425
      %v448 = vsel %vm440, %v437, %v423
      %v450 = vlaneseq
      %v451 = vshrl.u32 %v450, 7
      %v452 = vsub.s32 0, %v451
      %v453 = vrot.slane %v421, %v452
      %v454 = vlaneseq
      %v455 = vshrl.u32 %v454, 7
      %v456 = vsub.s32 1, %v455
      %v457 = vrot.slane %v421, %v456
      %v458 = vlaneseq
      %v459 = vshrl.u32 %v458, 7
      %v460 = vsub.s32 2, %v459
      %v461 = vrot.slane %v421, %v460
      %v462 = vlaneseq
      %v463 = vshrl.u32 %v462, 7
      %v464 = vsub.s32 3, %v463
      %v465 = vrot.slane %v421, %v464
      %v466 = vlaneseq
      %v467 = vshrl.u32 %v466, 7
      %v468 = vsub.s32 4, %v467
      %v469 = vrot.slane %v421, %v468
      %v470 = vlaneseq
      %v471 = vshrl.u32 %v470, 7
      %v472 = vsub.s32 5, %v471
      %v473 = vrot.slane %v421, %v472
      %v474 = vlaneseq
      %v475 = vshrl.u32 %v474, 7
      %v476 = vsub.s32 6, %v475
      %v477 = vrot.slane %v421, %v476
      %v478 = vlaneseq
      %v479 = vshrl.u32 %v478, 7
      %v480 = vsub.s32 7, %v479
      %v481 = vrot.slane %v421, %v480
      %v490 = vmul.f32 %v453, %v448
      %v491 = vmul.f32 %v457, %v447
      %v492 = vmul.f32 %v461, %v446
      %v493 = vmul.f32 %v465, %v445
      %v494 = vmul.f32 %v469, %v444
      %v495 = vmul.f32 %v473, %v443
      %v496 = vmul.f32 %v477, %v442
      %v497 = vmul.f32 %v481, %v441
      %498 = vst [vmem:[#allocation2] sm:$0xff] %v490
      %499 = vst [vmem:[#allocation2 + $0x8] sm:$0xff] %v491
      %500 = vst [vmem:[#allocation2 + $0x10] sm:$0xff] %v492
      %501 = vst [vmem:[#allocation2 + $0x18] sm:$0xff] %v493
      %502 = vst [vmem:[#allocation2 + $0x20] sm:$0xff] %v494
      %503 = vst [vmem:[#allocation2 + $0x28] sm:$0xff] %v495
      %504 = vst [vmem:[#allocation2 + $0x30] sm:$0xff] %v496
      %505 = vst [vmem:[#allocation2 + $0x38] sm:$0xff] %v497
      %s506 = scalar_lea.vmem %s2, 1
      %v507 = vld [vmem:[%s506] ss:$8 sm:$0xf]
      %v508 = vld [vmem:[%s506] ss:$8 sm:$0xf0]
      %v509 = vor.u32 %v507, %v508
      %510 = vrot.lane.b32.xlu0 %v411, 32
      %v511 = vpop.permute.xlu0 %510
      %512 = vrot.lane.b32.xlu0 %v412, 32
      %v513 = vpop.permute.xlu0 %512
      %514 = vrot.lane.b32.xlu0 %v413, 32
      %v515 = vpop.permute.xlu0 %514
      %516 = vrot.lane.b32.xlu0 %v414, 32
      %v517 = vpop.permute.xlu0 %516
      %518 = vrot.lane.b32.xlu0 %v415, 32
      %v519 = vpop.permute.xlu0 %518
      %520 = vrot.lane.b32.xlu0 %v416, 32
      %v521 = vpop.permute.xlu0 %520
      %522 = vrot.lane.b32.xlu0 %v417, 32
      %v523 = vpop.permute.xlu0 %522
      %524 = vrot.lane.b32.xlu0 %v418, 32
      %v525 = vpop.permute.xlu0 %524
      %vm526 = vcmp.lt.s32.totalorder %v439, 32
      %v527 = vsel %vm526, %v523, %v525
      %v528 = vsel %vm526, %v521, %v523
      %v529 = vsel %vm526, %v519, %v521
      %v530 = vsel %vm526, %v517, %v519
      %v531 = vsel %vm526, %v515, %v517
      %v532 = vsel %vm526, %v513, %v515
      %v533 = vsel %vm526, %v511, %v513
      %v534 = vsel %vm526, %v525, %v511
      %v536 = vlaneseq
      %v537 = vshrl.u32 %v536, 7
      %v538 = vsub.s32 0, %v537
      %v539 = vrot.slane %v509, %v538
      %v540 = vlaneseq
      %v541 = vshrl.u32 %v540, 7
      %v542 = vsub.s32 1, %v541
      %v543 = vrot.slane %v509, %v542
      %v544 = vlaneseq
      %v545 = vshrl.u32 %v544, 7
      %v546 = vsub.s32 2, %v545
      %v547 = vrot.slane %v509, %v546
      %v548 = vlaneseq
      %v549 = vshrl.u32 %v548, 7
      %v550 = vsub.s32 3, %v549
      %v551 = vrot.slane %v509, %v550
      %v552 = vlaneseq
      %v553 = vshrl.u32 %v552, 7
      %v554 = vsub.s32 4, %v553
      %v555 = vrot.slane %v509, %v554
      %v556 = vlaneseq
      %v557 = vshrl.u32 %v556, 7
      %v558 = vsub.s32 5, %v557
      %v559 = vrot.slane %v509, %v558
      %v560 = vlaneseq
      %v561 = vshrl.u32 %v560, 7
      %v562 = vsub.s32 6, %v561
      %v563 = vrot.slane %v509, %v562
      %v564 = vlaneseq
      %v565 = vshrl.u32 %v564, 7
      %v566 = vsub.s32 7, %v565
      %v567 = vrot.slane %v509, %v566
      %v576 = vmul.f32 %v539, %v534
      %v577 = vmul.f32 %v543, %v533
      %v578 = vmul.f32 %v547, %v532
      %v579 = vmul.f32 %v551, %v531
      %v580 = vmul.f32 %v555, %v530
      %v581 = vmul.f32 %v559, %v529
      %v582 = vmul.f32 %v563, %v528
      %v583 = vmul.f32 %v567, %v527
      %584 = vst [vmem:[#allocation2 + $0x40] sm:$0xff] %v576
      %585 = vst [vmem:[#allocation2 + $0x48] sm:$0xff] %v577
      %586 = vst [vmem:[#allocation2 + $0x50] sm:$0xff] %v578
      %587 = vst [vmem:[#allocation2 + $0x58] sm:$0xff] %v579
      %588 = vst [vmem:[#allocation2 + $0x60] sm:$0xff] %v580
      %589 = vst [vmem:[#allocation2 + $0x68] sm:$0xff] %v581
      %590 = vst [vmem:[#allocation2 + $0x70] sm:$0xff] %v582
      %591 = vst [vmem:[#allocation2 + $0x78] sm:$0xff] %v583
      %s592 = scalar_lea.vmem %s2, 2
      %v593 = vld [vmem:[%s592] ss:$8 sm:$0xf]
      %v594 = vld [vmem:[%s592] ss:$8 sm:$0xf0]
      %v595 = vor.u32 %v593, %v594
      %596 = vrot.lane.b32.xlu0 %v411, 31
      %v597 = vpop.permute.xlu0 %596
      %598 = vrot.lane.b32.xlu0 %v412, 31
      %v599 = vpop.permute.xlu0 %598
      %600 = vrot.lane.b32.xlu0 %v413, 31
      %v601 = vpop.permute.xlu0 %600
      %602 = vrot.lane.b32.xlu0 %v414, 31
      %v603 = vpop.permute.xlu0 %602
      %604 = vrot.lane.b32.xlu0 %v415, 31
      %v605 = vpop.permute.xlu0 %604
      %606 = vrot.lane.b32.xlu0 %v416, 31
      %v607 = vpop.permute.xlu0 %606
      %608 = vrot.lane.b32.xlu0 %v417, 31
      %v609 = vpop.permute.xlu0 %608
      %610 = vrot.lane.b32.xlu0 %v418, 31
      %v611 = vpop.permute.xlu0 %610
      %vm612 = vcmp.lt.s32.totalorder %v439, 31
      %v613 = vsel %vm612, %v609, %v611
      %v614 = vsel %vm612, %v607, %v609
      %v615 = vsel %vm612, %v605, %v607
      %v616 = vsel %vm612, %v603, %v605
      %v617 = vsel %vm612, %v601, %v603
      %v618 = vsel %vm612, %v599, %v601
      %v619 = vsel %vm612, %v597, %v599
      %v620 = vsel %vm612, %v611, %v597
      %v622 = vlaneseq
      %v623 = vshrl.u32 %v622, 7
      %v624 = vsub.s32 0, %v623
      %v625 = vrot.slane %v595, %v624
      %v626 = vlaneseq
      %v627 = vshrl.u32 %v626, 7
      %v628 = vsub.s32 1, %v627
      %v629 = vrot.slane %v595, %v628
      %v630 = vlaneseq
      %v631 = vshrl.u32 %v630, 7
      %v632 = vsub.s32 2, %v631
      %v633 = vrot.slane %v595, %v632
      %v634 = vlaneseq
      %v635 = vshrl.u32 %v634, 7
      %v636 = vsub.s32 3, %v635
      %v637 = vrot.slane %v595, %v636
      %v638 = vlaneseq
      %v639 = vshrl.u32 %v638, 7
      %v640 = vsub.s32 4, %v639
      %v641 = vrot.slane %v595, %v640
      %v642 = vlaneseq
      %v643 = vshrl.u32 %v642, 7
      %v644 = vsub.s32 5, %v643
      %v645 = vrot.slane %v595, %v644
      %v646 = vlaneseq
      %v647 = vshrl.u32 %v646, 7
      %v648 = vsub.s32 6, %v647
      %v649 = vrot.slane %v595, %v648
      %v650 = vlaneseq
      %v651 = vshrl.u32 %v650, 7
      %v652 = vsub.s32 7, %v651
      %v653 = vrot.slane %v595, %v652
      %v662 = vmul.f32 %v625, %v620
      %v663 = vmul.f32 %v629, %v619
      %v664 = vmul.f32 %v633, %v618
      %v665 = vmul.f32 %v637, %v617
      %v666 = vmul.f32 %v641, %v616
      %v667 = vmul.f32 %v645, %v615
      %v668 = vmul.f32 %v649, %v614
      %v669 = vmul.f32 %v653, %v613
      %670 = vst [vmem:[#allocation2 + $0x80] sm:$0xff] %v662
      %671 = vst [vmem:[#allocation2 + $0x88] sm:$0xff] %v663
      %672 = vst [vmem:[#allocation2 + $0x90] sm:$0xff] %v664
      %673 = vst [vmem:[#allocation2 + $0x98] sm:$0xff] %v665
      %674 = vst [vmem:[#allocation2 + $0xa0] sm:$0xff] %v666
      %675 = vst [vmem:[#allocation2 + $0xa8] sm:$0xff] %v667
      %676 = vst [vmem:[#allocation2 + $0xb0] sm:$0xff] %v668
      %677 = vst [vmem:[#allocation2 + $0xb8] sm:$0xff] %v669
      %s678 = scalar_lea.vmem %s2, 3
      %v679 = vld [vmem:[%s678] ss:$8 sm:$0xf]
      %v680 = vld [vmem:[%s678] ss:$8 sm:$0xf0]
      %v681 = vor.u32 %v679, %v680
      %682 = vrot.lane.b32.xlu0 %v411, 1
      %v683 = vpop.permute.xlu0 %682
      %684 = vrot.lane.b32.xlu0 %v412, 1
      %v685 = vpop.permute.xlu0 %684
      %686 = vrot.lane.b32.xlu0 %v413, 1
      %v687 = vpop.permute.xlu0 %686
      %688 = vrot.lane.b32.xlu0 %v414, 1
      %v689 = vpop.permute.xlu0 %688
      %690 = vrot.lane.b32.xlu0 %v415, 1
      %v691 = vpop.permute.xlu0 %690
      %692 = vrot.lane.b32.xlu0 %v416, 1
      %v693 = vpop.permute.xlu0 %692
      %694 = vrot.lane.b32.xlu0 %v417, 1
      %v695 = vpop.permute.xlu0 %694
      %696 = vrot.lane.b32.xlu0 %v418, 1
      %v697 = vpop.permute.xlu0 %696
      %vm698 = vcmp.lt.s32.totalorder %v439, 1
      %v699 = vsel %vm698, %v695, %v697
      %v700 = vsel %vm698, %v693, %v695
      %v701 = vsel %vm698, %v691, %v693
      %v702 = vsel %vm698, %v689, %v691
      %v703 = vsel %vm698, %v687, %v689
      %v704 = vsel %vm698, %v685, %v687
      %v705 = vsel %vm698, %v683, %v685
      %v706 = vsel %vm698, %v697, %v683
      %v708 = vlaneseq
      %v709 = vshrl.u32 %v708, 7
      %v710 = vsub.s32 0, %v709
      %v711 = vrot.slane %v681, %v710
      %v712 = vlaneseq
      %v713 = vshrl.u32 %v712, 7
      %v714 = vsub.s32 1, %v713
      %v715 = vrot.slane %v681, %v714
      %v716 = vlaneseq
      %v717 = vshrl.u32 %v716, 7
      %v718 = vsub.s32 2, %v717
      %v719 = vrot.slane %v681, %v718
      %v720 = vlaneseq
      %v721 = vshrl.u32 %v720, 7
      %v722 = vsub.s32 3, %v721
      %v723 = vrot.slane %v681, %v722
      %v724 = vlaneseq
      %v725 = vshrl.u32 %v724, 7
      %v726 = vsub.s32 4, %v725
      %v727 = vrot.slane %v681, %v726
      %v728 = vlaneseq
      %v729 = vshrl.u32 %v728, 7
      %v730 = vsub.s32 5, %v729
      %v731 = vrot.slane %v681, %v730
      %v732 = vlaneseq
      %v733 = vshrl.u32 %v732, 7
      %v734 = vsub.s32 6, %v733
      %v735 = vrot.slane %v681, %v734
      %v736 = vlaneseq
      %v737 = vshrl.u32 %v736, 7
      %v738 = vsub.s32 7, %v737
      %v739 = vrot.slane %v681, %v738
      %v748 = vmul.f32 %v711, %v706
      %v749 = vmul.f32 %v715, %v705
      %v750 = vmul.f32 %v719, %v704
      %v751 = vmul.f32 %v723, %v703
      %v752 = vmul.f32 %v727, %v702
      %v753 = vmul.f32 %v731, %v701
      %v754 = vmul.f32 %v735, %v700
      %v755 = vmul.f32 %v739, %v699
      %756 = vst [vmem:[#allocation2 + $0xc0] sm:$0xff] %v748
      %757 = vst [vmem:[#allocation2 + $0xc8] sm:$0xff] %v749
      %758 = vst [vmem:[#allocation2 + $0xd0] sm:$0xff] %v750
      %759 = vst [vmem:[#allocation2 + $0xd8] sm:$0xff] %v751
      %760 = vst [vmem:[#allocation2 + $0xe0] sm:$0xff] %v752
      %761 = vst [vmem:[#allocation2 + $0xe8] sm:$0xff] %v753
      %762 = vst [vmem:[#allocation2 + $0xf0] sm:$0xff] %v754
      %763 = vst [vmem:[#allocation2 + $0xf8] sm:$0xff] %v755
      %764 = vst [vmem:[#allocation2 + $0x100] sm:$0xff] %v411
      %765 = vst [vmem:[#allocation2 + $0x108] sm:$0xff] %v412
      %766 = vst [vmem:[#allocation2 + $0x110] sm:$0xff] %v413
      %767 = vst [vmem:[#allocation2 + $0x118] sm:$0xff] %v414
      %768 = vst [vmem:[#allocation2 + $0x120] sm:$0xff] %v415
      %769 = vst [vmem:[#allocation2 + $0x128] sm:$0xff] %v416
      %770 = vst [vmem:[#allocation2 + $0x130] sm:$0xff] %v417
      %771 = vst [vmem:[#allocation2 + $0x138] sm:$0xff] %v418
      %s772 = scalar_lea.vmem %s2, 5
      %v773 = vld [vmem:[%s772] ss:$8 sm:$0xf]
      %v774 = vld [vmem:[%s772] ss:$8 sm:$0xf0]
      %v775 = vor.u32 %v773, %v774
      %776 = vrot.lane.b32.xlu0 %v411, 127
      %v777 = vpop.permute.xlu0 %776
      %778 = vrot.lane.b32.xlu0 %v412, 127
      %v779 = vpop.permute.xlu0 %778
      %780 = vrot.lane.b32.xlu0 %v413, 127
      %v781 = vpop.permute.xlu0 %780
      %782 = vrot.lane.b32.xlu0 %v414, 127
      %v783 = vpop.permute.xlu0 %782
      %784 = vrot.lane.b32.xlu0 %v415, 127
      %v785 = vpop.permute.xlu0 %784
      %786 = vrot.lane.b32.xlu0 %v416, 127
      %v787 = vpop.permute.xlu0 %786
      %788 = vrot.lane.b32.xlu0 %v417, 127
      %v789 = vpop.permute.xlu0 %788
      %790 = vrot.lane.b32.xlu0 %v418, 127
      %v791 = vpop.permute.xlu0 %790
      %vm792 = vcmp.lt.s32.totalorder %v439, 127
      %v793 = vsel %vm792, %v789, %v791
      %v794 = vsel %vm792, %v787, %v789
      %v795 = vsel %vm792, %v785, %v787
      %v796 = vsel %vm792, %v783, %v785
      %v797 = vsel %vm792, %v781, %v783
      %v798 = vsel %vm792, %v779, %v781
      %v799 = vsel %vm792, %v777, %v779
      %v800 = vsel %vm792, %v791, %v777
      %v802 = vlaneseq
      %v803 = vshrl.u32 %v802, 7
      %v804 = vsub.s32 0, %v803
      %v805 = vrot.slane %v775, %v804
      %v806 = vlaneseq
      %v807 = vshrl.u32 %v806, 7
      %v808 = vsub.s32 1, %v807
      %v809 = vrot.slane %v775, %v808
      %v810 = vlaneseq
      %v811 = vshrl.u32 %v810, 7
      %v812 = vsub.s32 2, %v811
      %v813 = vrot.slane %v775, %v812
      %v814 = vlaneseq
      %v815 = vshrl.u32 %v814, 7
      %v816 = vsub.s32 3, %v815
      %v817 = vrot.slane %v775, %v816
      %v818 = vlaneseq
      %v819 = vshrl.u32 %v818, 7
      %v820 = vsub.s32 4, %v819
      %v821 = vrot.slane %v775, %v820
      %v822 = vlaneseq
      %v823 = vshrl.u32 %v822, 7
      %v824 = vsub.s32 5, %v823
      %v825 = vrot.slane %v775, %v824
      %v826 = vlaneseq
      %v827 = vshrl.u32 %v826, 7
      %v828 = vsub.s32 6, %v827
      %v829 = vrot.slane %v775, %v828
      %v830 = vlaneseq
      %v831 = vshrl.u32 %v830, 7
      %v832 = vsub.s32 7, %v831
      %v833 = vrot.slane %v775, %v832
      %v842 = vmul.f32 %v805, %v799
      %v843 = vmul.f32 %v809, %v798
      %v844 = vmul.f32 %v813, %v797
      %v845 = vmul.f32 %v817, %v796
      %v846 = vmul.f32 %v821, %v795
      %v847 = vmul.f32 %v825, %v794
      %v848 = vmul.f32 %v829, %v793
      %v849 = vmul.f32 %v833, %v800
      %850 = vst [vmem:[#allocation2 + $0x140] sm:$0xff] %v842
      %851 = vst [vmem:[#allocation2 + $0x148] sm:$0xff] %v843
      %852 = vst [vmem:[#allocation2 + $0x150] sm:$0xff] %v844
      %853 = vst [vmem:[#allocation2 + $0x158] sm:$0xff] %v845
      %854 = vst [vmem:[#allocation2 + $0x160] sm:$0xff] %v846
      %855 = vst [vmem:[#allocation2 + $0x168] sm:$0xff] %v847
      %856 = vst [vmem:[#allocation2 + $0x170] sm:$0xff] %v848
      %857 = vst [vmem:[#allocation2 + $0x178] sm:$0xff] %v849
      %s858 = scalar_lea.vmem %s2, 6
      %v859 = vld [vmem:[%s858] ss:$8 sm:$0xf]
      %v860 = vld [vmem:[%s858] ss:$8 sm:$0xf0]
      %v861 = vor.u32 %v859, %v860
      %862 = vrot.lane.b32.xlu0 %v411, 97
      %v863 = vpop.permute.xlu0 %862
      %864 = vrot.lane.b32.xlu0 %v412, 97
      %v865 = vpop.permute.xlu0 %864
      %866 = vrot.lane.b32.xlu0 %v413, 97
      %v867 = vpop.permute.xlu0 %866
      %868 = vrot.lane.b32.xlu0 %v414, 97
      %v869 = vpop.permute.xlu0 %868
      %870 = vrot.lane.b32.xlu0 %v415, 97
      %v871 = vpop.permute.xlu0 %870
      %872 = vrot.lane.b32.xlu0 %v416, 97
      %v873 = vpop.permute.xlu0 %872
      %874 = vrot.lane.b32.xlu0 %v417, 97
      %v875 = vpop.permute.xlu0 %874
      %876 = vrot.lane.b32.xlu0 %v418, 97
      %v877 = vpop.permute.xlu0 %876
      %vm878 = vcmp.lt.s32.totalorder %v439, 97
      %v879 = vsel %vm878, %v875, %v877
      %v880 = vsel %vm878, %v873, %v875
      %v881 = vsel %vm878, %v871, %v873
      %v882 = vsel %vm878, %v869, %v871
      %v883 = vsel %vm878, %v867, %v869
      %v884 = vsel %vm878, %v865, %v867
      %v885 = vsel %vm878, %v863, %v865
      %v886 = vsel %vm878, %v877, %v863
      %v888 = vlaneseq
      %v889 = vshrl.u32 %v888, 7
      %v890 = vsub.s32 0, %v889
      %v891 = vrot.slane %v861, %v890
      %v892 = vlaneseq
      %v893 = vshrl.u32 %v892, 7
      %v894 = vsub.s32 1, %v893
      %v895 = vrot.slane %v861, %v894
      %v896 = vlaneseq
      %v897 = vshrl.u32 %v896, 7
      %v898 = vsub.s32 2, %v897
      %v899 = vrot.slane %v861, %v898
      %v900 = vlaneseq
      %v901 = vshrl.u32 %v900, 7
      %v902 = vsub.s32 3, %v901
      %v903 = vrot.slane %v861, %v902
      %v904 = vlaneseq
      %v905 = vshrl.u32 %v904, 7
      %v906 = vsub.s32 4, %v905
      %v907 = vrot.slane %v861, %v906
      %v908 = vlaneseq
      %v909 = vshrl.u32 %v908, 7
      %v910 = vsub.s32 5, %v909
      %v911 = vrot.slane %v861, %v910
      %v912 = vlaneseq
      %v913 = vshrl.u32 %v912, 7
      %v914 = vsub.s32 6, %v913
      %v915 = vrot.slane %v861, %v914
      %v916 = vlaneseq
      %v917 = vshrl.u32 %v916, 7
      %v918 = vsub.s32 7, %v917
      %v919 = vrot.slane %v861, %v918
      %v928 = vmul.f32 %v891, %v885
      %v929 = vmul.f32 %v895, %v884
      %v930 = vmul.f32 %v899, %v883
      %v931 = vmul.f32 %v903, %v882
      %v932 = vmul.f32 %v907, %v881
      %v933 = vmul.f32 %v911, %v880
      %v934 = vmul.f32 %v915, %v879
      %v935 = vmul.f32 %v919, %v886
      %936 = vst [vmem:[#allocation2 + $0x180] sm:$0xff] %v928
      %937 = vst [vmem:[#allocation2 + $0x188] sm:$0xff] %v929
      %938 = vst [vmem:[#allocation2 + $0x190] sm:$0xff] %v930
      %939 = vst [vmem:[#allocation2 + $0x198] sm:$0xff] %v931
      %940 = vst [vmem:[#allocation2 + $0x1a0] sm:$0xff] %v932
      %941 = vst [vmem:[#allocation2 + $0x1a8] sm:$0xff] %v933
      %942 = vst [vmem:[#allocation2 + $0x1b0] sm:$0xff] %v934
      %943 = vst [vmem:[#allocation2 + $0x1b8] sm:$0xff] %v935
      %s944 = scalar_lea.vmem %s2, 7
      %v945 = vld [vmem:[%s944] ss:$8 sm:$0xf]
      %v946 = vld [vmem:[%s944] ss:$8 sm:$0xf0]
      %v947 = vor.u32 %v945, %v946
      %948 = vrot.lane.b32.xlu0 %v411, 96
      %v949 = vpop.permute.xlu0 %948
      %950 = vrot.lane.b32.xlu0 %v412, 96
      %v951 = vpop.permute.xlu0 %950
      %952 = vrot.lane.b32.xlu0 %v413, 96
      %v953 = vpop.permute.xlu0 %952
      %954 = vrot.lane.b32.xlu0 %v414, 96
      %v955 = vpop.permute.xlu0 %954
      %956 = vrot.lane.b32.xlu0 %v415, 96
      %v957 = vpop.permute.xlu0 %956
      %958 = vrot.lane.b32.xlu0 %v416, 96
      %v959 = vpop.permute.xlu0 %958
      %960 = vrot.lane.b32.xlu0 %v417, 96
      %v961 = vpop.permute.xlu0 %960
      %962 = vrot.lane.b32.xlu0 %v418, 96
      %v963 = vpop.permute.xlu0 %962
      %vm964 = vcmp.lt.s32.totalorder %v439, 96
      %v965 = vsel %vm964, %v961, %v963
      %v966 = vsel %vm964, %v959, %v961
      %v967 = vsel %vm964, %v957, %v959
      %v968 = vsel %vm964, %v955, %v957
      %v969 = vsel %vm964, %v953, %v955
      %v970 = vsel %vm964, %v951, %v953
      %v971 = vsel %vm964, %v949, %v951
      %v972 = vsel %vm964, %v963, %v949
      %v974 = vlaneseq
      %v975 = vshrl.u32 %v974, 7
      %v976 = vsub.s32 0, %v975
      %v977 = vrot.slane %v947, %v976
      %v978 = vlaneseq
      %v979 = vshrl.u32 %v978, 7
      %v980 = vsub.s32 1, %v979
      %v981 = vrot.slane %v947, %v980
      %v982 = vlaneseq
      %v983 = vshrl.u32 %v982, 7
      %v984 = vsub.s32 2, %v983
      %v985 = vrot.slane %v947, %v984
      %v986 = vlaneseq
      %v987 = vshrl.u32 %v986, 7
      %v988 = vsub.s32 3, %v987
      %v989 = vrot.slane %v947, %v988
      %v990 = vlaneseq
      %v991 = vshrl.u32 %v990, 7
      %v992 = vsub.s32 4, %v991
      %v993 = vrot.slane %v947, %v992
      %v994 = vlaneseq
      %v995 = vshrl.u32 %v994, 7
      %v996 = vsub.s32 5, %v995
      %v997 = vrot.slane %v947, %v996
      %v998 = vlaneseq
      %v999 = vshrl.u32 %v998, 7
      %v1000 = vsub.s32 6, %v999
      %v1001 = vrot.slane %v947, %v1000
      %v1002 = vlaneseq
      %v1003 = vshrl.u32 %v1002, 7
      %v1004 = vsub.s32 7, %v1003
      %v1005 = vrot.slane %v947, %v1004
      %v1014 = vmul.f32 %v977, %v971
      %v1015 = vmul.f32 %v981, %v970
      %v1016 = vmul.f32 %v985, %v969
      %v1017 = vmul.f32 %v989, %v968
      %v1018 = vmul.f32 %v993, %v967
      %v1019 = vmul.f32 %v997, %v966
      %v1020 = vmul.f32 %v1001, %v965
      %v1021 = vmul.f32 %v1005, %v972
      %1022 = vst [vmem:[#allocation2 + $0x1c0] sm:$0xff] %v1014
      %1023 = vst [vmem:[#allocation2 + $0x1c8] sm:$0xff] %v1015
      %1024 = vst [vmem:[#allocation2 + $0x1d0] sm:$0xff] %v1016
      %1025 = vst [vmem:[#allocation2 + $0x1d8] sm:$0xff] %v1017
      %1026 = vst [vmem:[#allocation2 + $0x1e0] sm:$0xff] %v1018
      %1027 = vst [vmem:[#allocation2 + $0x1e8] sm:$0xff] %v1019
      %1028 = vst [vmem:[#allocation2 + $0x1f0] sm:$0xff] %v1020
      %1029 = vst [vmem:[#allocation2 + $0x1f8] sm:$0xff] %v1021
      %s1030 = scalar_lea.vmem %s2, 64
      %v1031 = vld [vmem:[%s1030] ss:$8 sm:$0xf]
      %v1032 = vld [vmem:[%s1030] ss:$8 sm:$0xf0]
      %v1033 = vor.u32 %v1031, %v1032
      %1034 = vrot.lane.b32.xlu0 %v411, 95
      %v1035 = vpop.permute.xlu0 %1034
      %1036 = vrot.lane.b32.xlu0 %v412, 95
      %v1037 = vpop.permute.xlu0 %1036
      %1038 = vrot.lane.b32.xlu0 %v413, 95
      %v1039 = vpop.permute.xlu0 %1038
      %1040 = vrot.lane.b32.xlu0 %v414, 95
      %v1041 = vpop.permute.xlu0 %1040
      %1042 = vrot.lane.b32.xlu0 %v415, 95
      %v1043 = vpop.permute.xlu0 %1042
      %1044 = vrot.lane.b32.xlu0 %v416, 95
      %v1045 = vpop.permute.xlu0 %1044
      %1046 = vrot.lane.b32.xlu0 %v417, 95
      %v1047 = vpop.permute.xlu0 %1046
      %1048 = vrot.lane.b32.xlu0 %v418, 95
      %v1049 = vpop.permute.xlu0 %1048
      %vm1050 = vcmp.lt.s32.totalorder %v439, 95
      %v1051 = vsel %vm1050, %v1047, %v1049
      %v1052 = vsel %vm1050, %v1045, %v1047
      %v1053 = vsel %vm1050, %v1043, %v1045
      %v1054 = vsel %vm1050, %v1041, %v1043
      %v1055 = vsel %vm1050, %v1039, %v1041
      %v1056 = vsel %vm1050, %v1037, %v1039
      %v1057 = vsel %vm1050, %v1035, %v1037
      %v1058 = vsel %vm1050, %v1049, %v1035
      %v1060 = vlaneseq
      %v1061 = vshrl.u32 %v1060, 7
      %v1062 = vsub.s32 0, %v1061
      %v1063 = vrot.slane %v1033, %v1062
      %v1064 = vlaneseq
      %v1065 = vshrl.u32 %v1064, 7
      %v1066 = vsub.s32 1, %v1065
      %v1067 = vrot.slane %v1033, %v1066
      %v1068 = vlaneseq
      %v1069 = vshrl.u32 %v1068, 7
      %v1070 = vsub.s32 2, %v1069
      %v1071 = vrot.slane %v1033, %v1070
      %v1072 = vlaneseq
      %v1073 = vshrl.u32 %v1072, 7
      %v1074 = vsub.s32 3, %v1073
      %v1075 = vrot.slane %v1033, %v1074
      %v1076 = vlaneseq
      %v1077 = vshrl.u32 %v1076, 7
      %v1078 = vsub.s32 4, %v1077
      %v1079 = vrot.slane %v1033, %v1078
      %v1080 = vlaneseq
      %v1081 = vshrl.u32 %v1080, 7
      %v1082 = vsub.s32 5, %v1081
      %v1083 = vrot.slane %v1033, %v1082
      %v1084 = vlaneseq
      %v1085 = vshrl.u32 %v1084, 7
      %v1086 = vsub.s32 6, %v1085
      %v1087 = vrot.slane %v1033, %v1086
      %v1088 = vlaneseq
      %v1089 = vshrl.u32 %v1088, 7
      %v1090 = vsub.s32 7, %v1089
      %v1091 = vrot.slane %v1033, %v1090
      %v1100 = vmul.f32 %v1063, %v1057
      %v1101 = vmul.f32 %v1067, %v1056
      %v1102 = vmul.f32 %v1071, %v1055
      %v1103 = vmul.f32 %v1075, %v1054
      %v1104 = vmul.f32 %v1079, %v1053
      %v1105 = vmul.f32 %v1083, %v1052
      %v1106 = vmul.f32 %v1087, %v1051
      %v1107 = vmul.f32 %v1091, %v1058
      %1108 = vst [vmem:[#allocation2 + $0x200] sm:$0xff] %v1100
      %1109 = vst [vmem:[#allocation2 + $0x208] sm:$0xff] %v1101
      %1110 = vst [vmem:[#allocation2 + $0x210] sm:$0xff] %v1102
      %1111 = vst [vmem:[#allocation2 + $0x218] sm:$0xff] %v1103
      %1112 = vst [vmem:[#allocation2 + $0x220] sm:$0xff] %v1104
      %1113 = vst [vmem:[#allocation2 + $0x228] sm:$0xff] %v1105
      %1114 = vst [vmem:[#allocation2 + $0x230] sm:$0xff] %v1106
      %1115 = vst [vmem:[#allocation2 + $0x238] sm:$0xff] %v1107
      %v1116 = vld [vmem:[%s3] sm:$0xf]
      %v1117 = vld [vmem:[#allocation2] sm:$0xff]
      %v1118 = vld [vmem:[#allocation2 + $0x8] sm:$0xff]
      %v1119 = vld [vmem:[#allocation2 + $0x10] sm:$0xff]
      %v1120 = vld [vmem:[#allocation2 + $0x18] sm:$0xff]
      %v1121 = vld [vmem:[#allocation2 + $0x20] sm:$0xff]
      %v1122 = vld [vmem:[#allocation2 + $0x28] sm:$0xff]
      %v1123 = vld [vmem:[#allocation2 + $0x30] sm:$0xff]
      %v1124 = vld [vmem:[#allocation2 + $0x38] sm:$0xff]
      %v1125 = vld [vmem:[#allocation2 + $0x40] sm:$0xff]
      %v1126 = vld [vmem:[#allocation2 + $0x48] sm:$0xff]
      %v1127 = vld [vmem:[#allocation2 + $0x50] sm:$0xff]
      %v1128 = vld [vmem:[#allocation2 + $0x58] sm:$0xff]
      %v1129 = vld [vmem:[#allocation2 + $0x60] sm:$0xff]
      %v1130 = vld [vmem:[#allocation2 + $0x68] sm:$0xff]
      %v1131 = vld [vmem:[#allocation2 + $0x70] sm:$0xff]
      %v1132 = vld [vmem:[#allocation2 + $0x78] sm:$0xff]
      %v1133 = vld [vmem:[#allocation2 + $0x80] sm:$0xff]
      %v1134 = vld [vmem:[#allocation2 + $0x88] sm:$0xff]
      %v1135 = vld [vmem:[#allocation2 + $0x90] sm:$0xff]
      %v1136 = vld [vmem:[#allocation2 + $0x98] sm:$0xff]
      %v1137 = vld [vmem:[#allocation2 + $0xa0] sm:$0xff]
      %v1138 = vld [vmem:[#allocation2 + $0xa8] sm:$0xff]
      %v1139 = vld [vmem:[#allocation2 + $0xb0] sm:$0xff]
      %v1140 = vld [vmem:[#allocation2 + $0xb8] sm:$0xff]
      %v1141 = vld [vmem:[#allocation2 + $0xc0] sm:$0xff]
      %v1142 = vld [vmem:[#allocation2 + $0xc8] sm:$0xff]
      %v1143 = vld [vmem:[#allocation2 + $0xd0] sm:$0xff]
      %v1144 = vld [vmem:[#allocation2 + $0xd8] sm:$0xff]
      %v1145 = vld [vmem:[#allocation2 + $0xe0] sm:$0xff]
      %v1146 = vld [vmem:[#allocation2 + $0xe8] sm:$0xff]
      %v1147 = vld [vmem:[#allocation2 + $0xf0] sm:$0xff]
      %v1148 = vld [vmem:[#allocation2 + $0xf8] sm:$0xff]
      %v1149 = vld [vmem:[#allocation2 + $0x100] sm:$0xff]
      %v1150 = vld [vmem:[#allocation2 + $0x108] sm:$0xff]
      %v1151 = vld [vmem:[#allocation2 + $0x110] sm:$0xff]
      %v1152 = vld [vmem:[#allocation2 + $0x118] sm:$0xff]
      %v1153 = vld [vmem:[#allocation2 + $0x120] sm:$0xff]
      %v1154 = vld [vmem:[#allocation2 + $0x128] sm:$0xff]
      %v1155 = vld [vmem:[#allocation2 + $0x130] sm:$0xff]
      %v1156 = vld [vmem:[#allocation2 + $0x138] sm:$0xff]
      %v1157 = vld [vmem:[#allocation2 + $0x140] sm:$0xff]
      %v1158 = vld [vmem:[#allocation2 + $0x148] sm:$0xff]
      %v1159 = vld [vmem:[#allocation2 + $0x150] sm:$0xff]
      %v1160 = vld [vmem:[#allocation2 + $0x158] sm:$0xff]
      %v1161 = vld [vmem:[#allocation2 + $0x160] sm:$0xff]
      %v1162 = vld [vmem:[#allocation2 + $0x168] sm:$0xff]
      %v1163 = vld [vmem:[#allocation2 + $0x170] sm:$0xff]
      %v1164 = vld [vmem:[#allocation2 + $0x178] sm:$0xff]
      %v1165 = vld [vmem:[#allocation2 + $0x180] sm:$0xff]
      %v1166 = vld [vmem:[#allocation2 + $0x188] sm:$0xff]
      %v1167 = vld [vmem:[#allocation2 + $0x190] sm:$0xff]
      %v1168 = vld [vmem:[#allocation2 + $0x198] sm:$0xff]
      %v1169 = vld [vmem:[#allocation2 + $0x1a0] sm:$0xff]
      %v1170 = vld [vmem:[#allocation2 + $0x1a8] sm:$0xff]
      %v1171 = vld [vmem:[#allocation2 + $0x1b0] sm:$0xff]
      %v1172 = vld [vmem:[#allocation2 + $0x1b8] sm:$0xff]
      %v1173 = vld [vmem:[#allocation2 + $0x1c0] sm:$0xff]
      %v1174 = vld [vmem:[#allocation2 + $0x1c8] sm:$0xff]
      %v1175 = vld [vmem:[#allocation2 + $0x1d0] sm:$0xff]
      %v1176 = vld [vmem:[#allocation2 + $0x1d8] sm:$0xff]
      %v1177 = vld [vmem:[#allocation2 + $0x1e0] sm:$0xff]
      %v1178 = vld [vmem:[#allocation2 + $0x1e8] sm:$0xff]
      %v1179 = vld [vmem:[#allocation2 + $0x1f0] sm:$0xff]
      %v1180 = vld [vmem:[#allocation2 + $0x1f8] sm:$0xff]
      %v1181 = vld [vmem:[#allocation2 + $0x200] sm:$0xff]
      %v1182 = vld [vmem:[#allocation2 + $0x208] sm:$0xff]
      %v1183 = vld [vmem:[#allocation2 + $0x210] sm:$0xff]
      %v1184 = vld [vmem:[#allocation2 + $0x218] sm:$0xff]
      %v1185 = vld [vmem:[#allocation2 + $0x220] sm:$0xff]
      %v1186 = vld [vmem:[#allocation2 + $0x228] sm:$0xff]
      %v1187 = vld [vmem:[#allocation2 + $0x230] sm:$0xff]
      %v1188 = vld [vmem:[#allocation2 + $0x238] sm:$0xff]
      %v1189 = vld [vmem:[%s4] sm:$0xf]
      %1191 = vset.pattern.permute.xlu0 0
      %1192 = vperm.xlu0 %1191, %v1189
      %v1193 = vpop.permute.xlu0 %1192
      %vm1195 = vcmask 588800
      %v1197 = vsel %vm1195, %v1116, 0
      %1199 = vmatprep.subr.mxu0 0.0
      %1200 = vmatpush1.msra.mxu0 0.0
      %1201 = vmatprep.subr.mxu0 0.0
      %1202 = vmatpush1.msra.mxu0 0.0
      %1203 = vmatprep.subr.mxu0 0.0
      %1204 = vmatpush1.msra.mxu0 0.0
      %1205 = vmatprep.subr.mxu0 0.0
      %1206 = vmatpush1.msra.mxu0 0.0
      %1207 = vmatprep.subr.mxu0 0.0
      %1208 = vmatpush1.msra.mxu0 0.0
      %1209 = vmatprep.subr.mxu0 0.0
      %1210 = vmatpush1.msra.mxu0 0.0
      %1211 = vmatprep.subr.mxu0 0.0
      %1212 = vmatpush1.msra.mxu0 0.0
      %1213 = vmatprep.subr.mxu0 %v1182
      %1214 = vmatpush1.msra.mxu0 %v1181
      %1215 = vmatprep.subr.mxu0 %v1174
      %1216 = vmatpush1.msra.mxu0 %v1173
      %1217 = vmatprep.subr.mxu0 %v1166
      %1218 = vmatpush1.msra.mxu0 %v1165
      %1219 = vmatprep.subr.mxu0 %v1158
      %1220 = vmatpush1.msra.mxu0 %v1157
      %1221 = vmatprep.subr.mxu0 %v1150
      %1222 = vmatpush1.msra.mxu0 %v1149
      %1223 = vmatprep.subr.mxu0 %v1142
      %1224 = vmatpush1.msra.mxu0 %v1141
      %1225 = vmatprep.subr.mxu0 %v1134
      %1226 = vmatpush1.msra.mxu0 %v1133
      %1227 = vmatprep.subr.mxu0 %v1126
      %1228 = vmatpush1.msra.mxu0 %v1125
      %1229 = vmatprep.subr.mxu0 %v1118
      %1230 = vmatpush1.msra.mxu0 %v1117
      %1231 = vmatprep.subr.mxu0 0.0
      %1232 = vmatpush2.msra.mxu0 0.0
      %1233 = vmatprep.subr.mxu0 0.0
      %1234 = vmatpush2.msra.mxu0 0.0
      %1235 = vmatprep.subr.mxu0 0.0
      %1236 = vmatpush2.msra.mxu0 0.0
      %1237 = vmatprep.subr.mxu0 0.0
      %1238 = vmatpush2.msra.mxu0 0.0
      %1239 = vmatprep.subr.mxu0 0.0
      %1240 = vmatpush2.msra.mxu0 0.0
      %1241 = vmatprep.subr.mxu0 0.0
      %1242 = vmatpush2.msra.mxu0 0.0
      %1243 = vmatprep.subr.mxu0 0.0
      %1244 = vmatpush2.msra.mxu0 0.0
      %1245 = vmatprep.subr.mxu0 0.0
      %1246 = vmatpush2.msra.mxu0 0.0
      %1247 = vmatprep.subr.mxu0 0.0
      %1248 = vmatpush2.msra.mxu0 0.0
      %1249 = vmatprep.subr.mxu0 0.0
      %1250 = vmatpush2.msra.mxu0 0.0
      %1251 = vmatprep.subr.mxu0 0.0
      %1252 = vmatpush2.msra.mxu0 0.0
      %1253 = vmatprep.subr.mxu0 0.0
      %1254 = vmatpush2.msra.mxu0 0.0
      %1255 = vmatprep.subr.mxu0 0.0
      %1256 = vmatpush2.msra.mxu0 0.0
      %1257 = vmatprep.subr.mxu0 0.0
      %1258 = vmatpush2.msra.mxu0 0.0
      %1259 = vmatprep.subr.mxu0 0.0
      %1260 = vmatpush2.msra.mxu0 0.0
      %1261 = vmatprep.subr.mxu0 0.0
      %1262 = vmatpush2.msra.mxu0 0.0
      %1263 = vmatprep.mubr.f32.mxu0 0.0
      %1264 = vmatmul.mubr.f32.gmra.mxu0 %v1197
      %v1265 = vpop.f32.mrf.mxu0
      %v1266 = vadd.f32 %v1193, %v1265
      %v1267 = vpop.f32.mrf.mxu0
      %v1268 = vadd.f32 %v1193, %v1267
      %1269 = vdwg.mxu0
      %1270 = vmatprep.subr.mxu0 0.0
      %1271 = vmatpush1.msra.mxu0 0.0
      %1272 = vmatprep.subr.mxu0 0.0
      %1273 = vmatpush1.msra.mxu0 0.0
      %1274 = vmatprep.subr.mxu0 0.0
      %1275 = vmatpush1.msra.mxu0 0.0
      %1276 = vmatprep.subr.mxu0 0.0
      %1277 = vmatpush1.msra.mxu0 0.0
      %1278 = vmatprep.subr.mxu0 0.0
      %1279 = vmatpush1.msra.mxu0 0.0
      %1280 = vmatprep.subr.mxu0 0.0
      %1281 = vmatpush1.msra.mxu0 0.0
      %1282 = vmatprep.subr.mxu0 0.0
      %1283 = vmatpush1.msra.mxu0 0.0
      %1284 = vmatprep.subr.mxu0 %v1184
      %1285 = vmatpush1.msra.mxu0 %v1183
      %1286 = vmatprep.subr.mxu0 %v1176
      %1287 = vmatpush1.msra.mxu0 %v1175
      %1288 = vmatprep.subr.mxu0 %v1168
      %1289 = vmatpush1.msra.mxu0 %v1167
      %1290 = vmatprep.subr.mxu0 %v1160
      %1291 = vmatpush1.msra.mxu0 %v1159
      %1292 = vmatprep.subr.mxu0 %v1152
      %1293 = vmatpush1.msra.mxu0 %v1151
      %1294 = vmatprep.subr.mxu0 %v1144
      %1295 = vmatpush1.msra.mxu0 %v1143
      %1296 = vmatprep.subr.mxu0 %v1136
      %1297 = vmatpush1.msra.mxu0 %v1135
      %1298 = vmatprep.subr.mxu0 %v1128
      %1299 = vmatpush1.msra.mxu0 %v1127
      %1300 = vmatprep.subr.mxu0 %v1120
      %1301 = vmatpush1.msra.mxu0 %v1119
      %1302 = vmatprep.subr.mxu0 0.0
      %1303 = vmatpush2.msra.mxu0 0.0
      %1304 = vmatprep.subr.mxu0 0.0
      %1305 = vmatpush2.msra.mxu0 0.0
      %1306 = vmatprep.subr.mxu0 0.0
      %1307 = vmatpush2.msra.mxu0 0.0
      %1308 = vmatprep.subr.mxu0 0.0
      %1309 = vmatpush2.msra.mxu0 0.0
      %1310 = vmatprep.subr.mxu0 0.0
      %1311 = vmatpush2.msra.mxu0 0.0
      %1312 = vmatprep.subr.mxu0 0.0
      %1313 = vmatpush2.msra.mxu0 0.0
      %1314 = vmatprep.subr.mxu0 0.0
      %1315 = vmatpush2.msra.mxu0 0.0
      %1316 = vmatprep.subr.mxu0 0.0
      %1317 = vmatpush2.msra.mxu0 0.0
      %1318 = vmatprep.subr.mxu0 0.0
      %1319 = vmatpush2.msra.mxu0 0.0
      %1320 = vmatprep.subr.mxu0 0.0
      %1321 = vmatpush2.msra.mxu0 0.0
      %1322 = vmatprep.subr.mxu0 0.0
      %1323 = vmatpush2.msra.mxu0 0.0
      %1324 = vmatprep.subr.mxu0 0.0
      %1325 = vmatpush2.msra.mxu0 0.0
      %1326 = vmatprep.subr.mxu0 0.0
      %1327 = vmatpush2.msra.mxu0 0.0
      %1328 = vmatprep.subr.mxu0 0.0
      %1329 = vmatpush2.msra.mxu0 0.0
      %1330 = vmatprep.subr.mxu0 0.0
      %1331 = vmatpush2.msra.mxu0 0.0
      %1332 = vmatprep.subr.mxu0 0.0
      %1333 = vmatpush2.msra.mxu0 0.0
      %1334 = vmatprep.mubr.f32.mxu0 0.0
      %1335 = vmatmul.mubr.f32.gmra.mxu0 %v1197
      %v1336 = vpop.f32.mrf.mxu0
      %v1337 = vadd.f32 %v1193, %v1336
      %v1338 = vpop.f32.mrf.mxu0
      %v1339 = vadd.f32 %v1193, %v1338
      %1340 = vdwg.mxu0
      %1341 = vmatprep.subr.mxu0 0.0
      %1342 = vmatpush1.msra.mxu0 0.0
      %1343 = vmatprep.subr.mxu0 0.0
      %1344 = vmatpush1.msra.mxu0 0.0
      %1345 = vmatprep.subr.mxu0 0.0
      %1346 = vmatpush1.msra.mxu0 0.0
      %1347 = vmatprep.subr.mxu0 0.0
      %1348 = vmatpush1.msra.mxu0 0.0
      %1349 = vmatprep.subr.mxu0 0.0
      %1350 = vmatpush1.msra.mxu0 0.0
      %1351 = vmatprep.subr.mxu0 0.0
      %1352 = vmatpush1.msra.mxu0 0.0
      %1353 = vmatprep.subr.mxu0 0.0
      %1354 = vmatpush1.msra.mxu0 0.0
      %1355 = vmatprep.subr.mxu0 %v1186
      %1356 = vmatpush1.msra.mxu0 %v1185
      %1357 = vmatprep.subr.mxu0 %v1178
      %1358 = vmatpush1.msra.mxu0 %v1177
      %1359 = vmatprep.subr.mxu0 %v1170
      %1360 = vmatpush1.msra.mxu0 %v1169
      %1361 = vmatprep.subr.mxu0 %v1162
      %1362 = vmatpush1.msra.mxu0 %v1161
      %1363 = vmatprep.subr.mxu0 %v1154
      %1364 = vmatpush1.msra.mxu0 %v1153
      %1365 = vmatprep.subr.mxu0 %v1146
      %1366 = vmatpush1.msra.mxu0 %v1145
      %1367 = vmatprep.subr.mxu0 %v1138
      %1368 = vmatpush1.msra.mxu0 %v1137
      %1369 = vmatprep.subr.mxu0 %v1130
      %1370 = vmatpush1.msra.mxu0 %v1129
      %1371 = vmatprep.subr.mxu0 %v1122
      %1372 = vmatpush1.msra.mxu0 %v1121
      %1373 = vmatprep.subr.mxu0 0.0
      %1374 = vmatpush2.msra.mxu0 0.0
      %1375 = vmatprep.subr.mxu0 0.0
      %1376 = vmatpush2.msra.mxu0 0.0
      %1377 = vmatprep.subr.mxu0 0.0
      %1378 = vmatpush2.msra.mxu0 0.0
      %1379 = vmatprep.subr.mxu0 0.0
      %1380 = vmatpush2.msra.mxu0 0.0
      %1381 = vmatprep.subr.mxu0 0.0
      %1382 = vmatpush2.msra.mxu0 0.0
      %1383 = vmatprep.subr.mxu0 0.0
      %1384 = vmatpush2.msra.mxu0 0.0
      %1385 = vmatprep.subr.mxu0 0.0
      %1386 = vmatpush2.msra.mxu0 0.0
      %1387 = vmatprep.subr.mxu0 0.0
      %1388 = vmatpush2.msra.mxu0 0.0
      %1389 = vmatprep.subr.mxu0 0.0
      %1390 = vmatpush2.msra.mxu0 0.0
      %1391 = vmatprep.subr.mxu0 0.0
      %1392 = vmatpush2.msra.mxu0 0.0
      %1393 = vmatprep.subr.mxu0 0.0
      %1394 = vmatpush2.msra.mxu0 0.0
      %1395 = vmatprep.subr.mxu0 0.0
      %1396 = vmatpush2.msra.mxu0 0.0
      %1397 = vmatprep.subr.mxu0 0.0
      %1398 = vmatpush2.msra.mxu0 0.0
      %1399 = vmatprep.subr.mxu0 0.0
      %1400 = vmatpush2.msra.mxu0 0.0
      %1401 = vmatprep.subr.mxu0 0.0
      %1402 = vmatpush2.msra.mxu0 0.0
      %1403 = vmatprep.subr.mxu0 0.0
      %1404 = vmatpush2.msra.mxu0 0.0
      %1405 = vmatprep.mubr.f32.mxu0 0.0
      %1406 = vmatmul.mubr.f32.gmra.mxu0 %v1197
      %v1407 = vpop.f32.mrf.mxu0
      %v1408 = vadd.f32 %v1193, %v1407
      %v1409 = vpop.f32.mrf.mxu0
      %v1410 = vadd.f32 %v1193, %v1409
      %1411 = vdwg.mxu0
      %1412 = vmatprep.subr.mxu0 0.0
      %1413 = vmatpush1.msra.mxu0 0.0
      %1414 = vmatprep.subr.mxu0 0.0
      %1415 = vmatpush1.msra.mxu0 0.0
      %1416 = vmatprep.subr.mxu0 0.0
      %1417 = vmatpush1.msra.mxu0 0.0
      %1418 = vmatprep.subr.mxu0 0.0
      %1419 = vmatpush1.msra.mxu0 0.0
      %1420 = vmatprep.subr.mxu0 0.0
      %1421 = vmatpush1.msra.mxu0 0.0
      %1422 = vmatprep.subr.mxu0 0.0
      %1423 = vmatpush1.msra.mxu0 0.0
      %1424 = vmatprep.subr.mxu0 0.0
      %1425 = vmatpush1.msra.mxu0 0.0
      %1426 = vmatprep.subr.mxu0 %v1188
      %1427 = vmatpush1.msra.mxu0 %v1187
      %1428 = vmatprep.subr.mxu0 %v1180
      %1429 = vmatpush1.msra.mxu0 %v1179
      %1430 = vmatprep.subr.mxu0 %v1172
      %1431 = vmatpush1.msra.mxu0 %v1171
      %1432 = vmatprep.subr.mxu0 %v1164
      %1433 = vmatpush1.msra.mxu0 %v1163
      %1434 = vmatprep.subr.mxu0 %v1156
      %1435 = vmatpush1.msra.mxu0 %v1155
      %1436 = vmatprep.subr.mxu0 %v1148
      %1437 = vmatpush1.msra.mxu0 %v1147
      %1438 = vmatprep.subr.mxu0 %v1140
      %1439 = vmatpush1.msra.mxu0 %v1139
      %1440 = vmatprep.subr.mxu0 %v1132
      %1441 = vmatpush1.msra.mxu0 %v1131
      %1442 = vmatprep.subr.mxu0 %v1124
      %1443 = vmatpush1.msra.mxu0 %v1123
      %1444 = vmatprep.subr.mxu0 0.0
      %1445 = vmatpush2.msra.mxu0 0.0
      %1446 = vmatprep.subr.mxu0 0.0
      %1447 = vmatpush2.msra.mxu0 0.0
      %1448 = vmatprep.subr.mxu0 0.0
      %1449 = vmatpush2.msra.mxu0 0.0
      %1450 = vmatprep.subr.mxu0 0.0
      %1451 = vmatpush2.msra.mxu0 0.0
      %1452 = vmatprep.subr.mxu0 0.0
      %1453 = vmatpush2.msra.mxu0 0.0
      %1454 = vmatprep.subr.mxu0 0.0
      %1455 = vmatpush2.msra.mxu0 0.0
      %1456 = vmatprep.subr.mxu0 0.0
      %1457 = vmatpush2.msra.mxu0 0.0
      %1458 = vmatprep.subr.mxu0 0.0
      %1459 = vmatpush2.msra.mxu0 0.0
      %1460 = vmatprep.subr.mxu0 0.0
      %1461 = vmatpush2.msra.mxu0 0.0
      %1462 = vmatprep.subr.mxu0 0.0
      %1463 = vmatpush2.msra.mxu0 0.0
      %1464 = vmatprep.subr.mxu0 0.0
      %1465 = vmatpush2.msra.mxu0 0.0
      %1466 = vmatprep.subr.mxu0 0.0
      %1467 = vmatpush2.msra.mxu0 0.0
      %1468 = vmatprep.subr.mxu0 0.0
      %1469 = vmatpush2.msra.mxu0 0.0
      %1470 = vmatprep.subr.mxu0 0.0
      %1471 = vmatpush2.msra.mxu0 0.0
      %1472 = vmatprep.subr.mxu0 0.0
      %1473 = vmatpush2.msra.mxu0 0.0
      %1474 = vmatprep.subr.mxu0 0.0
      %1475 = vmatpush2.msra.mxu0 0.0
      %1476 = vmatprep.mubr.f32.mxu0 0.0
      %1477 = vmatmul.mubr.f32.gmra.mxu0 %v1197
      %v1478 = vpop.f32.mrf.mxu0
      %v1479 = vadd.f32 %v1193, %v1478
      %v1480 = vpop.f32.mrf.mxu0
      %v1481 = vadd.f32 %v1193, %v1480
      %1482 = vdwg.mxu0
      %v1483 = vand.u32 2147483647, %v1266
      %v1484 = vand.u32 2147483647, %v1268
      %v1485 = vand.u32 2147483647, %v1337
      %v1486 = vand.u32 2147483647, %v1339
      %v1487 = vand.u32 2147483647, %v1408
      %v1488 = vand.u32 2147483647, %v1410
      %v1489 = vand.u32 2147483647, %v1479
      %v1490 = vand.u32 2147483647, %v1481
      %v1491 = vsub.f32 0.0, %v1483
      %v1492 = vsub.f32 0.0, %v1484
      %v1493 = vsub.f32 0.0, %v1485
      %v1494 = vsub.f32 0.0, %v1486
      %v1495 = vsub.f32 0.0, %v1487
      %v1496 = vsub.f32 0.0, %v1488
      %v1497 = vsub.f32 0.0, %v1489
      %v1498 = vsub.f32 0.0, %v1490
      %v1499 = vmul.f32 %v1491, 1.442695
      %v1500 = vpow.pop %v1499
      %v1501 = vmul.f32 %v1492, 1.442695
      %v1502 = vpow.pop %v1501
      %v1503 = vmul.f32 %v1493, 1.442695
      %v1504 = vpow.pop %v1503
      %v1505 = vmul.f32 %v1494, 1.442695
      %v1506 = vpow.pop %v1505
      %v1507 = vmul.f32 %v1495, 1.442695
      %v1508 = vpow.pop %v1507
      %v1509 = vmul.f32 %v1496, 1.442695
      %v1510 = vpow.pop %v1509
      %v1511 = vmul.f32 %v1497, 1.442695
      %v1512 = vpow.pop %v1511
      %v1513 = vmul.f32 %v1498, 1.442695
      %v1514 = vpow.pop %v1513
      %v1515 = vmul.f32 %v1500, %v1500
      %v1516 = vmul.f32 %v1502, %v1502
      %v1517 = vmul.f32 %v1504, %v1504
      %v1518 = vmul.f32 %v1506, %v1506
      %v1519 = vmul.f32 %v1508, %v1508
      %v1520 = vmul.f32 %v1510, %v1510
      %v1521 = vmul.f32 %v1512, %v1512
      %v1522 = vmul.f32 %v1514, %v1514
      %vm1523 = vcmp.ge.f32.partialorder %v1266, 0.0
      %vm1524 = vcmp.ge.f32.partialorder %v1268, 0.0
      %vm1525 = vcmp.ge.f32.partialorder %v1337, 0.0
      %vm1526 = vcmp.ge.f32.partialorder %v1339, 0.0
      %vm1527 = vcmp.ge.f32.partialorder %v1408, 0.0
      %vm1528 = vcmp.ge.f32.partialorder %v1410, 0.0
      %vm1529 = vcmp.ge.f32.partialorder %v1479, 0.0
      %vm1530 = vcmp.ge.f32.partialorder %v1481, 0.0
      %v1531 = vmul.f32 %v1500, 2.0
      %v1532 = vmul.f32 %v1502, 2.0
      %v1533 = vmul.f32 %v1504, 2.0
      %v1534 = vmul.f32 %v1506, 2.0
      %v1535 = vmul.f32 %v1508, 2.0
      %v1536 = vmul.f32 %v1510, 2.0
      %v1537 = vmul.f32 %v1512, 2.0
      %v1538 = vmul.f32 %v1514, 2.0
      %v1539 = vadd.f32 %v1531, 1.0
      %v1540 = vadd.f32 %v1532, 1.0
      %v1541 = vadd.f32 %v1533, 1.0
      %v1542 = vadd.f32 %v1534, 1.0
      %v1543 = vadd.f32 %v1535, 1.0
      %v1544 = vadd.f32 %v1536, 1.0
      %v1545 = vadd.f32 %v1537, 1.0
      %v1546 = vadd.f32 %v1538, 1.0
      %v1547 = vadd.f32 %v1515, %v1531
      %v1548 = vadd.f32 %v1516, %v1532
      %v1549 = vadd.f32 %v1517, %v1533
      %v1550 = vadd.f32 %v1518, %v1534
      %v1551 = vadd.f32 %v1519, %v1535
      %v1552 = vadd.f32 %v1520, %v1536
      %v1553 = vadd.f32 %v1521, %v1537
      %v1554 = vadd.f32 %v1522, %v1538
      %v1555 = vsel %vm1523, %v1539, %v1547
      %v1556 = vsel %vm1524, %v1540, %v1548
      %v1557 = vsel %vm1525, %v1541, %v1549
      %v1558 = vsel %vm1526, %v1542, %v1550
      %v1559 = vsel %vm1527, %v1543, %v1551
      %v1560 = vsel %vm1528, %v1544, %v1552
      %v1561 = vsel %vm1529, %v1545, %v1553
      %v1562 = vsel %vm1530, %v1546, %v1554
      %v1563 = vmul.f32 %v1515, 2.0
      %v1564 = vmul.f32 %v1516, 2.0
      %v1565 = vmul.f32 %v1517, 2.0
      %v1566 = vmul.f32 %v1518, 2.0
      %v1567 = vmul.f32 %v1519, 2.0
      %v1568 = vmul.f32 %v1520, 2.0
      %v1569 = vmul.f32 %v1521, 2.0
      %v1570 = vmul.f32 %v1522, 2.0
      %v1571 = vsel %vm1523, %v1563, 2.0
      %v1572 = vsel %vm1524, %v1564, 2.0
      %v1573 = vsel %vm1525, %v1565, 2.0
      %v1574 = vsel %vm1526, %v1566, 2.0
      %v1575 = vsel %vm1527, %v1567, 2.0
      %v1576 = vsel %vm1528, %v1568, 2.0
      %v1577 = vsel %vm1529, %v1569, 2.0
      %v1578 = vsel %vm1530, %v1570, 2.0
      %v1579 = vadd.f32 %v1555, %v1571
      %v1580 = vadd.f32 %v1556, %v1572
      %v1581 = vadd.f32 %v1557, %v1573
      %v1582 = vadd.f32 %v1558, %v1574
      %v1583 = vadd.f32 %v1559, %v1575
      %v1584 = vadd.f32 %v1560, %v1576
      %v1585 = vadd.f32 %v1561, %v1577
      %v1586 = vadd.f32 %v1562, %v1578
      %v1587 = vmul.f32 %v1266, %v1555
      %v1588 = vmul.f32 %v1268, %v1556
      %v1589 = vmul.f32 %v1337, %v1557
      %v1590 = vmul.f32 %v1339, %v1558
      %v1591 = vmul.f32 %v1408, %v1559
      %v1592 = vmul.f32 %v1410, %v1560
      %v1593 = vmul.f32 %v1479, %v1561
      %v1594 = vmul.f32 %v1481, %v1562
      %v1595 = vrcp.pop %v1579
      %v1596 = vmul.f32 %v1587, %v1595
      %v1597 = vrcp.pop %v1580
      %v1598 = vmul.f32 %v1588, %v1597
      %v1599 = vrcp.pop %v1581
      %v1600 = vmul.f32 %v1589, %v1599
      %v1601 = vrcp.pop %v1582
      %v1602 = vmul.f32 %v1590, %v1601
      %v1603 = vrcp.pop %v1583
      %v1604 = vmul.f32 %v1591, %v1603
      %v1605 = vrcp.pop %v1584
      %v1606 = vmul.f32 %v1592, %v1605
      %v1607 = vrcp.pop %v1585
      %v1608 = vmul.f32 %v1593, %v1607
      %v1609 = vrcp.pop %v1586
      %v1610 = vmul.f32 %v1594, %v1609
      %v1619 = vcombine.low %v1596, %v1598
      %v1620 = vcombine.low %v1600, %v1602
      %v1621 = vcombine.low %v1604, %v1606
      %v1622 = vcombine.low %v1608, %v1610
      %v1627 = vadd.f32 %v407, %v1619
      %v1628 = vadd.f32 %v408, %v1620
      %v1629 = vadd.f32 %v409, %v1621
      %v1630 = vadd.f32 %v410, %v1622
      %v1631 = vld [vmem:[%s2] ss:$8 sm:$0xf]
      %v1632 = vld [vmem:[%s2] ss:$8 sm:$0xf0]
      %v1633 = vor.u32 %v1631, %v1632
      %v1638 = vcombine.high %v1627, %v1627
      %v1639 = vcombine.high %v1628, %v1628
      %v1640 = vcombine.high %v1629, %v1629
      %v1641 = vcombine.high %v1630, %v1630
      %1646 = vrot.lane.b32.xlu0 %v1627, 33
      %v1647 = vpop.permute.xlu0 %1646
      %1648 = vrot.lane.b32.xlu0 %v1638, 33
      %v1649 = vpop.permute.xlu0 %1648
      %1650 = vrot.lane.b32.xlu0 %v1628, 33
      %v1651 = vpop.permute.xlu0 %1650
      %1652 = vrot.lane.b32.xlu0 %v1639, 33
      %v1653 = vpop.permute.xlu0 %1652
      %1654 = vrot.lane.b32.xlu0 %v1629, 33
      %v1655 = vpop.permute.xlu0 %1654
      %1656 = vrot.lane.b32.xlu0 %v1640, 33
      %v1657 = vpop.permute.xlu0 %1656
      %1658 = vrot.lane.b32.xlu0 %v1630, 33
      %v1659 = vpop.permute.xlu0 %1658
      %1660 = vrot.lane.b32.xlu0 %v1641, 33
      %v1661 = vpop.permute.xlu0 %1660
      %v1662 = vsel %vm440, %v1659, %v1661
      %v1663 = vsel %vm440, %v1657, %v1659
      %v1664 = vsel %vm440, %v1655, %v1657
      %v1665 = vsel %vm440, %v1653, %v1655
      %v1666 = vsel %vm440, %v1651, %v1653
      %v1667 = vsel %vm440, %v1649, %v1651
      %v1668 = vsel %vm440, %v1647, %v1649
      %v1669 = vsel %vm440, %v1661, %v1647
      %v1671 = vlaneseq
      %v1672 = vshrl.u32 %v1671, 7
      %v1673 = vsub.s32 0, %v1672
      %v1674 = vrot.slane %v1633, %v1673
      %v1675 = vlaneseq
      %v1676 = vshrl.u32 %v1675, 7
      %v1677 = vsub.s32 1, %v1676
      %v1678 = vrot.slane %v1633, %v1677
      %v1679 = vlaneseq
      %v1680 = vshrl.u32 %v1679, 7
      %v1681 = vsub.s32 2, %v1680
      %v1682 = vrot.slane %v1633, %v1681
      %v1683 = vlaneseq
      %v1684 = vshrl.u32 %v1683, 7
      %v1685 = vsub.s32 3, %v1684
      %v1686 = vrot.slane %v1633, %v1685
      %v1687 = vlaneseq
      %v1688 = vshrl.u32 %v1687, 7
      %v1689 = vsub.s32 4, %v1688
      %v1690 = vrot.slane %v1633, %v1689
      %v1691 = vlaneseq
      %v1692 = vshrl.u32 %v1691, 7
      %v1693 = vsub.s32 5, %v1692
      %v1694 = vrot.slane %v1633, %v1693
      %v1695 = vlaneseq
      %v1696 = vshrl.u32 %v1695, 7
      %v1697 = vsub.s32 6, %v1696
      %v1698 = vrot.slane %v1633, %v1697
      %v1699 = vlaneseq
      %v1700 = vshrl.u32 %v1699, 7
      %v1701 = vsub.s32 7, %v1700
      %v1702 = vrot.slane %v1633, %v1701
      %v1711 = vmul.f32 %v1674, %v1669
      %v1712 = vmul.f32 %v1678, %v1668
      %v1713 = vmul.f32 %v1682, %v1667
      %v1714 = vmul.f32 %v1686, %v1666
      %v1715 = vmul.f32 %v1690, %v1665
      %v1716 = vmul.f32 %v1694, %v1664
      %v1717 = vmul.f32 %v1698, %v1663
      %v1718 = vmul.f32 %v1702, %v1662
      %1719 = vst [vmem:[#allocation2] sm:$0xf] %v1711
      %1720 = vst [vmem:[#allocation2 + $0x8] sm:$0xf] %v1712
      %1721 = vst [vmem:[#allocation2 + $0x10] sm:$0xf] %v1713
      %1722 = vst [vmem:[#allocation2 + $0x18] sm:$0xf] %v1714
      %1723 = vst [vmem:[#allocation2 + $0x20] sm:$0xf] %v1715
      %1724 = vst [vmem:[#allocation2 + $0x28] sm:$0xf] %v1716
      %1725 = vst [vmem:[#allocation2 + $0x30] sm:$0xf] %v1717
      %1726 = vst [vmem:[#allocation2 + $0x38] sm:$0xf] %v1718
      %v1727 = vld [vmem:[%s506] ss:$8 sm:$0xf]
      %v1728 = vld [vmem:[%s506] ss:$8 sm:$0xf0]
      %v1729 = vor.u32 %v1727, %v1728
      %1730 = vrot.lane.b32.xlu0 %v1627, 32
      %v1731 = vpop.permute.xlu0 %1730
      %1732 = vrot.lane.b32.xlu0 %v1638, 32
      %v1733 = vpop.permute.xlu0 %1732
      %1734 = vrot.lane.b32.xlu0 %v1628, 32
      %v1735 = vpop.permute.xlu0 %1734
      %1736 = vrot.lane.b32.xlu0 %v1639, 32
      %v1737 = vpop.permute.xlu0 %1736
      %1738 = vrot.lane.b32.xlu0 %v1629, 32
      %v1739 = vpop.permute.xlu0 %1738
      %1740 = vrot.lane.b32.xlu0 %v1640, 32
      %v1741 = vpop.permute.xlu0 %1740
      %1742 = vrot.lane.b32.xlu0 %v1630, 32
      %v1743 = vpop.permute.xlu0 %1742
      %1744 = vrot.lane.b32.xlu0 %v1641, 32
      %v1745 = vpop.permute.xlu0 %1744
      %v1746 = vsel %vm526, %v1743, %v1745
      %v1747 = vsel %vm526, %v1741, %v1743
      %v1748 = vsel %vm526, %v1739, %v1741
      %v1749 = vsel %vm526, %v1737, %v1739
      %v1750 = vsel %vm526, %v1735, %v1737
      %v1751 = vsel %vm526, %v1733, %v1735
      %v1752 = vsel %vm526, %v1731, %v1733
      %v1753 = vsel %vm526, %v1745, %v1731
      %v1755 = vlaneseq
      %v1756 = vshrl.u32 %v1755, 7
      %v1757 = vsub.s32 0, %v1756
      %v1758 = vrot.slane %v1729, %v1757
      %v1759 = vlaneseq
      %v1760 = vshrl.u32 %v1759, 7
      %v1761 = vsub.s32 1, %v1760
      %v1762 = vrot.slane %v1729, %v1761
      %v1763 = vlaneseq
      %v1764 = vshrl.u32 %v1763, 7
      %v1765 = vsub.s32 2, %v1764
      %v1766 = vrot.slane %v1729, %v1765
      %v1767 = vlaneseq
      %v1768 = vshrl.u32 %v1767, 7
      %v1769 = vsub.s32 3, %v1768
      %v1770 = vrot.slane %v1729, %v1769
      %v1771 = vlaneseq
      %v1772 = vshrl.u32 %v1771, 7
      %v1773 = vsub.s32 4, %v1772
      %v1774 = vrot.slane %v1729, %v1773
      %v1775 = vlaneseq
      %v1776 = vshrl.u32 %v1775, 7
      %v1777 = vsub.s32 5, %v1776
      %v1778 = vrot.slane %v1729, %v1777
      %v1779 = vlaneseq
      %v1780 = vshrl.u32 %v1779, 7
      %v1781 = vsub.s32 6, %v1780
      %v1782 = vrot.slane %v1729, %v1781
      %v1783 = vlaneseq
      %v1784 = vshrl.u32 %v1783, 7
      %v1785 = vsub.s32 7, %v1784
      %v1786 = vrot.slane %v1729, %v1785
      %v1795 = vmul.f32 %v1758, %v1753
      %v1796 = vmul.f32 %v1762, %v1752
      %v1797 = vmul.f32 %v1766, %v1751
      %v1798 = vmul.f32 %v1770, %v1750
      %v1799 = vmul.f32 %v1774, %v1749
      %v1800 = vmul.f32 %v1778, %v1748
      %v1801 = vmul.f32 %v1782, %v1747
      %v1802 = vmul.f32 %v1786, %v1746
      %v1811 = vrot.slane %v1795, 4
      %v1812 = vrot.slane %v1796, 4
      %v1813 = vrot.slane %v1797, 4
      %v1814 = vrot.slane %v1798, 4
      %v1815 = vrot.slane %v1799, 4
      %v1816 = vrot.slane %v1800, 4
      %v1817 = vrot.slane %v1801, 4
      %v1818 = vrot.slane %v1802, 4
      %1827 = vst [vmem:[#allocation2] sm:$0xf0] %v1811
      %1828 = vst [vmem:[#allocation2 + $0x8] sm:$0xf0] %v1812
      %1829 = vst [vmem:[#allocation2 + $0x10] sm:$0xf0] %v1813
      %1830 = vst [vmem:[#allocation2 + $0x18] sm:$0xf0] %v1814
      %1831 = vst [vmem:[#allocation2 + $0x20] sm:$0xf0] %v1815
      %1832 = vst [vmem:[#allocation2 + $0x28] sm:$0xf0] %v1816
      %1833 = vst [vmem:[#allocation2 + $0x30] sm:$0xf0] %v1817
      %1834 = vst [vmem:[#allocation2 + $0x38] sm:$0xf0] %v1818
      %v1835 = vld [vmem:[%s592] ss:$8 sm:$0xf]
      %v1836 = vld [vmem:[%s592] ss:$8 sm:$0xf0]
      %v1837 = vor.u32 %v1835, %v1836
      %1838 = vrot.lane.b32.xlu0 %v1627, 31
      %v1839 = vpop.permute.xlu0 %1838
      %1840 = vrot.lane.b32.xlu0 %v1638, 31
      %v1841 = vpop.permute.xlu0 %1840
      %1842 = vrot.lane.b32.xlu0 %v1628, 31
      %v1843 = vpop.permute.xlu0 %1842
      %1844 = vrot.lane.b32.xlu0 %v1639, 31
      %v1845 = vpop.permute.xlu0 %1844
      %1846 = vrot.lane.b32.xlu0 %v1629, 31
      %v1847 = vpop.permute.xlu0 %1846
      %1848 = vrot.lane.b32.xlu0 %v1640, 31
      %v1849 = vpop.permute.xlu0 %1848
      %1850 = vrot.lane.b32.xlu0 %v1630, 31
      %v1851 = vpop.permute.xlu0 %1850
      %1852 = vrot.lane.b32.xlu0 %v1641, 31
      %v1853 = vpop.permute.xlu0 %1852
      %v1854 = vsel %vm612, %v1851, %v1853
      %v1855 = vsel %vm612, %v1849, %v1851
      %v1856 = vsel %vm612, %v1847, %v1849
      %v1857 = vsel %vm612, %v1845, %v1847
      %v1858 = vsel %vm612, %v1843, %v1845
      %v1859 = vsel %vm612, %v1841, %v1843
      %v1860 = vsel %vm612, %v1839, %v1841
      %v1861 = vsel %vm612, %v1853, %v1839
      %v1863 = vlaneseq
      %v1864 = vshrl.u32 %v1863, 7
      %v1865 = vsub.s32 0, %v1864
      %v1866 = vrot.slane %v1837, %v1865
      %v1867 = vlaneseq
      %v1868 = vshrl.u32 %v1867, 7
      %v1869 = vsub.s32 1, %v1868
      %v1870 = vrot.slane %v1837, %v1869
      %v1871 = vlaneseq
      %v1872 = vshrl.u32 %v1871, 7
      %v1873 = vsub.s32 2, %v1872
      %v1874 = vrot.slane %v1837, %v1873
      %v1875 = vlaneseq
      %v1876 = vshrl.u32 %v1875, 7
      %v1877 = vsub.s32 3, %v1876
      %v1878 = vrot.slane %v1837, %v1877
      %v1879 = vlaneseq
      %v1880 = vshrl.u32 %v1879, 7
      %v1881 = vsub.s32 4, %v1880
      %v1882 = vrot.slane %v1837, %v1881
      %v1883 = vlaneseq
      %v1884 = vshrl.u32 %v1883, 7
      %v1885 = vsub.s32 5, %v1884
      %v1886 = vrot.slane %v1837, %v1885
      %v1887 = vlaneseq
      %v1888 = vshrl.u32 %v1887, 7
      %v1889 = vsub.s32 6, %v1888
      %v1890 = vrot.slane %v1837, %v1889
      %v1891 = vlaneseq
      %v1892 = vshrl.u32 %v1891, 7
      %v1893 = vsub.s32 7, %v1892
      %v1894 = vrot.slane %v1837, %v1893
      %v1903 = vmul.f32 %v1866, %v1861
      %v1904 = vmul.f32 %v1870, %v1860
      %v1905 = vmul.f32 %v1874, %v1859
      %v1906 = vmul.f32 %v1878, %v1858
      %v1907 = vmul.f32 %v1882, %v1857
      %v1908 = vmul.f32 %v1886, %v1856
      %v1909 = vmul.f32 %v1890, %v1855
      %v1910 = vmul.f32 %v1894, %v1854
      %1911 = vst [vmem:[#allocation2 + $0x40] sm:$0xf] %v1903
      %1912 = vst [vmem:[#allocation2 + $0x48] sm:$0xf] %v1904
      %1913 = vst [vmem:[#allocation2 + $0x50] sm:$0xf] %v1905
      %1914 = vst [vmem:[#allocation2 + $0x58] sm:$0xf] %v1906
      %1915 = vst [vmem:[#allocation2 + $0x60] sm:$0xf] %v1907
      %1916 = vst [vmem:[#allocation2 + $0x68] sm:$0xf] %v1908
      %1917 = vst [vmem:[#allocation2 + $0x70] sm:$0xf] %v1909
      %1918 = vst [vmem:[#allocation2 + $0x78] sm:$0xf] %v1910
      %v1919 = vld [vmem:[%s678] ss:$8 sm:$0xf]
      %v1920 = vld [vmem:[%s678] ss:$8 sm:$0xf0]
      %v1921 = vor.u32 %v1919, %v1920
      %1922 = vrot.lane.b32.xlu0 %v1627, 1
      %v1923 = vpop.permute.xlu0 %1922
      %1924 = vrot.lane.b32.xlu0 %v1638, 1
      %v1925 = vpop.permute.xlu0 %1924
      %1926 = vrot.lane.b32.xlu0 %v1628, 1
      %v1927 = vpop.permute.xlu0 %1926
      %1928 = vrot.lane.b32.xlu0 %v1639, 1
      %v1929 = vpop.permute.xlu0 %1928
      %1930 = vrot.lane.b32.xlu0 %v1629, 1
      %v1931 = vpop.permute.xlu0 %1930
      %1932 = vrot.lane.b32.xlu0 %v1640, 1
      %v1933 = vpop.permute.xlu0 %1932
      %1934 = vrot.lane.b32.xlu0 %v1630, 1
      %v1935 = vpop.permute.xlu0 %1934
      %1936 = vrot.lane.b32.xlu0 %v1641, 1
      %v1937 = vpop.permute.xlu0 %1936
      %v1938 = vsel %vm698, %v1935, %v1937
      %v1939 = vsel %vm698, %v1933, %v1935
      %v1940 = vsel %vm698, %v1931, %v1933
      %v1941 = vsel %vm698, %v1929, %v1931
      %v1942 = vsel %vm698, %v1927, %v1929
      %v1943 = vsel %vm698, %v1925, %v1927
      %v1944 = vsel %vm698, %v1923, %v1925
      %v1945 = vsel %vm698, %v1937, %v1923
      %v1947 = vlaneseq
      %v1948 = vshrl.u32 %v1947, 7
      %v1949 = vsub.s32 0, %v1948
      %v1950 = vrot.slane %v1921, %v1949
      %v1951 = vlaneseq
      %v1952 = vshrl.u32 %v1951, 7
      %v1953 = vsub.s32 1, %v1952
      %v1954 = vrot.slane %v1921, %v1953
      %v1955 = vlaneseq
      %v1956 = vshrl.u32 %v1955, 7
      %v1957 = vsub.s32 2, %v1956
      %v1958 = vrot.slane %v1921, %v1957
      %v1959 = vlaneseq
      %v1960 = vshrl.u32 %v1959, 7
      %v1961 = vsub.s32 3, %v1960
      %v1962 = vrot.slane %v1921, %v1961
      %v1963 = vlaneseq
      %v1964 = vshrl.u32 %v1963, 7
      %v1965 = vsub.s32 4, %v1964
      %v1966 = vrot.slane %v1921, %v1965
      %v1967 = vlaneseq
      %v1968 = vshrl.u32 %v1967, 7
      %v1969 = vsub.s32 5, %v1968
      %v1970 = vrot.slane %v1921, %v1969
      %v1971 = vlaneseq
      %v1972 = vshrl.u32 %v1971, 7
      %v1973 = vsub.s32 6, %v1972
      %v1974 = vrot.slane %v1921, %v1973
      %v1975 = vlaneseq
      %v1976 = vshrl.u32 %v1975, 7
      %v1977 = vsub.s32 7, %v1976
      %v1978 = vrot.slane %v1921, %v1977
      %v1987 = vmul.f32 %v1950, %v1945
      %v1988 = vmul.f32 %v1954, %v1944
      %v1989 = vmul.f32 %v1958, %v1943
      %v1990 = vmul.f32 %v1962, %v1942
      %v1991 = vmul.f32 %v1966, %v1941
      %v1992 = vmul.f32 %v1970, %v1940
      %v1993 = vmul.f32 %v1974, %v1939
      %v1994 = vmul.f32 %v1978, %v1938
      %v2003 = vrot.slane %v1987, 4
      %v2004 = vrot.slane %v1988, 4
      %v2005 = vrot.slane %v1989, 4
      %v2006 = vrot.slane %v1990, 4
      %v2007 = vrot.slane %v1991, 4
      %v2008 = vrot.slane %v1992, 4
      %v2009 = vrot.slane %v1993, 4
      %v2010 = vrot.slane %v1994, 4
      %2019 = vst [vmem:[#allocation2 + $0x40] sm:$0xf0] %v2003
      %2020 = vst [vmem:[#allocation2 + $0x48] sm:$0xf0] %v2004
      %2021 = vst [vmem:[#allocation2 + $0x50] sm:$0xf0] %v2005
      %2022 = vst [vmem:[#allocation2 + $0x58] sm:$0xf0] %v2006
      %2023 = vst [vmem:[#allocation2 + $0x60] sm:$0xf0] %v2007
      %2024 = vst [vmem:[#allocation2 + $0x68] sm:$0xf0] %v2008
      %2025 = vst [vmem:[#allocation2 + $0x70] sm:$0xf0] %v2009
      %2026 = vst [vmem:[#allocation2 + $0x78] sm:$0xf0] %v2010
      %2027 = vst [vmem:[#allocation2 + $0x80] sm:$0xf] %v1627
      %2028 = vst [vmem:[#allocation2 + $0x88] sm:$0xf] %v1638
      %2029 = vst [vmem:[#allocation2 + $0x90] sm:$0xf] %v1628
      %2030 = vst [vmem:[#allocation2 + $0x98] sm:$0xf] %v1639
      %2031 = vst [vmem:[#allocation2 + $0xa0] sm:$0xf] %v1629
      %2032 = vst [vmem:[#allocation2 + $0xa8] sm:$0xf] %v1640
      %2033 = vst [vmem:[#allocation2 + $0xb0] sm:$0xf] %v1630
      %2034 = vst [vmem:[#allocation2 + $0xb8] sm:$0xf] %v1641
      %v2035 = vld [vmem:[%s772] ss:$8 sm:$0xf]
      %v2036 = vld [vmem:[%s772] ss:$8 sm:$0xf0]
      %v2037 = vor.u32 %v2035, %v2036
      %2038 = vrot.lane.b32.xlu0 %v1627, 127
      %v2039 = vpop.permute.xlu0 %2038
      %2040 = vrot.lane.b32.xlu0 %v1638, 127
      %v2041 = vpop.permute.xlu0 %2040
      %2042 = vrot.lane.b32.xlu0 %v1628, 127
      %v2043 = vpop.permute.xlu0 %2042
      %2044 = vrot.lane.b32.xlu0 %v1639, 127
      %v2045 = vpop.permute.xlu0 %2044
      %2046 = vrot.lane.b32.xlu0 %v1629, 127
      %v2047 = vpop.permute.xlu0 %2046
      %2048 = vrot.lane.b32.xlu0 %v1640, 127
      %v2049 = vpop.permute.xlu0 %2048
      %2050 = vrot.lane.b32.xlu0 %v1630, 127
      %v2051 = vpop.permute.xlu0 %2050
      %2052 = vrot.lane.b32.xlu0 %v1641, 127
      %v2053 = vpop.permute.xlu0 %2052
      %v2054 = vsel %vm792, %v2051, %v2053
      %v2055 = vsel %vm792, %v2049, %v2051
      %v2056 = vsel %vm792, %v2047, %v2049
      %v2057 = vsel %vm792, %v2045, %v2047
      %v2058 = vsel %vm792, %v2043, %v2045
      %v2059 = vsel %vm792, %v2041, %v2043
      %v2060 = vsel %vm792, %v2039, %v2041
      %v2061 = vsel %vm792, %v2053, %v2039
      %v2063 = vlaneseq
      %v2064 = vshrl.u32 %v2063, 7
      %v2065 = vsub.s32 0, %v2064
      %v2066 = vrot.slane %v2037, %v2065
      %v2067 = vlaneseq
      %v2068 = vshrl.u32 %v2067, 7
      %v2069 = vsub.s32 1, %v2068
      %v2070 = vrot.slane %v2037, %v2069
      %v2071 = vlaneseq
      %v2072 = vshrl.u32 %v2071, 7
      %v2073 = vsub.s32 2, %v2072
      %v2074 = vrot.slane %v2037, %v2073
      %v2075 = vlaneseq
      %v2076 = vshrl.u32 %v2075, 7
      %v2077 = vsub.s32 3, %v2076
      %v2078 = vrot.slane %v2037, %v2077
      %v2079 = vlaneseq
      %v2080 = vshrl.u32 %v2079, 7
      %v2081 = vsub.s32 4, %v2080
      %v2082 = vrot.slane %v2037, %v2081
      %v2083 = vlaneseq
      %v2084 = vshrl.u32 %v2083, 7
      %v2085 = vsub.s32 5, %v2084
      %v2086 = vrot.slane %v2037, %v2085
      %v2087 = vlaneseq
      %v2088 = vshrl.u32 %v2087, 7
      %v2089 = vsub.s32 6, %v2088
      %v2090 = vrot.slane %v2037, %v2089
      %v2091 = vlaneseq
      %v2092 = vshrl.u32 %v2091, 7
      %v2093 = vsub.s32 7, %v2092
      %v2094 = vrot.slane %v2037, %v2093
      %v2103 = vmul.f32 %v2066, %v2060
      %v2104 = vmul.f32 %v2070, %v2059
      %v2105 = vmul.f32 %v2074, %v2058
      %v2106 = vmul.f32 %v2078, %v2057
      %v2107 = vmul.f32 %v2082, %v2056
      %v2108 = vmul.f32 %v2086, %v2055
      %v2109 = vmul.f32 %v2090, %v2054
      %v2110 = vmul.f32 %v2094, %v2061
      %v2119 = vrot.slane %v2103, 4
      %v2120 = vrot.slane %v2104, 4
      %v2121 = vrot.slane %v2105, 4
      %v2122 = vrot.slane %v2106, 4
      %v2123 = vrot.slane %v2107, 4
      %v2124 = vrot.slane %v2108, 4
      %v2125 = vrot.slane %v2109, 4
      %v2126 = vrot.slane %v2110, 4
      %2135 = vst [vmem:[#allocation2 + $0x80] sm:$0xf0] %v2119
      %2136 = vst [vmem:[#allocation2 + $0x88] sm:$0xf0] %v2120
      %2137 = vst [vmem:[#allocation2 + $0x90] sm:$0xf0] %v2121
      %2138 = vst [vmem:[#allocation2 + $0x98] sm:$0xf0] %v2122
      %2139 = vst [vmem:[#allocation2 + $0xa0] sm:$0xf0] %v2123
      %2140 = vst [vmem:[#allocation2 + $0xa8] sm:$0xf0] %v2124
      %2141 = vst [vmem:[#allocation2 + $0xb0] sm:$0xf0] %v2125
      %2142 = vst [vmem:[#allocation2 + $0xb8] sm:$0xf0] %v2126
      %v2143 = vld [vmem:[%s858] ss:$8 sm:$0xf]
      %v2144 = vld [vmem:[%s858] ss:$8 sm:$0xf0]
      %v2145 = vor.u32 %v2143, %v2144
      %2146 = vrot.lane.b32.xlu0 %v1627, 97
      %v2147 = vpop.permute.xlu0 %2146
      %2148 = vrot.lane.b32.xlu0 %v1638, 97
      %v2149 = vpop.permute.xlu0 %2148
      %2150 = vrot.lane.b32.xlu0 %v1628, 97
      %v2151 = vpop.permute.xlu0 %2150
      %2152 = vrot.lane.b32.xlu0 %v1639, 97
      %v2153 = vpop.permute.xlu0 %2152
      %2154 = vrot.lane.b32.xlu0 %v1629, 97
      %v2155 = vpop.permute.xlu0 %2154
      %2156 = vrot.lane.b32.xlu0 %v1640, 97
      %v2157 = vpop.permute.xlu0 %2156
      %2158 = vrot.lane.b32.xlu0 %v1630, 97
      %v2159 = vpop.permute.xlu0 %2158
      %2160 = vrot.lane.b32.xlu0 %v1641, 97
      %v2161 = vpop.permute.xlu0 %2160
      %v2162 = vsel %vm878, %v2159, %v2161
      %v2163 = vsel %vm878, %v2157, %v2159
      %v2164 = vsel %vm878, %v2155, %v2157
      %v2165 = vsel %vm878, %v2153, %v2155
      %v2166 = vsel %vm878, %v2151, %v2153
      %v2167 = vsel %vm878, %v2149, %v2151
      %v2168 = vsel %vm878, %v2147, %v2149
      %v2169 = vsel %vm878, %v2161, %v2147
      %v2171 = vlaneseq
      %v2172 = vshrl.u32 %v2171, 7
      %v2173 = vsub.s32 0, %v2172
      %v2174 = vrot.slane %v2145, %v2173
      %v2175 = vlaneseq
      %v2176 = vshrl.u32 %v2175, 7
      %v2177 = vsub.s32 1, %v2176
      %v2178 = vrot.slane %v2145, %v2177
      %v2179 = vlaneseq
      %v2180 = vshrl.u32 %v2179, 7
      %v2181 = vsub.s32 2, %v2180
      %v2182 = vrot.slane %v2145, %v2181
      %v2183 = vlaneseq
      %v2184 = vshrl.u32 %v2183, 7
      %v2185 = vsub.s32 3, %v2184
      %v2186 = vrot.slane %v2145, %v2185
      %v2187 = vlaneseq
      %v2188 = vshrl.u32 %v2187, 7
      %v2189 = vsub.s32 4, %v2188
      %v2190 = vrot.slane %v2145, %v2189
      %v2191 = vlaneseq
      %v2192 = vshrl.u32 %v2191, 7
      %v2193 = vsub.s32 5, %v2192
      %v2194 = vrot.slane %v2145, %v2193
      %v2195 = vlaneseq
      %v2196 = vshrl.u32 %v2195, 7
      %v2197 = vsub.s32 6, %v2196
      %v2198 = vrot.slane %v2145, %v2197
      %v2199 = vlaneseq
      %v2200 = vshrl.u32 %v2199, 7
      %v2201 = vsub.s32 7, %v2200
      %v2202 = vrot.slane %v2145, %v2201
      %v2211 = vmul.f32 %v2174, %v2168
      %v2212 = vmul.f32 %v2178, %v2167
      %v2213 = vmul.f32 %v2182, %v2166
      %v2214 = vmul.f32 %v2186, %v2165
      %v2215 = vmul.f32 %v2190, %v2164
      %v2216 = vmul.f32 %v2194, %v2163
      %v2217 = vmul.f32 %v2198, %v2162
      %v2218 = vmul.f32 %v2202, %v2169
      %2219 = vst [vmem:[#allocation2 + $0xc0] sm:$0xf] %v2211
      %2220 = vst [vmem:[#allocation2 + $0xc8] sm:$0xf] %v2212
      %2221 = vst [vmem:[#allocation2 + $0xd0] sm:$0xf] %v2213
      %2222 = vst [vmem:[#allocation2 + $0xd8] sm:$0xf] %v2214
      %2223 = vst [vmem:[#allocation2 + $0xe0] sm:$0xf] %v2215
      %2224 = vst [vmem:[#allocation2 + $0xe8] sm:$0xf] %v2216
      %2225 = vst [vmem:[#allocation2 + $0xf0] sm:$0xf] %v2217
      %2226 = vst [vmem:[#allocation2 + $0xf8] sm:$0xf] %v2218
      %v2227 = vld [vmem:[%s944] ss:$8 sm:$0xf]
      %v2228 = vld [vmem:[%s944] ss:$8 sm:$0xf0]
      %v2229 = vor.u32 %v2227, %v2228
      %2230 = vrot.lane.b32.xlu0 %v1627, 96
      %v2231 = vpop.permute.xlu0 %2230
      %2232 = vrot.lane.b32.xlu0 %v1638, 96
      %v2233 = vpop.permute.xlu0 %2232
      %2234 = vrot.lane.b32.xlu0 %v1628, 96
      %v2235 = vpop.permute.xlu0 %2234
      %2236 = vrot.lane.b32.xlu0 %v1639, 96
      %v2237 = vpop.permute.xlu0 %2236
      %2238 = vrot.lane.b32.xlu0 %v1629, 96
      %v2239 = vpop.permute.xlu0 %2238
      %2240 = vrot.lane.b32.xlu0 %v1640, 96
      %v2241 = vpop.permute.xlu0 %2240
      %2242 = vrot.lane.b32.xlu0 %v1630, 96
      %v2243 = vpop.permute.xlu0 %2242
      %2244 = vrot.lane.b32.xlu0 %v1641, 96
      %v2245 = vpop.permute.xlu0 %2244
      %v2246 = vsel %vm964, %v2243, %v2245
      %v2247 = vsel %vm964, %v2241, %v2243
      %v2248 = vsel %vm964, %v2239, %v2241
      %v2249 = vsel %vm964, %v2237, %v2239
      %v2250 = vsel %vm964, %v2235, %v2237
      %v2251 = vsel %vm964, %v2233, %v2235
      %v2252 = vsel %vm964, %v2231, %v2233
      %v2253 = vsel %vm964, %v2245, %v2231
      %v2255 = vlaneseq
      %v2256 = vshrl.u32 %v2255, 7
      %v2257 = vsub.s32 0, %v2256
      %v2258 = vrot.slane %v2229, %v2257
      %v2259 = vlaneseq
      %v2260 = vshrl.u32 %v2259, 7
      %v2261 = vsub.s32 1, %v2260
      %v2262 = vrot.slane %v2229, %v2261
      %v2263 = vlaneseq
      %v2264 = vshrl.u32 %v2263, 7
      %v2265 = vsub.s32 2, %v2264
      %v2266 = vrot.slane %v2229, %v2265
      %v2267 = vlaneseq
      %v2268 = vshrl.u32 %v2267, 7
      %v2269 = vsub.s32 3, %v2268
      %v2270 = vrot.slane %v2229, %v2269
      %v2271 = vlaneseq
      %v2272 = vshrl.u32 %v2271, 7
      %v2273 = vsub.s32 4, %v2272
      %v2274 = vrot.slane %v2229, %v2273
      %v2275 = vlaneseq
      %v2276 = vshrl.u32 %v2275, 7
      %v2277 = vsub.s32 5, %v2276
      %v2278 = vrot.slane %v2229, %v2277
      %v2279 = vlaneseq
      %v2280 = vshrl.u32 %v2279, 7
      %v2281 = vsub.s32 6, %v2280
      %v2282 = vrot.slane %v2229, %v2281
      %v2283 = vlaneseq
      %v2284 = vshrl.u32 %v2283, 7
      %v2285 = vsub.s32 7, %v2284
      %v2286 = vrot.slane %v2229, %v2285
      %v2295 = vmul.f32 %v2258, %v2252
      %v2296 = vmul.f32 %v2262, %v2251
      %v2297 = vmul.f32 %v2266, %v2250
      %v2298 = vmul.f32 %v2270, %v2249
      %v2299 = vmul.f32 %v2274, %v2248
      %v2300 = vmul.f32 %v2278, %v2247
      %v2301 = vmul.f32 %v2282, %v2246
      %v2302 = vmul.f32 %v2286, %v2253
      %v2311 = vrot.slane %v2295, 4
      %v2312 = vrot.slane %v2296, 4
      %v2313 = vrot.slane %v2297, 4
      %v2314 = vrot.slane %v2298, 4
      %v2315 = vrot.slane %v2299, 4
      %v2316 = vrot.slane %v2300, 4
      %v2317 = vrot.slane %v2301, 4
      %v2318 = vrot.slane %v2302, 4
      %2327 = vst [vmem:[#allocation2 + $0xc0] sm:$0xf0] %v2311
      %2328 = vst [vmem:[#allocation2 + $0xc8] sm:$0xf0] %v2312
      %2329 = vst [vmem:[#allocation2 + $0xd0] sm:$0xf0] %v2313
      %2330 = vst [vmem:[#allocation2 + $0xd8] sm:$0xf0] %v2314
      %2331 = vst [vmem:[#allocation2 + $0xe0] sm:$0xf0] %v2315
      %2332 = vst [vmem:[#allocation2 + $0xe8] sm:$0xf0] %v2316
      %2333 = vst [vmem:[#allocation2 + $0xf0] sm:$0xf0] %v2317
      %2334 = vst [vmem:[#allocation2 + $0xf8] sm:$0xf0] %v2318
      %v2335 = vld [vmem:[%s1030] ss:$8 sm:$0xf]
      %v2336 = vld [vmem:[%s1030] ss:$8 sm:$0xf0]
      %v2337 = vor.u32 %v2335, %v2336
      %2338 = vrot.lane.b32.xlu0 %v1627, 95
      %v2339 = vpop.permute.xlu0 %2338
      %2340 = vrot.lane.b32.xlu0 %v1638, 95
      %v2341 = vpop.permute.xlu0 %2340
      %2342 = vrot.lane.b32.xlu0 %v1628, 95
      %v2343 = vpop.permute.xlu0 %2342
      %2344 = vrot.lane.b32.xlu0 %v1639, 95
      %v2345 = vpop.permute.xlu0 %2344
      %2346 = vrot.lane.b32.xlu0 %v1629, 95
      %v2347 = vpop.permute.xlu0 %2346
      %2348 = vrot.lane.b32.xlu0 %v1640, 95
      %v2349 = vpop.permute.xlu0 %2348
      %2350 = vrot.lane.b32.xlu0 %v1630, 95
      %v2351 = vpop.permute.xlu0 %2350
      %2352 = vrot.lane.b32.xlu0 %v1641, 95
      %v2353 = vpop.permute.xlu0 %2352
      %v2354 = vsel %vm1050, %v2351, %v2353
      %v2355 = vsel %vm1050, %v2349, %v2351
      %v2356 = vsel %vm1050, %v2347, %v2349
      %v2357 = vsel %vm1050, %v2345, %v2347
      %v2358 = vsel %vm1050, %v2343, %v2345
      %v2359 = vsel %vm1050, %v2341, %v2343
      %v2360 = vsel %vm1050, %v2339, %v2341
      %v2361 = vsel %vm1050, %v2353, %v2339
      %v2363 = vlaneseq
      %v2364 = vshrl.u32 %v2363, 7
      %v2365 = vsub.s32 0, %v2364
      %v2366 = vrot.slane %v2337, %v2365
      %v2367 = vlaneseq
      %v2368 = vshrl.u32 %v2367, 7
      %v2369 = vsub.s32 1, %v2368
      %v2370 = vrot.slane %v2337, %v2369
      %v2371 = vlaneseq
      %v2372 = vshrl.u32 %v2371, 7
      %v2373 = vsub.s32 2, %v2372
      %v2374 = vrot.slane %v2337, %v2373
      %v2375 = vlaneseq
      %v2376 = vshrl.u32 %v2375, 7
      %v2377 = vsub.s32 3, %v2376
      %v2378 = vrot.slane %v2337, %v2377
      %v2379 = vlaneseq
      %v2380 = vshrl.u32 %v2379, 7
      %v2381 = vsub.s32 4, %v2380
      %v2382 = vrot.slane %v2337, %v2381
      %v2383 = vlaneseq
      %v2384 = vshrl.u32 %v2383, 7
      %v2385 = vsub.s32 5, %v2384
      %v2386 = vrot.slane %v2337, %v2385
      %v2387 = vlaneseq
      %v2388 = vshrl.u32 %v2387, 7
      %v2389 = vsub.s32 6, %v2388
      %v2390 = vrot.slane %v2337, %v2389
      %v2391 = vlaneseq
      %v2392 = vshrl.u32 %v2391, 7
      %v2393 = vsub.s32 7, %v2392
      %v2394 = vrot.slane %v2337, %v2393
      %v2403 = vmul.f32 %v2366, %v2360
      %v2404 = vmul.f32 %v2370, %v2359
      %v2405 = vmul.f32 %v2374, %v2358
      %v2406 = vmul.f32 %v2378, %v2357
      %v2407 = vmul.f32 %v2382, %v2356
      %v2408 = vmul.f32 %v2386, %v2355
      %v2409 = vmul.f32 %v2390, %v2354
      %v2410 = vmul.f32 %v2394, %v2361
      %2411 = vst [vmem:[#allocation2 + $0x100] sm:$0xf] %v2403
      %2412 = vst [vmem:[#allocation2 + $0x108] sm:$0xf] %v2404
      %2413 = vst [vmem:[#allocation2 + $0x110] sm:$0xf] %v2405
      %2414 = vst [vmem:[#allocation2 + $0x118] sm:$0xf] %v2406
      %2415 = vst [vmem:[#allocation2 + $0x120] sm:$0xf] %v2407
      %2416 = vst [vmem:[#allocation2 + $0x128] sm:$0xf] %v2408
      %2417 = vst [vmem:[#allocation2 + $0x130] sm:$0xf] %v2409
      %2418 = vst [vmem:[#allocation2 + $0x138] sm:$0xf] %v2410
      %v2419 = vld [vmem:[%s5] sm:$0xff]
      %v2420 = vld [vmem:[#allocation2] sm:$0xff]
      %v2421 = vld [vmem:[#allocation2 + $0x8] sm:$0xff]
      %v2422 = vld [vmem:[#allocation2 + $0x10] sm:$0xff]
      %v2423 = vld [vmem:[#allocation2 + $0x18] sm:$0xff]
      %v2424 = vld [vmem:[#allocation2 + $0x20] sm:$0xff]
      %v2425 = vld [vmem:[#allocation2 + $0x28] sm:$0xff]
      %v2426 = vld [vmem:[#allocation2 + $0x30] sm:$0xff]
      %v2427 = vld [vmem:[#allocation2 + $0x38] sm:$0xff]
      %v2428 = vld [vmem:[#allocation2 + $0x40] sm:$0xff]
      %v2429 = vld [vmem:[#allocation2 + $0x48] sm:$0xff]
      %v2430 = vld [vmem:[#allocation2 + $0x50] sm:$0xff]
      %v2431 = vld [vmem:[#allocation2 + $0x58] sm:$0xff]
      %v2432 = vld [vmem:[#allocation2 + $0x60] sm:$0xff]
      %v2433 = vld [vmem:[#allocation2 + $0x68] sm:$0xff]
      %v2434 = vld [vmem:[#allocation2 + $0x70] sm:$0xff]
      %v2435 = vld [vmem:[#allocation2 + $0x78] sm:$0xff]
      %v2436 = vld [vmem:[#allocation2 + $0x80] sm:$0xff]
      %v2437 = vld [vmem:[#allocation2 + $0x88] sm:$0xff]
      %v2438 = vld [vmem:[#allocation2 + $0x90] sm:$0xff]
      %v2439 = vld [vmem:[#allocation2 + $0x98] sm:$0xff]
      %v2440 = vld [vmem:[#allocation2 + $0xa0] sm:$0xff]
      %v2441 = vld [vmem:[#allocation2 + $0xa8] sm:$0xff]
      %v2442 = vld [vmem:[#allocation2 + $0xb0] sm:$0xff]
      %v2443 = vld [vmem:[#allocation2 + $0xb8] sm:$0xff]
      %v2444 = vld [vmem:[#allocation2 + $0xc0] sm:$0xff]
      %v2445 = vld [vmem:[#allocation2 + $0xc8] sm:$0xff]
      %v2446 = vld [vmem:[#allocation2 + $0xd0] sm:$0xff]
      %v2447 = vld [vmem:[#allocation2 + $0xd8] sm:$0xff]
      %v2448 = vld [vmem:[#allocation2 + $0xe0] sm:$0xff]
      %v2449 = vld [vmem:[#allocation2 + $0xe8] sm:$0xff]
      %v2450 = vld [vmem:[#allocation2 + $0xf0] sm:$0xff]
      %v2451 = vld [vmem:[#allocation2 + $0xf8] sm:$0xff]
      %v2452 = vld [vmem:[#allocation2 + $0x100] sm:$0xf]
      %v2453 = vld [vmem:[#allocation2 + $0x108] sm:$0xf]
      %v2454 = vld [vmem:[#allocation2 + $0x110] sm:$0xf]
      %v2455 = vld [vmem:[#allocation2 + $0x118] sm:$0xf]
      %v2456 = vld [vmem:[#allocation2 + $0x120] sm:$0xf]
      %v2457 = vld [vmem:[#allocation2 + $0x128] sm:$0xf]
      %v2458 = vld [vmem:[#allocation2 + $0x130] sm:$0xf]
      %v2459 = vld [vmem:[#allocation2 + $0x138] sm:$0xf]
      %v2460 = vld [vmem:[%s6] sm:$0xff]
      %2462 = vset.pattern.permute.xlu0 0
      %2463 = vperm.xlu0 %2462, %v2460
      %v2464 = vpop.permute.xlu0 %2463
      %vm2466 = vcmask 293888
      %v2468 = vsel %vm2466, %v2419, 0
      %vm2470 = vcmask 1043456
      %v2472 = vsel %vm2470, %v2452, 0
      %v2475 = vsel %vm2470, %v2453, 0
      %v2478 = vsel %vm2470, %v2454, 0
      %v2481 = vsel %vm2470, %v2455, 0
      %v2484 = vsel %vm2470, %v2456, 0
      %v2487 = vsel %vm2470, %v2457, 0
      %v2490 = vsel %vm2470, %v2458, 0
      %v2493 = vsel %vm2470, %v2459, 0
      %2495 = vmatprep.subr.mxu0 0.0
      %2496 = vmatpush1.msra.mxu0 0.0
      %2497 = vmatprep.subr.mxu0 0.0
      %2498 = vmatpush1.msra.mxu0 0.0
      %2499 = vmatprep.subr.mxu0 0.0
      %2500 = vmatpush1.msra.mxu0 0.0
      %2501 = vmatprep.subr.mxu0 0.0
      %2502 = vmatpush1.msra.mxu0 0.0
      %2503 = vmatprep.subr.mxu0 0.0
      %2504 = vmatpush1.msra.mxu0 0.0
      %2505 = vmatprep.subr.mxu0 0.0
      %2506 = vmatpush1.msra.mxu0 0.0
      %2507 = vmatprep.subr.mxu0 0.0
      %2508 = vmatpush1.msra.mxu0 0.0
      %2509 = vmatprep.subr.mxu0 0.0
      %2510 = vmatpush1.msra.mxu0 0.0
      %2511 = vmatprep.subr.mxu0 0.0
      %2512 = vmatpush1.msra.mxu0 0.0
      %2513 = vmatprep.subr.mxu0 0.0
      %2514 = vmatpush1.msra.mxu0 0.0
      %2515 = vmatprep.subr.mxu0 0.0
      %2516 = vmatpush1.msra.mxu0 0.0
      %2517 = vmatprep.subr.mxu0 %v2475
      %2518 = vmatpush1.msra.mxu0 %v2472
      %2519 = vmatprep.subr.mxu0 %v2445
      %2520 = vmatpush1.msra.mxu0 %v2444
      %2521 = vmatprep.subr.mxu0 %v2437
      %2522 = vmatpush1.msra.mxu0 %v2436
      %2523 = vmatprep.subr.mxu0 %v2429
      %2524 = vmatpush1.msra.mxu0 %v2428
      %2525 = vmatprep.subr.mxu0 %v2421
      %2526 = vmatpush1.msra.mxu0 %v2420
      %2527 = vmatprep.subr.mxu0 0.0
      %2528 = vmatpush2.msra.mxu0 0.0
      %2529 = vmatprep.subr.mxu0 0.0
      %2530 = vmatpush2.msra.mxu0 0.0
      %2531 = vmatprep.subr.mxu0 0.0
      %2532 = vmatpush2.msra.mxu0 0.0
      %2533 = vmatprep.subr.mxu0 0.0
      %2534 = vmatpush2.msra.mxu0 0.0
      %2535 = vmatprep.subr.mxu0 0.0
      %2536 = vmatpush2.msra.mxu0 0.0
      %2537 = vmatprep.subr.mxu0 0.0
      %2538 = vmatpush2.msra.mxu0 0.0
      %2539 = vmatprep.subr.mxu0 0.0
      %2540 = vmatpush2.msra.mxu0 0.0
      %2541 = vmatprep.subr.mxu0 0.0
      %2542 = vmatpush2.msra.mxu0 0.0
      %2543 = vmatprep.subr.mxu0 0.0
      %2544 = vmatpush2.msra.mxu0 0.0
      %2545 = vmatprep.subr.mxu0 0.0
      %2546 = vmatpush2.msra.mxu0 0.0
      %2547 = vmatprep.subr.mxu0 0.0
      %2548 = vmatpush2.msra.mxu0 0.0
      %2549 = vmatprep.subr.mxu0 0.0
      %2550 = vmatpush2.msra.mxu0 0.0
      %2551 = vmatprep.subr.mxu0 0.0
      %2552 = vmatpush2.msra.mxu0 0.0
      %2553 = vmatprep.subr.mxu0 0.0
      %2554 = vmatpush2.msra.mxu0 0.0
      %2555 = vmatprep.subr.mxu0 0.0
      %2556 = vmatpush2.msra.mxu0 0.0
      %2557 = vmatprep.subr.mxu0 0.0
      %2558 = vmatpush2.msra.mxu0 0.0
      %2559 = vmatprep.mubr.f32.mxu0 0.0
      %2560 = vmatmul.mubr.f32.gmra.mxu0 %v2468
      %v2561 = vpop.f32.mrf.mxu0
      %v2562 = vadd.f32 %v2464, %v2561
      %v2563 = vpop.f32.mrf.mxu0
      %v2564 = vadd.f32 %v2464, %v2563
      %2565 = vdwg.mxu0
      %2566 = vmatprep.subr.mxu0 0.0
      %2567 = vmatpush1.msra.mxu0 0.0
      %2568 = vmatprep.subr.mxu0 0.0
      %2569 = vmatpush1.msra.mxu0 0.0
      %2570 = vmatprep.subr.mxu0 0.0
      %2571 = vmatpush1.msra.mxu0 0.0
      %2572 = vmatprep.subr.mxu0 0.0
      %2573 = vmatpush1.msra.mxu0 0.0
      %2574 = vmatprep.subr.mxu0 0.0
      %2575 = vmatpush1.msra.mxu0 0.0
      %2576 = vmatprep.subr.mxu0 0.0
      %2577 = vmatpush1.msra.mxu0 0.0
      %2578 = vmatprep.subr.mxu0 0.0
      %2579 = vmatpush1.msra.mxu0 0.0
      %2580 = vmatprep.subr.mxu0 0.0
      %2581 = vmatpush1.msra.mxu0 0.0
      %2582 = vmatprep.subr.mxu0 0.0
      %2583 = vmatpush1.msra.mxu0 0.0
      %2584 = vmatprep.subr.mxu0 0.0
      %2585 = vmatpush1.msra.mxu0 0.0
      %2586 = vmatprep.subr.mxu0 0.0
      %2587 = vmatpush1.msra.mxu0 0.0
      %2588 = vmatprep.subr.mxu0 %v2481
      %2589 = vmatpush1.msra.mxu0 %v2478
      %2590 = vmatprep.subr.mxu0 %v2447
      %2591 = vmatpush1.msra.mxu0 %v2446
      %2592 = vmatprep.subr.mxu0 %v2439
      %2593 = vmatpush1.msra.mxu0 %v2438
      %2594 = vmatprep.subr.mxu0 %v2431
      %2595 = vmatpush1.msra.mxu0 %v2430
      %2596 = vmatprep.subr.mxu0 %v2423
      %2597 = vmatpush1.msra.mxu0 %v2422
      %2598 = vmatprep.subr.mxu0 0.0
      %2599 = vmatpush2.msra.mxu0 0.0
      %2600 = vmatprep.subr.mxu0 0.0
      %2601 = vmatpush2.msra.mxu0 0.0
      %2602 = vmatprep.subr.mxu0 0.0
      %2603 = vmatpush2.msra.mxu0 0.0
      %2604 = vmatprep.subr.mxu0 0.0
      %2605 = vmatpush2.msra.mxu0 0.0
      %2606 = vmatprep.subr.mxu0 0.0
      %2607 = vmatpush2.msra.mxu0 0.0
      %2608 = vmatprep.subr.mxu0 0.0
      %2609 = vmatpush2.msra.mxu0 0.0
      %2610 = vmatprep.subr.mxu0 0.0
      %2611 = vmatpush2.msra.mxu0 0.0
      %2612 = vmatprep.subr.mxu0 0.0
      %2613 = vmatpush2.msra.mxu0 0.0
      %2614 = vmatprep.subr.mxu0 0.0
      %2615 = vmatpush2.msra.mxu0 0.0
      %2616 = vmatprep.subr.mxu0 0.0
      %2617 = vmatpush2.msra.mxu0 0.0
      %2618 = vmatprep.subr.mxu0 0.0
      %2619 = vmatpush2.msra.mxu0 0.0
      %2620 = vmatprep.subr.mxu0 0.0
      %2621 = vmatpush2.msra.mxu0 0.0
      %2622 = vmatprep.subr.mxu0 0.0
      %2623 = vmatpush2.msra.mxu0 0.0
      %2624 = vmatprep.subr.mxu0 0.0
      %2625 = vmatpush2.msra.mxu0 0.0
      %2626 = vmatprep.subr.mxu0 0.0
      %2627 = vmatpush2.msra.mxu0 0.0
      %2628 = vmatprep.subr.mxu0 0.0
      %2629 = vmatpush2.msra.mxu0 0.0
      %2630 = vmatprep.mubr.f32.mxu0 0.0
      %2631 = vmatmul.mubr.f32.gmra.mxu0 %v2468
      %v2632 = vpop.f32.mrf.mxu0
      %v2633 = vadd.f32 %v2464, %v2632
      %v2634 = vpop.f32.mrf.mxu0
      %v2635 = vadd.f32 %v2464, %v2634
      %2636 = vdwg.mxu0
      %2637 = vmatprep.subr.mxu0 0.0
      %2638 = vmatpush1.msra.mxu0 0.0
      %2639 = vmatprep.subr.mxu0 0.0
      %2640 = vmatpush1.msra.mxu0 0.0
      %2641 = vmatprep.subr.mxu0 0.0
      %2642 = vmatpush1.msra.mxu0 0.0
      %2643 = vmatprep.subr.mxu0 0.0
      %2644 = vmatpush1.msra.mxu0 0.0
      %2645 = vmatprep.subr.mxu0 0.0
      %2646 = vmatpush1.msra.mxu0 0.0
      %2647 = vmatprep.subr.mxu0 0.0
      %2648 = vmatpush1.msra.mxu0 0.0
      %2649 = vmatprep.subr.mxu0 0.0
      %2650 = vmatpush1.msra.mxu0 0.0
      %2651 = vmatprep.subr.mxu0 0.0
      %2652 = vmatpush1.msra.mxu0 0.0
      %2653 = vmatprep.subr.mxu0 0.0
      %2654 = vmatpush1.msra.mxu0 0.0
      %2655 = vmatprep.subr.mxu0 0.0
      %2656 = vmatpush1.msra.mxu0 0.0
      %2657 = vmatprep.subr.mxu0 0.0
      %2658 = vmatpush1.msra.mxu0 0.0
      %2659 = vmatprep.subr.mxu0 %v2487
      %2660 = vmatpush1.msra.mxu0 %v2484
      %2661 = vmatprep.subr.mxu0 %v2449
      %2662 = vmatpush1.msra.mxu0 %v2448
      %2663 = vmatprep.subr.mxu0 %v2441
      %2664 = vmatpush1.msra.mxu0 %v2440
      %2665 = vmatprep.subr.mxu0 %v2433
      %2666 = vmatpush1.msra.mxu0 %v2432
      %2667 = vmatprep.subr.mxu0 %v2425
      %2668 = vmatpush1.msra.mxu0 %v2424
      %2669 = vmatprep.subr.mxu0 0.0
      %2670 = vmatpush2.msra.mxu0 0.0
      %2671 = vmatprep.subr.mxu0 0.0
      %2672 = vmatpush2.msra.mxu0 0.0
      %2673 = vmatprep.subr.mxu0 0.0
      %2674 = vmatpush2.msra.mxu0 0.0
      %2675 = vmatprep.subr.mxu0 0.0
      %2676 = vmatpush2.msra.mxu0 0.0
      %2677 = vmatprep.subr.mxu0 0.0
      %2678 = vmatpush2.msra.mxu0 0.0
      %2679 = vmatprep.subr.mxu0 0.0
      %2680 = vmatpush2.msra.mxu0 0.0
      %2681 = vmatprep.subr.mxu0 0.0
      %2682 = vmatpush2.msra.mxu0 0.0
      %2683 = vmatprep.subr.mxu0 0.0
      %2684 = vmatpush2.msra.mxu0 0.0
      %2685 = vmatprep.subr.mxu0 0.0
      %2686 = vmatpush2.msra.mxu0 0.0
      %2687 = vmatprep.subr.mxu0 0.0
      %2688 = vmatpush2.msra.mxu0 0.0
      %2689 = vmatprep.subr.mxu0 0.0
      %2690 = vmatpush2.msra.mxu0 0.0
      %2691 = vmatprep.subr.mxu0 0.0
      %2692 = vmatpush2.msra.mxu0 0.0
      %2693 = vmatprep.subr.mxu0 0.0
      %2694 = vmatpush2.msra.mxu0 0.0
      %2695 = vmatprep.subr.mxu0 0.0
      %2696 = vmatpush2.msra.mxu0 0.0
      %2697 = vmatprep.subr.mxu0 0.0
      %2698 = vmatpush2.msra.mxu0 0.0
      %2699 = vmatprep.subr.mxu0 0.0
      %2700 = vmatpush2.msra.mxu0 0.0
      %2701 = vmatprep.mubr.f32.mxu0 0.0
      %2702 = vmatmul.mubr.f32.gmra.mxu0 %v2468
      %v2703 = vpop.f32.mrf.mxu0
      %v2704 = vadd.f32 %v2464, %v2703
      %v2705 = vpop.f32.mrf.mxu0
      %v2706 = vadd.f32 %v2464, %v2705
      %2707 = vdwg.mxu0
      %2708 = vmatprep.subr.mxu0 0.0
      %2709 = vmatpush1.msra.mxu0 0.0
      %2710 = vmatprep.subr.mxu0 0.0
      %2711 = vmatpush1.msra.mxu0 0.0
      %2712 = vmatprep.subr.mxu0 0.0
      %2713 = vmatpush1.msra.mxu0 0.0
      %2714 = vmatprep.subr.mxu0 0.0
      %2715 = vmatpush1.msra.mxu0 0.0
      %2716 = vmatprep.subr.mxu0 0.0
      %2717 = vmatpush1.msra.mxu0 0.0
      %2718 = vmatprep.subr.mxu0 0.0
      %2719 = vmatpush1.msra.mxu0 0.0
      %2720 = vmatprep.subr.mxu0 0.0
      %2721 = vmatpush1.msra.mxu0 0.0
      %2722 = vmatprep.subr.mxu0 0.0
      %2723 = vmatpush1.msra.mxu0 0.0
      %2724 = vmatprep.subr.mxu0 0.0
      %2725 = vmatpush1.msra.mxu0 0.0
      %2726 = vmatprep.subr.mxu0 0.0
      %2727 = vmatpush1.msra.mxu0 0.0
      %2728 = vmatprep.subr.mxu0 0.0
      %2729 = vmatpush1.msra.mxu0 0.0
      %2730 = vmatprep.subr.mxu0 %v2493
      %2731 = vmatpush1.msra.mxu0 %v2490
      %2732 = vmatprep.subr.mxu0 %v2451
      %2733 = vmatpush1.msra.mxu0 %v2450
      %2734 = vmatprep.subr.mxu0 %v2443
      %2735 = vmatpush1.msra.mxu0 %v2442
      %2736 = vmatprep.subr.mxu0 %v2435
      %2737 = vmatpush1.msra.mxu0 %v2434
      %2738 = vmatprep.subr.mxu0 %v2427
      %2739 = vmatpush1.msra.mxu0 %v2426
      %2740 = vmatprep.subr.mxu0 0.0
      %2741 = vmatpush2.msra.mxu0 0.0
      %2742 = vmatprep.subr.mxu0 0.0
      %2743 = vmatpush2.msra.mxu0 0.0
      %2744 = vmatprep.subr.mxu0 0.0
      %2745 = vmatpush2.msra.mxu0 0.0
      %2746 = vmatprep.subr.mxu0 0.0
      %2747 = vmatpush2.msra.mxu0 0.0
      %2748 = vmatprep.subr.mxu0 0.0
      %2749 = vmatpush2.msra.mxu0 0.0
      %2750 = vmatprep.subr.mxu0 0.0
      %2751 = vmatpush2.msra.mxu0 0.0
      %2752 = vmatprep.subr.mxu0 0.0
      %2753 = vmatpush2.msra.mxu0 0.0
      %2754 = vmatprep.subr.mxu0 0.0
      %2755 = vmatpush2.msra.mxu0 0.0
      %2756 = vmatprep.subr.mxu0 0.0
      %2757 = vmatpush2.msra.mxu0 0.0
      %2758 = vmatprep.subr.mxu0 0.0
      %2759 = vmatpush2.msra.mxu0 0.0
      %2760 = vmatprep.subr.mxu0 0.0
      %2761 = vmatpush2.msra.mxu0 0.0
      %2762 = vmatprep.subr.mxu0 0.0
      %2763 = vmatpush2.msra.mxu0 0.0
      %2764 = vmatprep.subr.mxu0 0.0
      %2765 = vmatpush2.msra.mxu0 0.0
      %2766 = vmatprep.subr.mxu0 0.0
      %2767 = vmatpush2.msra.mxu0 0.0
      %2768 = vmatprep.subr.mxu0 0.0
      %2769 = vmatpush2.msra.mxu0 0.0
      %2770 = vmatprep.subr.mxu0 0.0
      %2771 = vmatpush2.msra.mxu0 0.0
      %2772 = vmatprep.mubr.f32.mxu0 0.0
      %2773 = vmatmul.mubr.f32.gmra.mxu0 %v2468
      %v2774 = vpop.f32.mrf.mxu0
      %v2775 = vadd.f32 %v2464, %v2774
      %v2776 = vpop.f32.mrf.mxu0
      %v2777 = vadd.f32 %v2464, %v2776
      %2778 = vdwg.mxu0
      %v2779 = vand.u32 2147483647, %v2562
      %v2780 = vand.u32 2147483647, %v2564
      %v2781 = vand.u32 2147483647, %v2633
      %v2782 = vand.u32 2147483647, %v2635
      %v2783 = vand.u32 2147483647, %v2704
      %v2784 = vand.u32 2147483647, %v2706
      %v2785 = vand.u32 2147483647, %v2775
      %v2786 = vand.u32 2147483647, %v2777
      %v2787 = vsub.f32 0.0, %v2779
      %v2788 = vsub.f32 0.0, %v2780
      %v2789 = vsub.f32 0.0, %v2781
      %v2790 = vsub.f32 0.0, %v2782
      %v2791 = vsub.f32 0.0, %v2783
      %v2792 = vsub.f32 0.0, %v2784
      %v2793 = vsub.f32 0.0, %v2785
      %v2794 = vsub.f32 0.0, %v2786
      %v2795 = vmul.f32 %v2787, 1.442695
      %v2796 = vpow.pop %v2795
      %v2797 = vmul.f32 %v2788, 1.442695
      %v2798 = vpow.pop %v2797
      %v2799 = vmul.f32 %v2789, 1.442695
      %v2800 = vpow.pop %v2799
      %v2801 = vmul.f32 %v2790, 1.442695
      %v2802 = vpow.pop %v2801
      %v2803 = vmul.f32 %v2791, 1.442695
      %v2804 = vpow.pop %v2803
      %v2805 = vmul.f32 %v2792, 1.442695
      %v2806 = vpow.pop %v2805
      %v2807 = vmul.f32 %v2793, 1.442695
      %v2808 = vpow.pop %v2807
      %v2809 = vmul.f32 %v2794, 1.442695
      %v2810 = vpow.pop %v2809
      %v2811 = vmul.f32 %v2796, %v2796
      %v2812 = vmul.f32 %v2798, %v2798
      %v2813 = vmul.f32 %v2800, %v2800
      %v2814 = vmul.f32 %v2802, %v2802
      %v2815 = vmul.f32 %v2804, %v2804
      %v2816 = vmul.f32 %v2806, %v2806
      %v2817 = vmul.f32 %v2808, %v2808
      %v2818 = vmul.f32 %v2810, %v2810
      %vm2819 = vcmp.ge.f32.partialorder %v2562, 0.0
      %vm2820 = vcmp.ge.f32.partialorder %v2564, 0.0
      %vm2821 = vcmp.ge.f32.partialorder %v2633, 0.0
      %vm2822 = vcmp.ge.f32.partialorder %v2635, 0.0
      %vm2823 = vcmp.ge.f32.partialorder %v2704, 0.0
      %vm2824 = vcmp.ge.f32.partialorder %v2706, 0.0
      %vm2825 = vcmp.ge.f32.partialorder %v2775, 0.0
      %vm2826 = vcmp.ge.f32.partialorder %v2777, 0.0
      %v2827 = vmul.f32 %v2796, 2.0
      %v2828 = vmul.f32 %v2798, 2.0
      %v2829 = vmul.f32 %v2800, 2.0
      %v2830 = vmul.f32 %v2802, 2.0
      %v2831 = vmul.f32 %v2804, 2.0
      %v2832 = vmul.f32 %v2806, 2.0
      %v2833 = vmul.f32 %v2808, 2.0
      %v2834 = vmul.f32 %v2810, 2.0
      %v2835 = vadd.f32 %v2827, 1.0
      %v2836 = vadd.f32 %v2828, 1.0
      %v2837 = vadd.f32 %v2829, 1.0
      %v2838 = vadd.f32 %v2830, 1.0
      %v2839 = vadd.f32 %v2831, 1.0
      %v2840 = vadd.f32 %v2832, 1.0
      %v2841 = vadd.f32 %v2833, 1.0
      %v2842 = vadd.f32 %v2834, 1.0
      %v2843 = vadd.f32 %v2811, %v2827
      %v2844 = vadd.f32 %v2812, %v2828
      %v2845 = vadd.f32 %v2813, %v2829
      %v2846 = vadd.f32 %v2814, %v2830
      %v2847 = vadd.f32 %v2815, %v2831
      %v2848 = vadd.f32 %v2816, %v2832
      %v2849 = vadd.f32 %v2817, %v2833
      %v2850 = vadd.f32 %v2818, %v2834
      %v2851 = vsel %vm2819, %v2835, %v2843
      %v2852 = vsel %vm2820, %v2836, %v2844
      %v2853 = vsel %vm2821, %v2837, %v2845
      %v2854 = vsel %vm2822, %v2838, %v2846
      %v2855 = vsel %vm2823, %v2839, %v2847
      %v2856 = vsel %vm2824, %v2840, %v2848
      %v2857 = vsel %vm2825, %v2841, %v2849
      %v2858 = vsel %vm2826, %v2842, %v2850
      %v2859 = vmul.f32 %v2811, 2.0
      %v2860 = vmul.f32 %v2812, 2.0
      %v2861 = vmul.f32 %v2813, 2.0
      %v2862 = vmul.f32 %v2814, 2.0
      %v2863 = vmul.f32 %v2815, 2.0
      %v2864 = vmul.f32 %v2816, 2.0
      %v2865 = vmul.f32 %v2817, 2.0
      %v2866 = vmul.f32 %v2818, 2.0
      %v2867 = vsel %vm2819, %v2859, 2.0
      %v2868 = vsel %vm2820, %v2860, 2.0
      %v2869 = vsel %vm2821, %v2861, 2.0
      %v2870 = vsel %vm2822, %v2862, 2.0
      %v2871 = vsel %vm2823, %v2863, 2.0
      %v2872 = vsel %vm2824, %v2864, 2.0
      %v2873 = vsel %vm2825, %v2865, 2.0
      %v2874 = vsel %vm2826, %v2866, 2.0
      %v2875 = vadd.f32 %v2851, %v2867
      %v2876 = vadd.f32 %v2852, %v2868
      %v2877 = vadd.f32 %v2853, %v2869
      %v2878 = vadd.f32 %v2854, %v2870
      %v2879 = vadd.f32 %v2855, %v2871
      %v2880 = vadd.f32 %v2856, %v2872
      %v2881 = vadd.f32 %v2857, %v2873
      %v2882 = vadd.f32 %v2858, %v2874
      %v2883 = vmul.f32 %v2562, %v2851
      %v2884 = vmul.f32 %v2564, %v2852
      %v2885 = vmul.f32 %v2633, %v2853
      %v2886 = vmul.f32 %v2635, %v2854
      %v2887 = vmul.f32 %v2704, %v2855
      %v2888 = vmul.f32 %v2706, %v2856
      %v2889 = vmul.f32 %v2775, %v2857
      %v2890 = vmul.f32 %v2777, %v2858
      %v2891 = vrcp.pop %v2875
      %v2892 = vmul.f32 %v2883, %v2891
      %v2893 = vrcp.pop %v2876
      %v2894 = vmul.f32 %v2884, %v2893
      %v2895 = vrcp.pop %v2877
      %v2896 = vmul.f32 %v2885, %v2895
      %v2897 = vrcp.pop %v2878
      %v2898 = vmul.f32 %v2886, %v2897
      %v2899 = vrcp.pop %v2879
      %v2900 = vmul.f32 %v2887, %v2899
      %v2901 = vrcp.pop %v2880
      %v2902 = vmul.f32 %v2888, %v2901
      %v2903 = vrcp.pop %v2881
      %v2904 = vmul.f32 %v2889, %v2903
      %v2905 = vrcp.pop %v2882
      %v2906 = vmul.f32 %v2890, %v2905
      %v2907 = vld [vmem:[%s2] ss:$8 sm:$0xf]
      %v2908 = vld [vmem:[%s2] ss:$8 sm:$0xf0]
      %v2909 = vor.u32 %v2907, %v2908
      %2910 = vrot.lane.b32.xlu0 %v2892, 33
      %v2911 = vpop.permute.xlu0 %2910
      %2912 = vrot.lane.b32.xlu0 %v2894, 33
      %v2913 = vpop.permute.xlu0 %2912
      %2914 = vrot.lane.b32.xlu0 %v2896, 33
      %v2915 = vpop.permute.xlu0 %2914
      %2916 = vrot.lane.b32.xlu0 %v2898, 33
      %v2917 = vpop.permute.xlu0 %2916
      %2918 = vrot.lane.b32.xlu0 %v2900, 33
      %v2919 = vpop.permute.xlu0 %2918
      %2920 = vrot.lane.b32.xlu0 %v2902, 33
      %v2921 = vpop.permute.xlu0 %2920
      %2922 = vrot.lane.b32.xlu0 %v2904, 33
      %v2923 = vpop.permute.xlu0 %2922
      %2924 = vrot.lane.b32.xlu0 %v2906, 33
      %v2925 = vpop.permute.xlu0 %2924
      %v2926 = vsel %vm440, %v2923, %v2925
      %v2927 = vsel %vm440, %v2921, %v2923
      %v2928 = vsel %vm440, %v2919, %v2921
      %v2929 = vsel %vm440, %v2917, %v2919
      %v2930 = vsel %vm440, %v2915, %v2917
      %v2931 = vsel %vm440, %v2913, %v2915
      %v2932 = vsel %vm440, %v2911, %v2913
      %v2933 = vsel %vm440, %v2925, %v2911
      %v2935 = vlaneseq
      %v2936 = vshrl.u32 %v2935, 7
      %v2937 = vsub.s32 0, %v2936
      %v2938 = vrot.slane %v2909, %v2937
      %v2939 = vlaneseq
      %v2940 = vshrl.u32 %v2939, 7
      %v2941 = vsub.s32 1, %v2940
      %v2942 = vrot.slane %v2909, %v2941
      %v2943 = vlaneseq
      %v2944 = vshrl.u32 %v2943, 7
      %v2945 = vsub.s32 2, %v2944
      %v2946 = vrot.slane %v2909, %v2945
      %v2947 = vlaneseq
      %v2948 = vshrl.u32 %v2947, 7
      %v2949 = vsub.s32 3, %v2948
      %v2950 = vrot.slane %v2909, %v2949
      %v2951 = vlaneseq
      %v2952 = vshrl.u32 %v2951, 7
      %v2953 = vsub.s32 4, %v2952
      %v2954 = vrot.slane %v2909, %v2953
      %v2955 = vlaneseq
      %v2956 = vshrl.u32 %v2955, 7
      %v2957 = vsub.s32 5, %v2956
      %v2958 = vrot.slane %v2909, %v2957
      %v2959 = vlaneseq
      %v2960 = vshrl.u32 %v2959, 7
      %v2961 = vsub.s32 6, %v2960
      %v2962 = vrot.slane %v2909, %v2961
      %v2963 = vlaneseq
      %v2964 = vshrl.u32 %v2963, 7
      %v2965 = vsub.s32 7, %v2964
      %v2966 = vrot.slane %v2909, %v2965
      %v2975 = vmul.f32 %v2938, %v2933
      %v2976 = vmul.f32 %v2942, %v2932
      %v2977 = vmul.f32 %v2946, %v2931
      %v2978 = vmul.f32 %v2950, %v2930
      %v2979 = vmul.f32 %v2954, %v2929
      %v2980 = vmul.f32 %v2958, %v2928
      %v2981 = vmul.f32 %v2962, %v2927
      %v2982 = vmul.f32 %v2966, %v2926
      %2983 = vst [vmem:[#allocation2] sm:$0xff] %v2975
      %2984 = vst [vmem:[#allocation2 + $0x8] sm:$0xff] %v2976
      %2985 = vst [vmem:[#allocation2 + $0x10] sm:$0xff] %v2977
      %2986 = vst [vmem:[#allocation2 + $0x18] sm:$0xff] %v2978
      %2987 = vst [vmem:[#allocation2 + $0x20] sm:$0xff] %v2979
      %2988 = vst [vmem:[#allocation2 + $0x28] sm:$0xff] %v2980
      %2989 = vst [vmem:[#allocation2 + $0x30] sm:$0xff] %v2981
      %2990 = vst [vmem:[#allocation2 + $0x38] sm:$0xff] %v2982
      %v2991 = vld [vmem:[%s506] ss:$8 sm:$0xf]
      %v2992 = vld [vmem:[%s506] ss:$8 sm:$0xf0]
      %v2993 = vor.u32 %v2991, %v2992
      %2994 = vrot.lane.b32.xlu0 %v2892, 32
      %v2995 = vpop.permute.xlu0 %2994
      %2996 = vrot.lane.b32.xlu0 %v2894, 32
      %v2997 = vpop.permute.xlu0 %2996
      %2998 = vrot.lane.b32.xlu0 %v2896, 32
      %v2999 = vpop.permute.xlu0 %2998
      %3000 = vrot.lane.b32.xlu0 %v2898, 32
      %v3001 = vpop.permute.xlu0 %3000
      %3002 = vrot.lane.b32.xlu0 %v2900, 32
      %v3003 = vpop.permute.xlu0 %3002
      %3004 = vrot.lane.b32.xlu0 %v2902, 32
      %v3005 = vpop.permute.xlu0 %3004
      %3006 = vrot.lane.b32.xlu0 %v2904, 32
      %v3007 = vpop.permute.xlu0 %3006
      %3008 = vrot.lane.b32.xlu0 %v2906, 32
      %v3009 = vpop.permute.xlu0 %3008
      %v3010 = vsel %vm526, %v3007, %v3009
      %v3011 = vsel %vm526, %v3005, %v3007
      %v3012 = vsel %vm526, %v3003, %v3005
      %v3013 = vsel %vm526, %v3001, %v3003
      %v3014 = vsel %vm526, %v2999, %v3001
      %v3015 = vsel %vm526, %v2997, %v2999
      %v3016 = vsel %vm526, %v2995, %v2997
      %v3017 = vsel %vm526, %v3009, %v2995
      %v3019 = vlaneseq
      %v3020 = vshrl.u32 %v3019, 7
      %v3021 = vsub.s32 0, %v3020
      %v3022 = vrot.slane %v2993, %v3021
      %v3023 = vlaneseq
      %v3024 = vshrl.u32 %v3023, 7
      %v3025 = vsub.s32 1, %v3024
      %v3026 = vrot.slane %v2993, %v3025
      %v3027 = vlaneseq
      %v3028 = vshrl.u32 %v3027, 7
      %v3029 = vsub.s32 2, %v3028
      %v3030 = vrot.slane %v2993, %v3029
      %v3031 = vlaneseq
      %v3032 = vshrl.u32 %v3031, 7
      %v3033 = vsub.s32 3, %v3032
      %v3034 = vrot.slane %v2993, %v3033
      %v3035 = vlaneseq
      %v3036 = vshrl.u32 %v3035, 7
      %v3037 = vsub.s32 4, %v3036
      %v3038 = vrot.slane %v2993, %v3037
      %v3039 = vlaneseq
      %v3040 = vshrl.u32 %v3039, 7
      %v3041 = vsub.s32 5, %v3040
      %v3042 = vrot.slane %v2993, %v3041
      %v3043 = vlaneseq
      %v3044 = vshrl.u32 %v3043, 7
      %v3045 = vsub.s32 6, %v3044
      %v3046 = vrot.slane %v2993, %v3045
      %v3047 = vlaneseq
      %v3048 = vshrl.u32 %v3047, 7
      %v3049 = vsub.s32 7, %v3048
      %v3050 = vrot.slane %v2993, %v3049
      %v3059 = vmul.f32 %v3022, %v3017
      %v3060 = vmul.f32 %v3026, %v3016
      %v3061 = vmul.f32 %v3030, %v3015
      %v3062 = vmul.f32 %v3034, %v3014
      %v3063 = vmul.f32 %v3038, %v3013
      %v3064 = vmul.f32 %v3042, %v3012
      %v3065 = vmul.f32 %v3046, %v3011
      %v3066 = vmul.f32 %v3050, %v3010
      %3067 = vst [vmem:[#allocation2 + $0x40] sm:$0xff] %v3059
      %3068 = vst [vmem:[#allocation2 + $0x48] sm:$0xff] %v3060
      %3069 = vst [vmem:[#allocation2 + $0x50] sm:$0xff] %v3061
      %3070 = vst [vmem:[#allocation2 + $0x58] sm:$0xff] %v3062
      %3071 = vst [vmem:[#allocation2 + $0x60] sm:$0xff] %v3063
      %3072 = vst [vmem:[#allocation2 + $0x68] sm:$0xff] %v3064
      %3073 = vst [vmem:[#allocation2 + $0x70] sm:$0xff] %v3065
      %3074 = vst [vmem:[#allocation2 + $0x78] sm:$0xff] %v3066
      %v3075 = vld [vmem:[%s592] ss:$8 sm:$0xf]
      %v3076 = vld [vmem:[%s592] ss:$8 sm:$0xf0]
      %v3077 = vor.u32 %v3075, %v3076
      %3078 = vrot.lane.b32.xlu0 %v2892, 31
      %v3079 = vpop.permute.xlu0 %3078
      %3080 = vrot.lane.b32.xlu0 %v2894, 31
      %v3081 = vpop.permute.xlu0 %3080
      %3082 = vrot.lane.b32.xlu0 %v2896, 31
      %v3083 = vpop.permute.xlu0 %3082
      %3084 = vrot.lane.b32.xlu0 %v2898, 31
      %v3085 = vpop.permute.xlu0 %3084
      %3086 = vrot.lane.b32.xlu0 %v2900, 31
      %v3087 = vpop.permute.xlu0 %3086
      %3088 = vrot.lane.b32.xlu0 %v2902, 31
      %v3089 = vpop.permute.xlu0 %3088
      %3090 = vrot.lane.b32.xlu0 %v2904, 31
      %v3091 = vpop.permute.xlu0 %3090
      %3092 = vrot.lane.b32.xlu0 %v2906, 31
      %v3093 = vpop.permute.xlu0 %3092
      %v3094 = vsel %vm612, %v3091, %v3093
      %v3095 = vsel %vm612, %v3089, %v3091
      %v3096 = vsel %vm612, %v3087, %v3089
      %v3097 = vsel %vm612, %v3085, %v3087
      %v3098 = vsel %vm612, %v3083, %v3085
      %v3099 = vsel %vm612, %v3081, %v3083
      %v3100 = vsel %vm612, %v3079, %v3081
      %v3101 = vsel %vm612, %v3093, %v3079
      %v3103 = vlaneseq
      %v3104 = vshrl.u32 %v3103, 7
      %v3105 = vsub.s32 0, %v3104
      %v3106 = vrot.slane %v3077, %v3105
      %v3107 = vlaneseq
      %v3108 = vshrl.u32 %v3107, 7
      %v3109 = vsub.s32 1, %v3108
      %v3110 = vrot.slane %v3077, %v3109
      %v3111 = vlaneseq
      %v3112 = vshrl.u32 %v3111, 7
      %v3113 = vsub.s32 2, %v3112
      %v3114 = vrot.slane %v3077, %v3113
      %v3115 = vlaneseq
      %v3116 = vshrl.u32 %v3115, 7
      %v3117 = vsub.s32 3, %v3116
      %v3118 = vrot.slane %v3077, %v3117
      %v3119 = vlaneseq
      %v3120 = vshrl.u32 %v3119, 7
      %v3121 = vsub.s32 4, %v3120
      %v3122 = vrot.slane %v3077, %v3121
      %v3123 = vlaneseq
      %v3124 = vshrl.u32 %v3123, 7
      %v3125 = vsub.s32 5, %v3124
      %v3126 = vrot.slane %v3077, %v3125
      %v3127 = vlaneseq
      %v3128 = vshrl.u32 %v3127, 7
      %v3129 = vsub.s32 6, %v3128
      %v3130 = vrot.slane %v3077, %v3129
      %v3131 = vlaneseq
      %v3132 = vshrl.u32 %v3131, 7
      %v3133 = vsub.s32 7, %v3132
      %v3134 = vrot.slane %v3077, %v3133
      %v3143 = vmul.f32 %v3106, %v3101
      %v3144 = vmul.f32 %v3110, %v3100
      %v3145 = vmul.f32 %v3114, %v3099
      %v3146 = vmul.f32 %v3118, %v3098
      %v3147 = vmul.f32 %v3122, %v3097
      %v3148 = vmul.f32 %v3126, %v3096
      %v3149 = vmul.f32 %v3130, %v3095
      %v3150 = vmul.f32 %v3134, %v3094
      %3151 = vst [vmem:[#allocation2 + $0x80] sm:$0xff] %v3143
      %3152 = vst [vmem:[#allocation2 + $0x88] sm:$0xff] %v3144
      %3153 = vst [vmem:[#allocation2 + $0x90] sm:$0xff] %v3145
      %3154 = vst [vmem:[#allocation2 + $0x98] sm:$0xff] %v3146
      %3155 = vst [vmem:[#allocation2 + $0xa0] sm:$0xff] %v3147
      %3156 = vst [vmem:[#allocation2 + $0xa8] sm:$0xff] %v3148
      %3157 = vst [vmem:[#allocation2 + $0xb0] sm:$0xff] %v3149
      %3158 = vst [vmem:[#allocation2 + $0xb8] sm:$0xff] %v3150
      %v3159 = vld [vmem:[%s678] ss:$8 sm:$0xf]
      %v3160 = vld [vmem:[%s678] ss:$8 sm:$0xf0]
      %v3161 = vor.u32 %v3159, %v3160
      %3162 = vrot.lane.b32.xlu0 %v2892, 1
      %v3163 = vpop.permute.xlu0 %3162
      %3164 = vrot.lane.b32.xlu0 %v2894, 1
      %v3165 = vpop.permute.xlu0 %3164
      %3166 = vrot.lane.b32.xlu0 %v2896, 1
      %v3167 = vpop.permute.xlu0 %3166
      %3168 = vrot.lane.b32.xlu0 %v2898, 1
      %v3169 = vpop.permute.xlu0 %3168
      %3170 = vrot.lane.b32.xlu0 %v2900, 1
      %v3171 = vpop.permute.xlu0 %3170
      %3172 = vrot.lane.b32.xlu0 %v2902, 1
      %v3173 = vpop.permute.xlu0 %3172
      %3174 = vrot.lane.b32.xlu0 %v2904, 1
      %v3175 = vpop.permute.xlu0 %3174
      %3176 = vrot.lane.b32.xlu0 %v2906, 1
      %v3177 = vpop.permute.xlu0 %3176
      %v3178 = vsel %vm698, %v3175, %v3177
      %v3179 = vsel %vm698, %v3173, %v3175
      %v3180 = vsel %vm698, %v3171, %v3173
      %v3181 = vsel %vm698, %v3169, %v3171
      %v3182 = vsel %vm698, %v3167, %v3169
      %v3183 = vsel %vm698, %v3165, %v3167
      %v3184 = vsel %vm698, %v3163, %v3165
      %v3185 = vsel %vm698, %v3177, %v3163
      %v3187 = vlaneseq
      %v3188 = vshrl.u32 %v3187, 7
      %v3189 = vsub.s32 0, %v3188
      %v3190 = vrot.slane %v3161, %v3189
      %v3191 = vlaneseq
      %v3192 = vshrl.u32 %v3191, 7
      %v3193 = vsub.s32 1, %v3192
      %v3194 = vrot.slane %v3161, %v3193
      %v3195 = vlaneseq
      %v3196 = vshrl.u32 %v3195, 7
      %v3197 = vsub.s32 2, %v3196
      %v3198 = vrot.slane %v3161, %v3197
      %v3199 = vlaneseq
      %v3200 = vshrl.u32 %v3199, 7
      %v3201 = vsub.s32 3, %v3200
      %v3202 = vrot.slane %v3161, %v3201
      %v3203 = vlaneseq
      %v3204 = vshrl.u32 %v3203, 7
      %v3205 = vsub.s32 4, %v3204
      %v3206 = vrot.slane %v3161, %v3205
      %v3207 = vlaneseq
      %v3208 = vshrl.u32 %v3207, 7
      %v3209 = vsub.s32 5, %v3208
      %v3210 = vrot.slane %v3161, %v3209
      %v3211 = vlaneseq
      %v3212 = vshrl.u32 %v3211, 7
      %v3213 = vsub.s32 6, %v3212
      %v3214 = vrot.slane %v3161, %v3213
      %v3215 = vlaneseq
      %v3216 = vshrl.u32 %v3215, 7
      %v3217 = vsub.s32 7, %v3216
      %v3218 = vrot.slane %v3161, %v3217
      %v3227 = vmul.f32 %v3190, %v3185
      %v3228 = vmul.f32 %v3194, %v3184
      %v3229 = vmul.f32 %v3198, %v3183
      %v3230 = vmul.f32 %v3202, %v3182
      %v3231 = vmul.f32 %v3206, %v3181
      %v3232 = vmul.f32 %v3210, %v3180
      %v3233 = vmul.f32 %v3214, %v3179
      %v3234 = vmul.f32 %v3218, %v3178
      %3235 = vst [vmem:[#allocation2 + $0xc0] sm:$0xff] %v3227
      %3236 = vst [vmem:[#allocation2 + $0xc8] sm:$0xff] %v3228
      %3237 = vst [vmem:[#allocation2 + $0xd0] sm:$0xff] %v3229
      %3238 = vst [vmem:[#allocation2 + $0xd8] sm:$0xff] %v3230
      %3239 = vst [vmem:[#allocation2 + $0xe0] sm:$0xff] %v3231
      %3240 = vst [vmem:[#allocation2 + $0xe8] sm:$0xff] %v3232
      %3241 = vst [vmem:[#allocation2 + $0xf0] sm:$0xff] %v3233
      %3242 = vst [vmem:[#allocation2 + $0xf8] sm:$0xff] %v3234
      %3243 = vst [vmem:[#allocation2 + $0x100] sm:$0xff] %v2892
      %3244 = vst [vmem:[#allocation2 + $0x108] sm:$0xff] %v2894
      %3245 = vst [vmem:[#allocation2 + $0x110] sm:$0xff] %v2896
      %3246 = vst [vmem:[#allocation2 + $0x118] sm:$0xff] %v2898
      %3247 = vst [vmem:[#allocation2 + $0x120] sm:$0xff] %v2900
      %3248 = vst [vmem:[#allocation2 + $0x128] sm:$0xff] %v2902
      %3249 = vst [vmem:[#allocation2 + $0x130] sm:$0xff] %v2904
      %3250 = vst [vmem:[#allocation2 + $0x138] sm:$0xff] %v2906
      %v3251 = vld [vmem:[%s772] ss:$8 sm:$0xf]
      %v3252 = vld [vmem:[%s772] ss:$8 sm:$0xf0]
      %v3253 = vor.u32 %v3251, %v3252
      %3254 = vrot.lane.b32.xlu0 %v2892, 127
      %v3255 = vpop.permute.xlu0 %3254
      %3256 = vrot.lane.b32.xlu0 %v2894, 127
      %v3257 = vpop.permute.xlu0 %3256
      %3258 = vrot.lane.b32.xlu0 %v2896, 127
      %v3259 = vpop.permute.xlu0 %3258
      %3260 = vrot.lane.b32.xlu0 %v2898, 127
      %v3261 = vpop.permute.xlu0 %3260
      %3262 = vrot.lane.b32.xlu0 %v2900, 127
      %v3263 = vpop.permute.xlu0 %3262
      %3264 = vrot.lane.b32.xlu0 %v2902, 127
      %v3265 = vpop.permute.xlu0 %3264
      %3266 = vrot.lane.b32.xlu0 %v2904, 127
      %v3267 = vpop.permute.xlu0 %3266
      %3268 = vrot.lane.b32.xlu0 %v2906, 127
      %v3269 = vpop.permute.xlu0 %3268
      %v3270 = vsel %vm792, %v3267, %v3269
      %v3271 = vsel %vm792, %v3265, %v3267
      %v3272 = vsel %vm792, %v3263, %v3265
      %v3273 = vsel %vm792, %v3261, %v3263
      %v3274 = vsel %vm792, %v3259, %v3261
      %v3275 = vsel %vm792, %v3257, %v3259
      %v3276 = vsel %vm792, %v3255, %v3257
      %v3277 = vsel %vm792, %v3269, %v3255
      %v3279 = vlaneseq
      %v3280 = vshrl.u32 %v3279, 7
      %v3281 = vsub.s32 0, %v3280
      %v3282 = vrot.slane %v3253, %v3281
      %v3283 = vlaneseq
      %v3284 = vshrl.u32 %v3283, 7
      %v3285 = vsub.s32 1, %v3284
      %v3286 = vrot.slane %v3253, %v3285
      %v3287 = vlaneseq
      %v3288 = vshrl.u32 %v3287, 7
      %v3289 = vsub.s32 2, %v3288
      %v3290 = vrot.slane %v3253, %v3289
      %v3291 = vlaneseq
      %v3292 = vshrl.u32 %v3291, 7
      %v3293 = vsub.s32 3, %v3292
      %v3294 = vrot.slane %v3253, %v3293
      %v3295 = vlaneseq
      %v3296 = vshrl.u32 %v3295, 7
      %v3297 = vsub.s32 4, %v3296
      %v3298 = vrot.slane %v3253, %v3297
      %v3299 = vlaneseq
      %v3300 = vshrl.u32 %v3299, 7
      %v3301 = vsub.s32 5, %v3300
      %v3302 = vrot.slane %v3253, %v3301
      %v3303 = vlaneseq
      %v3304 = vshrl.u32 %v3303, 7
      %v3305 = vsub.s32 6, %v3304
      %v3306 = vrot.slane %v3253, %v3305
      %v3307 = vlaneseq
      %v3308 = vshrl.u32 %v3307, 7
      %v3309 = vsub.s32 7, %v3308
      %v3310 = vrot.slane %v3253, %v3309
      %v3319 = vmul.f32 %v3282, %v3276
      %v3320 = vmul.f32 %v3286, %v3275
      %v3321 = vmul.f32 %v3290, %v3274
      %v3322 = vmul.f32 %v3294, %v3273
      %v3323 = vmul.f32 %v3298, %v3272
      %v3324 = vmul.f32 %v3302, %v3271
      %v3325 = vmul.f32 %v3306, %v3270
      %v3326 = vmul.f32 %v3310, %v3277
      %3327 = vst [vmem:[#allocation2 + $0x140] sm:$0xff] %v3319
      %3328 = vst [vmem:[#allocation2 + $0x148] sm:$0xff] %v3320
      %3329 = vst [vmem:[#allocation2 + $0x150] sm:$0xff] %v3321
      %3330 = vst [vmem:[#allocation2 + $0x158] sm:$0xff] %v3322
      %3331 = vst [vmem:[#allocation2 + $0x160] sm:$0xff] %v3323
      %3332 = vst [vmem:[#allocation2 + $0x168] sm:$0xff] %v3324
      %3333 = vst [vmem:[#allocation2 + $0x170] sm:$0xff] %v3325
      %3334 = vst [vmem:[#allocation2 + $0x178] sm:$0xff] %v3326
      %v3335 = vld [vmem:[%s858] ss:$8 sm:$0xf]
      %v3336 = vld [vmem:[%s858] ss:$8 sm:$0xf0]
      %v3337 = vor.u32 %v3335, %v3336
      %3338 = vrot.lane.b32.xlu0 %v2892, 97
      %v3339 = vpop.permute.xlu0 %3338
      %3340 = vrot.lane.b32.xlu0 %v2894, 97
      %v3341 = vpop.permute.xlu0 %3340
      %3342 = vrot.lane.b32.xlu0 %v2896, 97
      %v3343 = vpop.permute.xlu0 %3342
      %3344 = vrot.lane.b32.xlu0 %v2898, 97
      %v3345 = vpop.permute.xlu0 %3344
      %3346 = vrot.lane.b32.xlu0 %v2900, 97
      %v3347 = vpop.permute.xlu0 %3346
      %3348 = vrot.lane.b32.xlu0 %v2902, 97
      %v3349 = vpop.permute.xlu0 %3348
      %3350 = vrot.lane.b32.xlu0 %v2904, 97
      %v3351 = vpop.permute.xlu0 %3350
      %3352 = vrot.lane.b32.xlu0 %v2906, 97
      %v3353 = vpop.permute.xlu0 %3352
      %v3354 = vsel %vm878, %v3351, %v3353
      %v3355 = vsel %vm878, %v3349, %v3351
      %v3356 = vsel %vm878, %v3347, %v3349
      %v3357 = vsel %vm878, %v3345, %v3347
      %v3358 = vsel %vm878, %v3343, %v3345
      %v3359 = vsel %vm878, %v3341, %v3343
      %v3360 = vsel %vm878, %v3339, %v3341
      %v3361 = vsel %vm878, %v3353, %v3339
      %v3363 = vlaneseq
      %v3364 = vshrl.u32 %v3363, 7
      %v3365 = vsub.s32 0, %v3364
      %v3366 = vrot.slane %v3337, %v3365
      %v3367 = vlaneseq
      %v3368 = vshrl.u32 %v3367, 7
      %v3369 = vsub.s32 1, %v3368
      %v3370 = vrot.slane %v3337, %v3369
      %v3371 = vlaneseq
      %v3372 = vshrl.u32 %v3371, 7
      %v3373 = vsub.s32 2, %v3372
      %v3374 = vrot.slane %v3337, %v3373
      %v3375 = vlaneseq
      %v3376 = vshrl.u32 %v3375, 7
      %v3377 = vsub.s32 3, %v3376
      %v3378 = vrot.slane %v3337, %v3377
      %v3379 = vlaneseq
      %v3380 = vshrl.u32 %v3379, 7
      %v3381 = vsub.s32 4, %v3380
      %v3382 = vrot.slane %v3337, %v3381
      %v3383 = vlaneseq
      %v3384 = vshrl.u32 %v3383, 7
      %v3385 = vsub.s32 5, %v3384
      %v3386 = vrot.slane %v3337, %v3385
      %v3387 = vlaneseq
      %v3388 = vshrl.u32 %v3387, 7
      %v3389 = vsub.s32 6, %v3388
      %v3390 = vrot.slane %v3337, %v3389
      %v3391 = vlaneseq
      %v3392 = vshrl.u32 %v3391, 7
      %v3393 = vsub.s32 7, %v3392
      %v3394 = vrot.slane %v3337, %v3393
      %v3403 = vmul.f32 %v3366, %v3360
      %v3404 = vmul.f32 %v3370, %v3359
      %v3405 = vmul.f32 %v3374, %v3358
      %v3406 = vmul.f32 %v3378, %v3357
      %v3407 = vmul.f32 %v3382, %v3356
      %v3408 = vmul.f32 %v3386, %v3355
      %v3409 = vmul.f32 %v3390, %v3354
      %v3410 = vmul.f32 %v3394, %v3361
      %3411 = vst [vmem:[#allocation2 + $0x180] sm:$0xff] %v3403
      %3412 = vst [vmem:[#allocation2 + $0x188] sm:$0xff] %v3404
      %3413 = vst [vmem:[#allocation2 + $0x190] sm:$0xff] %v3405
      %3414 = vst [vmem:[#allocation2 + $0x198] sm:$0xff] %v3406
      %3415 = vst [vmem:[#allocation2 + $0x1a0] sm:$0xff] %v3407
      %3416 = vst [vmem:[#allocation2 + $0x1a8] sm:$0xff] %v3408
      %3417 = vst [vmem:[#allocation2 + $0x1b0] sm:$0xff] %v3409
      %3418 = vst [vmem:[#allocation2 + $0x1b8] sm:$0xff] %v3410
      %v3419 = vld [vmem:[%s944] ss:$8 sm:$0xf]
      %v3420 = vld [vmem:[%s944] ss:$8 sm:$0xf0]
      %v3421 = vor.u32 %v3419, %v3420
      %3422 = vrot.lane.b32.xlu0 %v2892, 96
      %v3423 = vpop.permute.xlu0 %3422
      %3424 = vrot.lane.b32.xlu0 %v2894, 96
      %v3425 = vpop.permute.xlu0 %3424
      %3426 = vrot.lane.b32.xlu0 %v2896, 96
      %v3427 = vpop.permute.xlu0 %3426
      %3428 = vrot.lane.b32.xlu0 %v2898, 96
      %v3429 = vpop.permute.xlu0 %3428
      %3430 = vrot.lane.b32.xlu0 %v2900, 96
      %v3431 = vpop.permute.xlu0 %3430
      %3432 = vrot.lane.b32.xlu0 %v2902, 96
      %v3433 = vpop.permute.xlu0 %3432
      %3434 = vrot.lane.b32.xlu0 %v2904, 96
      %v3435 = vpop.permute.xlu0 %3434
      %3436 = vrot.lane.b32.xlu0 %v2906, 96
      %v3437 = vpop.permute.xlu0 %3436
      %v3438 = vsel %vm964, %v3435, %v3437
      %v3439 = vsel %vm964, %v3433, %v3435
      %v3440 = vsel %vm964, %v3431, %v3433
      %v3441 = vsel %vm964, %v3429, %v3431
      %v3442 = vsel %vm964, %v3427, %v3429
      %v3443 = vsel %vm964, %v3425, %v3427
      %v3444 = vsel %vm964, %v3423, %v3425
      %v3445 = vsel %vm964, %v3437, %v3423
      %v3447 = vlaneseq
      %v3448 = vshrl.u32 %v3447, 7
      %v3449 = vsub.s32 0, %v3448
      %v3450 = vrot.slane %v3421, %v3449
      %v3451 = vlaneseq
      %v3452 = vshrl.u32 %v3451, 7
      %v3453 = vsub.s32 1, %v3452
      %v3454 = vrot.slane %v3421, %v3453
      %v3455 = vlaneseq
      %v3456 = vshrl.u32 %v3455, 7
      %v3457 = vsub.s32 2, %v3456
      %v3458 = vrot.slane %v3421, %v3457
      %v3459 = vlaneseq
      %v3460 = vshrl.u32 %v3459, 7
      %v3461 = vsub.s32 3, %v3460
      %v3462 = vrot.slane %v3421, %v3461
      %v3463 = vlaneseq
      %v3464 = vshrl.u32 %v3463, 7
      %v3465 = vsub.s32 4, %v3464
      %v3466 = vrot.slane %v3421, %v3465
      %v3467 = vlaneseq
      %v3468 = vshrl.u32 %v3467, 7
      %v3469 = vsub.s32 5, %v3468
      %v3470 = vrot.slane %v3421, %v3469
      %v3471 = vlaneseq
      %v3472 = vshrl.u32 %v3471, 7
      %v3473 = vsub.s32 6, %v3472
      %v3474 = vrot.slane %v3421, %v3473
      %v3475 = vlaneseq
      %v3476 = vshrl.u32 %v3475, 7
      %v3477 = vsub.s32 7, %v3476
      %v3478 = vrot.slane %v3421, %v3477
      %v3487 = vmul.f32 %v3450, %v3444
      %v3488 = vmul.f32 %v3454, %v3443
      %v3489 = vmul.f32 %v3458, %v3442
      %v3490 = vmul.f32 %v3462, %v3441
      %v3491 = vmul.f32 %v3466, %v3440
      %v3492 = vmul.f32 %v3470, %v3439
      %v3493 = vmul.f32 %v3474, %v3438
      %v3494 = vmul.f32 %v3478, %v3445
      %3495 = vst [vmem:[#allocation2 + $0x1c0] sm:$0xff] %v3487
      %3496 = vst [vmem:[#allocation2 + $0x1c8] sm:$0xff] %v3488
      %3497 = vst [vmem:[#allocation2 + $0x1d0] sm:$0xff] %v3489
      %3498 = vst [vmem:[#allocation2 + $0x1d8] sm:$0xff] %v3490
      %3499 = vst [vmem:[#allocation2 + $0x1e0] sm:$0xff] %v3491
      %3500 = vst [vmem:[#allocation2 + $0x1e8] sm:$0xff] %v3492
      %3501 = vst [vmem:[#allocation2 + $0x1f0] sm:$0xff] %v3493
      %3502 = vst [vmem:[#allocation2 + $0x1f8] sm:$0xff] %v3494
      %v3503 = vld [vmem:[%s1030] ss:$8 sm:$0xf]
      %v3504 = vld [vmem:[%s1030] ss:$8 sm:$0xf0]
      %v3505 = vor.u32 %v3503, %v3504
      %3506 = vrot.lane.b32.xlu0 %v2892, 95
      %v3507 = vpop.permute.xlu0 %3506
      %3508 = vrot.lane.b32.xlu0 %v2894, 95
      %v3509 = vpop.permute.xlu0 %3508
      %3510 = vrot.lane.b32.xlu0 %v2896, 95
      %v3511 = vpop.permute.xlu0 %3510
      %3512 = vrot.lane.b32.xlu0 %v2898, 95
      %v3513 = vpop.permute.xlu0 %3512
      %3514 = vrot.lane.b32.xlu0 %v2900, 95
      %v3515 = vpop.permute.xlu0 %3514
      %3516 = vrot.lane.b32.xlu0 %v2902, 95
      %v3517 = vpop.permute.xlu0 %3516
      %3518 = vrot.lane.b32.xlu0 %v2904, 95
      %v3519 = vpop.permute.xlu0 %3518
      %3520 = vrot.lane.b32.xlu0 %v2906, 95
      %v3521 = vpop.permute.xlu0 %3520
      %v3522 = vsel %vm1050, %v3519, %v3521
      %v3523 = vsel %vm1050, %v3517, %v3519
      %v3524 = vsel %vm1050, %v3515, %v3517
      %v3525 = vsel %vm1050, %v3513, %v3515
      %v3526 = vsel %vm1050, %v3511, %v3513
      %v3527 = vsel %vm1050, %v3509, %v3511
      %v3528 = vsel %vm1050, %v3507, %v3509
      %v3529 = vsel %vm1050, %v3521, %v3507
      %v3531 = vlaneseq
      %v3532 = vshrl.u32 %v3531, 7
      %v3533 = vsub.s32 0, %v3532
      %v3534 = vrot.slane %v3505, %v3533
      %v3535 = vlaneseq
      %v3536 = vshrl.u32 %v3535, 7
      %v3537 = vsub.s32 1, %v3536
      %v3538 = vrot.slane %v3505, %v3537
      %v3539 = vlaneseq
      %v3540 = vshrl.u32 %v3539, 7
      %v3541 = vsub.s32 2, %v3540
      %v3542 = vrot.slane %v3505, %v3541
      %v3543 = vlaneseq
      %v3544 = vshrl.u32 %v3543, 7
      %v3545 = vsub.s32 3, %v3544
      %v3546 = vrot.slane %v3505, %v3545
      %v3547 = vlaneseq
      %v3548 = vshrl.u32 %v3547, 7
      %v3549 = vsub.s32 4, %v3548
      %v3550 = vrot.slane %v3505, %v3549
      %v3551 = vlaneseq
      %v3552 = vshrl.u32 %v3551, 7
      %v3553 = vsub.s32 5, %v3552
      %v3554 = vrot.slane %v3505, %v3553
      %v3555 = vlaneseq
      %v3556 = vshrl.u32 %v3555, 7
      %v3557 = vsub.s32 6, %v3556
      %v3558 = vrot.slane %v3505, %v3557
      %v3559 = vlaneseq
      %v3560 = vshrl.u32 %v3559, 7
      %v3561 = vsub.s32 7, %v3560
      %v3562 = vrot.slane %v3505, %v3561
      %v3571 = vmul.f32 %v3534, %v3528
      %v3572 = vmul.f32 %v3538, %v3527
      %v3573 = vmul.f32 %v3542, %v3526
      %v3574 = vmul.f32 %v3546, %v3525
      %v3575 = vmul.f32 %v3550, %v3524
      %v3576 = vmul.f32 %v3554, %v3523
      %v3577 = vmul.f32 %v3558, %v3522
      %v3578 = vmul.f32 %v3562, %v3529
      %3579 = vst [vmem:[#allocation2 + $0x200] sm:$0xff] %v3571
      %3580 = vst [vmem:[#allocation2 + $0x208] sm:$0xff] %v3572
      %3581 = vst [vmem:[#allocation2 + $0x210] sm:$0xff] %v3573
      %3582 = vst [vmem:[#allocation2 + $0x218] sm:$0xff] %v3574
      %3583 = vst [vmem:[#allocation2 + $0x220] sm:$0xff] %v3575
      %3584 = vst [vmem:[#allocation2 + $0x228] sm:$0xff] %v3576
      %3585 = vst [vmem:[#allocation2 + $0x230] sm:$0xff] %v3577
      %3586 = vst [vmem:[#allocation2 + $0x238] sm:$0xff] %v3578
      %v3587 = vld [vmem:[%s7] sm:$0xff]
      %v3588 = vld [vmem:[#allocation2] sm:$0xff]
      %v3589 = vld [vmem:[#allocation2 + $0x8] sm:$0xff]
      %v3590 = vld [vmem:[#allocation2 + $0x10] sm:$0xff]
      %v3591 = vld [vmem:[#allocation2 + $0x18] sm:$0xff]
      %v3592 = vld [vmem:[#allocation2 + $0x20] sm:$0xff]
      %v3593 = vld [vmem:[#allocation2 + $0x28] sm:$0xff]
      %v3594 = vld [vmem:[#allocation2 + $0x30] sm:$0xff]
      %v3595 = vld [vmem:[#allocation2 + $0x38] sm:$0xff]
      %v3596 = vld [vmem:[#allocation2 + $0x40] sm:$0xff]
      %v3597 = vld [vmem:[#allocation2 + $0x48] sm:$0xff]
      %v3598 = vld [vmem:[#allocation2 + $0x50] sm:$0xff]
      %v3599 = vld [vmem:[#allocation2 + $0x58] sm:$0xff]
      %v3600 = vld [vmem:[#allocation2 + $0x60] sm:$0xff]
      %v3601 = vld [vmem:[#allocation2 + $0x68] sm:$0xff]
      %v3602 = vld [vmem:[#allocation2 + $0x70] sm:$0xff]
      %v3603 = vld [vmem:[#allocation2 + $0x78] sm:$0xff]
      %v3604 = vld [vmem:[#allocation2 + $0x80] sm:$0xff]
      %v3605 = vld [vmem:[#allocation2 + $0x88] sm:$0xff]
      %v3606 = vld [vmem:[#allocation2 + $0x90] sm:$0xff]
      %v3607 = vld [vmem:[#allocation2 + $0x98] sm:$0xff]
      %v3608 = vld [vmem:[#allocation2 + $0xa0] sm:$0xff]
      %v3609 = vld [vmem:[#allocation2 + $0xa8] sm:$0xff]
      %v3610 = vld [vmem:[#allocation2 + $0xb0] sm:$0xff]
      %v3611 = vld [vmem:[#allocation2 + $0xb8] sm:$0xff]
      %v3612 = vld [vmem:[#allocation2 + $0xc0] sm:$0xff]
      %v3613 = vld [vmem:[#allocation2 + $0xc8] sm:$0xff]
      %v3614 = vld [vmem:[#allocation2 + $0xd0] sm:$0xff]
      %v3615 = vld [vmem:[#allocation2 + $0xd8] sm:$0xff]
      %v3616 = vld [vmem:[#allocation2 + $0xe0] sm:$0xff]
      %v3617 = vld [vmem:[#allocation2 + $0xe8] sm:$0xff]
      %v3618 = vld [vmem:[#allocation2 + $0xf0] sm:$0xff]
      %v3619 = vld [vmem:[#allocation2 + $0xf8] sm:$0xff]
      %v3620 = vld [vmem:[#allocation2 + $0x100] sm:$0xff]
      %v3621 = vld [vmem:[#allocation2 + $0x108] sm:$0xff]
      %v3622 = vld [vmem:[#allocation2 + $0x110] sm:$0xff]
      %v3623 = vld [vmem:[#allocation2 + $0x118] sm:$0xff]
      %v3624 = vld [vmem:[#allocation2 + $0x120] sm:$0xff]
      %v3625 = vld [vmem:[#allocation2 + $0x128] sm:$0xff]
      %v3626 = vld [vmem:[#allocation2 + $0x130] sm:$0xff]
      %v3627 = vld [vmem:[#allocation2 + $0x138] sm:$0xff]
      %v3628 = vld [vmem:[#allocation2 + $0x140] sm:$0xff]
      %v3629 = vld [vmem:[#allocation2 + $0x148] sm:$0xff]
      %v3630 = vld [vmem:[#allocation2 + $0x150] sm:$0xff]
      %v3631 = vld [vmem:[#allocation2 + $0x158] sm:$0xff]
      %v3632 = vld [vmem:[#allocation2 + $0x160] sm:$0xff]
      %v3633 = vld [vmem:[#allocation2 + $0x168] sm:$0xff]
      %v3634 = vld [vmem:[#allocation2 + $0x170] sm:$0xff]
      %v3635 = vld [vmem:[#allocation2 + $0x178] sm:$0xff]
      %v3636 = vld [vmem:[#allocation2 + $0x180] sm:$0xff]
      %v3637 = vld [vmem:[#allocation2 + $0x188] sm:$0xff]
      %v3638 = vld [vmem:[#allocation2 + $0x190] sm:$0xff]
      %v3639 = vld [vmem:[#allocation2 + $0x198] sm:$0xff]
      %v3640 = vld [vmem:[#allocation2 + $0x1a0] sm:$0xff]
      %v3641 = vld [vmem:[#allocation2 + $0x1a8] sm:$0xff]
      %v3642 = vld [vmem:[#allocation2 + $0x1b0] sm:$0xff]
      %v3643 = vld [vmem:[#allocation2 + $0x1b8] sm:$0xff]
      %v3644 = vld [vmem:[#allocation2 + $0x1c0] sm:$0xff]
      %v3645 = vld [vmem:[#allocation2 + $0x1c8] sm:$0xff]
      %v3646 = vld [vmem:[#allocation2 + $0x1d0] sm:$0xff]
      %v3647 = vld [vmem:[#allocation2 + $0x1d8] sm:$0xff]
      %v3648 = vld [vmem:[#allocation2 + $0x1e0] sm:$0xff]
      %v3649 = vld [vmem:[#allocation2 + $0x1e8] sm:$0xff]
      %v3650 = vld [vmem:[#allocation2 + $0x1f0] sm:$0xff]
      %v3651 = vld [vmem:[#allocation2 + $0x1f8] sm:$0xff]
      %v3652 = vld [vmem:[#allocation2 + $0x200] sm:$0xff]
      %v3653 = vld [vmem:[#allocation2 + $0x208] sm:$0xff]
      %v3654 = vld [vmem:[#allocation2 + $0x210] sm:$0xff]
      %v3655 = vld [vmem:[#allocation2 + $0x218] sm:$0xff]
      %v3656 = vld [vmem:[#allocation2 + $0x220] sm:$0xff]
      %v3657 = vld [vmem:[#allocation2 + $0x228] sm:$0xff]
      %v3658 = vld [vmem:[#allocation2 + $0x230] sm:$0xff]
      %v3659 = vld [vmem:[#allocation2 + $0x238] sm:$0xff]
      %v3660 = vld [vmem:[%s8] sm:$0xff]
      %3662 = vset.pattern.permute.xlu0 0
      %3663 = vperm.xlu0 %3662, %v3660
      %v3664 = vpop.permute.xlu0 %3663
      %v3667 = vsel %vm1195, %v3587, 0
      %3669 = vmatprep.subr.mxu0 0.0
      %3670 = vmatpush1.msra.mxu0 0.0
      %3671 = vmatprep.subr.mxu0 0.0
      %3672 = vmatpush1.msra.mxu0 0.0
      %3673 = vmatprep.subr.mxu0 0.0
      %3674 = vmatpush1.msra.mxu0 0.0
      %3675 = vmatprep.subr.mxu0 0.0
      %3676 = vmatpush1.msra.mxu0 0.0
      %3677 = vmatprep.subr.mxu0 0.0
      %3678 = vmatpush1.msra.mxu0 0.0
      %3679 = vmatprep.subr.mxu0 0.0
      %3680 = vmatpush1.msra.mxu0 0.0
      %3681 = vmatprep.subr.mxu0 0.0
      %3682 = vmatpush1.msra.mxu0 0.0
      %3683 = vmatprep.subr.mxu0 %v3653
      %3684 = vmatpush1.msra.mxu0 %v3652
      %3685 = vmatprep.subr.mxu0 %v3645
      %3686 = vmatpush1.msra.mxu0 %v3644
      %3687 = vmatprep.subr.mxu0 %v3637
      %3688 = vmatpush1.msra.mxu0 %v3636
      %3689 = vmatprep.subr.mxu0 %v3629
      %3690 = vmatpush1.msra.mxu0 %v3628
      %3691 = vmatprep.subr.mxu0 %v3621
      %3692 = vmatpush1.msra.mxu0 %v3620
      %3693 = vmatprep.subr.mxu0 %v3613
      %3694 = vmatpush1.msra.mxu0 %v3612
      %3695 = vmatprep.subr.mxu0 %v3605
      %3696 = vmatpush1.msra.mxu0 %v3604
      %3697 = vmatprep.subr.mxu0 %v3597
      %3698 = vmatpush1.msra.mxu0 %v3596
      %3699 = vmatprep.subr.mxu0 %v3589
      %3700 = vmatpush1.msra.mxu0 %v3588
      %3701 = vmatprep.subr.mxu0 0.0
      %3702 = vmatpush2.msra.mxu0 0.0
      %3703 = vmatprep.subr.mxu0 0.0
      %3704 = vmatpush2.msra.mxu0 0.0
      %3705 = vmatprep.subr.mxu0 0.0
      %3706 = vmatpush2.msra.mxu0 0.0
      %3707 = vmatprep.subr.mxu0 0.0
      %3708 = vmatpush2.msra.mxu0 0.0
      %3709 = vmatprep.subr.mxu0 0.0
      %3710 = vmatpush2.msra.mxu0 0.0
      %3711 = vmatprep.subr.mxu0 0.0
      %3712 = vmatpush2.msra.mxu0 0.0
      %3713 = vmatprep.subr.mxu0 0.0
      %3714 = vmatpush2.msra.mxu0 0.0
      %3715 = vmatprep.subr.mxu0 0.0
      %3716 = vmatpush2.msra.mxu0 0.0
      %3717 = vmatprep.subr.mxu0 0.0
      %3718 = vmatpush2.msra.mxu0 0.0
      %3719 = vmatprep.subr.mxu0 0.0
      %3720 = vmatpush2.msra.mxu0 0.0
      %3721 = vmatprep.subr.mxu0 0.0
      %3722 = vmatpush2.msra.mxu0 0.0
      %3723 = vmatprep.subr.mxu0 0.0
      %3724 = vmatpush2.msra.mxu0 0.0
      %3725 = vmatprep.subr.mxu0 0.0
      %3726 = vmatpush2.msra.mxu0 0.0
      %3727 = vmatprep.subr.mxu0 0.0
      %3728 = vmatpush2.msra.mxu0 0.0
      %3729 = vmatprep.subr.mxu0 0.0
      %3730 = vmatpush2.msra.mxu0 0.0
      %3731 = vmatprep.subr.mxu0 0.0
      %3732 = vmatpush2.msra.mxu0 0.0
      %3733 = vmatprep.mubr.f32.mxu0 0.0
      %3734 = vmatmul.mubr.f32.gmra.mxu0 %v3667
      %v3735 = vpop.f32.mrf.mxu0
      %v3736 = vadd.f32 %v3664, %v3735
      %v3737 = vpop.f32.mrf.mxu0
      %v3738 = vadd.f32 %v3664, %v3737
      %3739 = vdwg.mxu0
      %3740 = vmatprep.subr.mxu0 0.0
      %3741 = vmatpush1.msra.mxu0 0.0
      %3742 = vmatprep.subr.mxu0 0.0
      %3743 = vmatpush1.msra.mxu0 0.0
      %3744 = vmatprep.subr.mxu0 0.0
      %3745 = vmatpush1.msra.mxu0 0.0
      %3746 = vmatprep.subr.mxu0 0.0
      %3747 = vmatpush1.msra.mxu0 0.0
      %3748 = vmatprep.subr.mxu0 0.0
      %3749 = vmatpush1.msra.mxu0 0.0
      %3750 = vmatprep.subr.mxu0 0.0
      %3751 = vmatpush1.msra.mxu0 0.0
      %3752 = vmatprep.subr.mxu0 0.0
      %3753 = vmatpush1.msra.mxu0 0.0
      %3754 = vmatprep.subr.mxu0 %v3655
      %3755 = vmatpush1.msra.mxu0 %v3654
      %3756 = vmatprep.subr.mxu0 %v3647
      %3757 = vmatpush1.msra.mxu0 %v3646
      %3758 = vmatprep.subr.mxu0 %v3639
      %3759 = vmatpush1.msra.mxu0 %v3638
      %3760 = vmatprep.subr.mxu0 %v3631
      %3761 = vmatpush1.msra.mxu0 %v3630
      %3762 = vmatprep.subr.mxu0 %v3623
      %3763 = vmatpush1.msra.mxu0 %v3622
      %3764 = vmatprep.subr.mxu0 %v3615
      %3765 = vmatpush1.msra.mxu0 %v3614
      %3766 = vmatprep.subr.mxu0 %v3607
      %3767 = vmatpush1.msra.mxu0 %v3606
      %3768 = vmatprep.subr.mxu0 %v3599
      %3769 = vmatpush1.msra.mxu0 %v3598
      %3770 = vmatprep.subr.mxu0 %v3591
      %3771 = vmatpush1.msra.mxu0 %v3590
      %3772 = vmatprep.subr.mxu0 0.0
      %3773 = vmatpush2.msra.mxu0 0.0
      %3774 = vmatprep.subr.mxu0 0.0
      %3775 = vmatpush2.msra.mxu0 0.0
      %3776 = vmatprep.subr.mxu0 0.0
      %3777 = vmatpush2.msra.mxu0 0.0
      %3778 = vmatprep.subr.mxu0 0.0
      %3779 = vmatpush2.msra.mxu0 0.0
      %3780 = vmatprep.subr.mxu0 0.0
      %3781 = vmatpush2.msra.mxu0 0.0
      %3782 = vmatprep.subr.mxu0 0.0
      %3783 = vmatpush2.msra.mxu0 0.0
      %3784 = vmatprep.subr.mxu0 0.0
      %3785 = vmatpush2.msra.mxu0 0.0
      %3786 = vmatprep.subr.mxu0 0.0
      %3787 = vmatpush2.msra.mxu0 0.0
      %3788 = vmatprep.subr.mxu0 0.0
      %3789 = vmatpush2.msra.mxu0 0.0
      %3790 = vmatprep.subr.mxu0 0.0
      %3791 = vmatpush2.msra.mxu0 0.0
      %3792 = vmatprep.subr.mxu0 0.0
      %3793 = vmatpush2.msra.mxu0 0.0
      %3794 = vmatprep.subr.mxu0 0.0
      %3795 = vmatpush2.msra.mxu0 0.0
      %3796 = vmatprep.subr.mxu0 0.0
      %3797 = vmatpush2.msra.mxu0 0.0
      %3798 = vmatprep.subr.mxu0 0.0
      %3799 = vmatpush2.msra.mxu0 0.0
      %3800 = vmatprep.subr.mxu0 0.0
      %3801 = vmatpush2.msra.mxu0 0.0
      %3802 = vmatprep.subr.mxu0 0.0
      %3803 = vmatpush2.msra.mxu0 0.0
      %3804 = vmatprep.mubr.f32.mxu0 0.0
      %3805 = vmatmul.mubr.f32.gmra.mxu0 %v3667
      %v3806 = vpop.f32.mrf.mxu0
      %v3807 = vadd.f32 %v3664, %v3806
      %v3808 = vpop.f32.mrf.mxu0
      %v3809 = vadd.f32 %v3664, %v3808
      %3810 = vdwg.mxu0
      %3811 = vmatprep.subr.mxu0 0.0
      %3812 = vmatpush1.msra.mxu0 0.0
      %3813 = vmatprep.subr.mxu0 0.0
      %3814 = vmatpush1.msra.mxu0 0.0
      %3815 = vmatprep.subr.mxu0 0.0
      %3816 = vmatpush1.msra.mxu0 0.0
      %3817 = vmatprep.subr.mxu0 0.0
      %3818 = vmatpush1.msra.mxu0 0.0
      %3819 = vmatprep.subr.mxu0 0.0
      %3820 = vmatpush1.msra.mxu0 0.0
      %3821 = vmatprep.subr.mxu0 0.0
      %3822 = vmatpush1.msra.mxu0 0.0
      %3823 = vmatprep.subr.mxu0 0.0
      %3824 = vmatpush1.msra.mxu0 0.0
      %3825 = vmatprep.subr.mxu0 %v3657
      %3826 = vmatpush1.msra.mxu0 %v3656
      %3827 = vmatprep.subr.mxu0 %v3649
      %3828 = vmatpush1.msra.mxu0 %v3648
      %3829 = vmatprep.subr.mxu0 %v3641
      %3830 = vmatpush1.msra.mxu0 %v3640
      %3831 = vmatprep.subr.mxu0 %v3633
      %3832 = vmatpush1.msra.mxu0 %v3632
      %3833 = vmatprep.subr.mxu0 %v3625
      %3834 = vmatpush1.msra.mxu0 %v3624
      %3835 = vmatprep.subr.mxu0 %v3617
      %3836 = vmatpush1.msra.mxu0 %v3616
      %3837 = vmatprep.subr.mxu0 %v3609
      %3838 = vmatpush1.msra.mxu0 %v3608
      %3839 = vmatprep.subr.mxu0 %v3601
      %3840 = vmatpush1.msra.mxu0 %v3600
      %3841 = vmatprep.subr.mxu0 %v3593
      %3842 = vmatpush1.msra.mxu0 %v3592
      %3843 = vmatprep.subr.mxu0 0.0
      %3844 = vmatpush2.msra.mxu0 0.0
      %3845 = vmatprep.subr.mxu0 0.0
      %3846 = vmatpush2.msra.mxu0 0.0
      %3847 = vmatprep.subr.mxu0 0.0
      %3848 = vmatpush2.msra.mxu0 0.0
      %3849 = vmatprep.subr.mxu0 0.0
      %3850 = vmatpush2.msra.mxu0 0.0
      %3851 = vmatprep.subr.mxu0 0.0
      %3852 = vmatpush2.msra.mxu0 0.0
      %3853 = vmatprep.subr.mxu0 0.0
      %3854 = vmatpush2.msra.mxu0 0.0
      %3855 = vmatprep.subr.mxu0 0.0
      %3856 = vmatpush2.msra.mxu0 0.0
      %3857 = vmatprep.subr.mxu0 0.0
      %3858 = vmatpush2.msra.mxu0 0.0
      %3859 = vmatprep.subr.mxu0 0.0
      %3860 = vmatpush2.msra.mxu0 0.0
      %3861 = vmatprep.subr.mxu0 0.0
      %3862 = vmatpush2.msra.mxu0 0.0
      %3863 = vmatprep.subr.mxu0 0.0
      %3864 = vmatpush2.msra.mxu0 0.0
      %3865 = vmatprep.subr.mxu0 0.0
      %3866 = vmatpush2.msra.mxu0 0.0
      %3867 = vmatprep.subr.mxu0 0.0
      %3868 = vmatpush2.msra.mxu0 0.0
      %3869 = vmatprep.subr.mxu0 0.0
      %3870 = vmatpush2.msra.mxu0 0.0
      %3871 = vmatprep.subr.mxu0 0.0
      %3872 = vmatpush2.msra.mxu0 0.0
      %3873 = vmatprep.subr.mxu0 0.0
      %3874 = vmatpush2.msra.mxu0 0.0
      %3875 = vmatprep.mubr.f32.mxu0 0.0
      %3876 = vmatmul.mubr.f32.gmra.mxu0 %v3667
      %v3877 = vpop.f32.mrf.mxu0
      %v3878 = vadd.f32 %v3664, %v3877
      %v3879 = vpop.f32.mrf.mxu0
      %v3880 = vadd.f32 %v3664, %v3879
      %3881 = vdwg.mxu0
      %3882 = vmatprep.subr.mxu0 0.0
      %3883 = vmatpush1.msra.mxu0 0.0
      %3884 = vmatprep.subr.mxu0 0.0
      %3885 = vmatpush1.msra.mxu0 0.0
      %3886 = vmatprep.subr.mxu0 0.0
      %3887 = vmatpush1.msra.mxu0 0.0
      %3888 = vmatprep.subr.mxu0 0.0
      %3889 = vmatpush1.msra.mxu0 0.0
      %3890 = vmatprep.subr.mxu0 0.0
      %3891 = vmatpush1.msra.mxu0 0.0
      %3892 = vmatprep.subr.mxu0 0.0
      %3893 = vmatpush1.msra.mxu0 0.0
      %3894 = vmatprep.subr.mxu0 0.0
      %3895 = vmatpush1.msra.mxu0 0.0
      %3896 = vmatprep.subr.mxu0 %v3659
      %3897 = vmatpush1.msra.mxu0 %v3658
      %3898 = vmatprep.subr.mxu0 %v3651
      %3899 = vmatpush1.msra.mxu0 %v3650
      %3900 = vmatprep.subr.mxu0 %v3643
      %3901 = vmatpush1.msra.mxu0 %v3642
      %3902 = vmatprep.subr.mxu0 %v3635
      %3903 = vmatpush1.msra.mxu0 %v3634
      %3904 = vmatprep.subr.mxu0 %v3627
      %3905 = vmatpush1.msra.mxu0 %v3626
      %3906 = vmatprep.subr.mxu0 %v3619
      %3907 = vmatpush1.msra.mxu0 %v3618
      %3908 = vmatprep.subr.mxu0 %v3611
      %3909 = vmatpush1.msra.mxu0 %v3610
      %3910 = vmatprep.subr.mxu0 %v3603
      %3911 = vmatpush1.msra.mxu0 %v3602
      %3912 = vmatprep.subr.mxu0 %v3595
      %3913 = vmatpush1.msra.mxu0 %v3594
      %3914 = vmatprep.subr.mxu0 0.0
      %3915 = vmatpush2.msra.mxu0 0.0
      %3916 = vmatprep.subr.mxu0 0.0
      %3917 = vmatpush2.msra.mxu0 0.0
      %3918 = vmatprep.subr.mxu0 0.0
      %3919 = vmatpush2.msra.mxu0 0.0
      %3920 = vmatprep.subr.mxu0 0.0
      %3921 = vmatpush2.msra.mxu0 0.0
      %3922 = vmatprep.subr.mxu0 0.0
      %3923 = vmatpush2.msra.mxu0 0.0
      %3924 = vmatprep.subr.mxu0 0.0
      %3925 = vmatpush2.msra.mxu0 0.0
      %3926 = vmatprep.subr.mxu0 0.0
      %3927 = vmatpush2.msra.mxu0 0.0
      %3928 = vmatprep.subr.mxu0 0.0
      %3929 = vmatpush2.msra.mxu0 0.0
      %3930 = vmatprep.subr.mxu0 0.0
      %3931 = vmatpush2.msra.mxu0 0.0
      %3932 = vmatprep.subr.mxu0 0.0
      %3933 = vmatpush2.msra.mxu0 0.0
      %3934 = vmatprep.subr.mxu0 0.0
      %3935 = vmatpush2.msra.mxu0 0.0
      %3936 = vmatprep.subr.mxu0 0.0
      %3937 = vmatpush2.msra.mxu0 0.0
      %3938 = vmatprep.subr.mxu0 0.0
      %3939 = vmatpush2.msra.mxu0 0.0
      %3940 = vmatprep.subr.mxu0 0.0
      %3941 = vmatpush2.msra.mxu0 0.0
      %3942 = vmatprep.subr.mxu0 0.0
      %3943 = vmatpush2.msra.mxu0 0.0
      %3944 = vmatprep.subr.mxu0 0.0
      %3945 = vmatpush2.msra.mxu0 0.0
      %3946 = vmatprep.mubr.f32.mxu0 0.0
      %3947 = vmatmul.mubr.f32.gmra.mxu0 %v3667
      %v3948 = vpop.f32.mrf.mxu0
      %v3949 = vadd.f32 %v3664, %v3948
      %v3950 = vpop.f32.mrf.mxu0
      %v3951 = vadd.f32 %v3664, %v3950
      %3952 = vdwg.mxu0
      %v3953 = vand.u32 2147483647, %v3736
      %v3954 = vand.u32 2147483647, %v3738
      %v3955 = vand.u32 2147483647, %v3807
      %v3956 = vand.u32 2147483647, %v3809
      %v3957 = vand.u32 2147483647, %v3878
      %v3958 = vand.u32 2147483647, %v3880
      %v3959 = vand.u32 2147483647, %v3949
      %v3960 = vand.u32 2147483647, %v3951
      %v3961 = vsub.f32 0.0, %v3953
      %v3962 = vsub.f32 0.0, %v3954
      %v3963 = vsub.f32 0.0, %v3955
      %v3964 = vsub.f32 0.0, %v3956
      %v3965 = vsub.f32 0.0, %v3957
      %v3966 = vsub.f32 0.0, %v3958
      %v3967 = vsub.f32 0.0, %v3959
      %v3968 = vsub.f32 0.0, %v3960
      %v3969 = vmul.f32 %v3961, 1.442695
      %v3970 = vpow.pop %v3969
      %v3971 = vmul.f32 %v3962, 1.442695
      %v3972 = vpow.pop %v3971
      %v3973 = vmul.f32 %v3963, 1.442695
      %v3974 = vpow.pop %v3973
      %v3975 = vmul.f32 %v3964, 1.442695
      %v3976 = vpow.pop %v3975
      %v3977 = vmul.f32 %v3965, 1.442695
      %v3978 = vpow.pop %v3977
      %v3979 = vmul.f32 %v3966, 1.442695
      %v3980 = vpow.pop %v3979
      %v3981 = vmul.f32 %v3967, 1.442695
      %v3982 = vpow.pop %v3981
      %v3983 = vmul.f32 %v3968, 1.442695
      %v3984 = vpow.pop %v3983
      %v3985 = vmul.f32 %v3970, %v3970
      %v3986 = vmul.f32 %v3972, %v3972
      %v3987 = vmul.f32 %v3974, %v3974
      %v3988 = vmul.f32 %v3976, %v3976
      %v3989 = vmul.f32 %v3978, %v3978
      %v3990 = vmul.f32 %v3980, %v3980
      %v3991 = vmul.f32 %v3982, %v3982
      %v3992 = vmul.f32 %v3984, %v3984
      %vm3993 = vcmp.ge.f32.partialorder %v3736, 0.0
      %vm3994 = vcmp.ge.f32.partialorder %v3738, 0.0
      %vm3995 = vcmp.ge.f32.partialorder %v3807, 0.0
      %vm3996 = vcmp.ge.f32.partialorder %v3809, 0.0
      %vm3997 = vcmp.ge.f32.partialorder %v3878, 0.0
      %vm3998 = vcmp.ge.f32.partialorder %v3880, 0.0
      %vm3999 = vcmp.ge.f32.partialorder %v3949, 0.0
      %vm4000 = vcmp.ge.f32.partialorder %v3951, 0.0
      %v4001 = vmul.f32 %v3970, 2.0
      %v4002 = vmul.f32 %v3972, 2.0
      %v4003 = vmul.f32 %v3974, 2.0
      %v4004 = vmul.f32 %v3976, 2.0
      %v4005 = vmul.f32 %v3978, 2.0
      %v4006 = vmul.f32 %v3980, 2.0
      %v4007 = vmul.f32 %v3982, 2.0
      %v4008 = vmul.f32 %v3984, 2.0
      %v4009 = vadd.f32 %v4001, 1.0
      %v4010 = vadd.f32 %v4002, 1.0
      %v4011 = vadd.f32 %v4003, 1.0
      %v4012 = vadd.f32 %v4004, 1.0
      %v4013 = vadd.f32 %v4005, 1.0
      %v4014 = vadd.f32 %v4006, 1.0
      %v4015 = vadd.f32 %v4007, 1.0
      %v4016 = vadd.f32 %v4008, 1.0
      %v4017 = vadd.f32 %v3985, %v4001
      %v4018 = vadd.f32 %v3986, %v4002
      %v4019 = vadd.f32 %v3987, %v4003
      %v4020 = vadd.f32 %v3988, %v4004
      %v4021 = vadd.f32 %v3989, %v4005
      %v4022 = vadd.f32 %v3990, %v4006
      %v4023 = vadd.f32 %v3991, %v4007
      %v4024 = vadd.f32 %v3992, %v4008
      %v4025 = vsel %vm3993, %v4009, %v4017
      %v4026 = vsel %vm3994, %v4010, %v4018
      %v4027 = vsel %vm3995, %v4011, %v4019
      %v4028 = vsel %vm3996, %v4012, %v4020
      %v4029 = vsel %vm3997, %v4013, %v4021
      %v4030 = vsel %vm3998, %v4014, %v4022
      %v4031 = vsel %vm3999, %v4015, %v4023
      %v4032 = vsel %vm4000, %v4016, %v4024
      %v4033 = vmul.f32 %v3985, 2.0
      %v4034 = vmul.f32 %v3986, 2.0
      %v4035 = vmul.f32 %v3987, 2.0
      %v4036 = vmul.f32 %v3988, 2.0
      %v4037 = vmul.f32 %v3989, 2.0
      %v4038 = vmul.f32 %v3990, 2.0
      %v4039 = vmul.f32 %v3991, 2.0
      %v4040 = vmul.f32 %v3992, 2.0
      %v4041 = vsel %vm3993, %v4033, 2.0
      %v4042 = vsel %vm3994, %v4034, 2.0
      %v4043 = vsel %vm3995, %v4035, 2.0
      %v4044 = vsel %vm3996, %v4036, 2.0
      %v4045 = vsel %vm3997, %v4037, 2.0
      %v4046 = vsel %vm3998, %v4038, 2.0
      %v4047 = vsel %vm3999, %v4039, 2.0
      %v4048 = vsel %vm4000, %v4040, 2.0
      %v4049 = vadd.f32 %v4025, %v4041
      %v4050 = vadd.f32 %v4026, %v4042
      %v4051 = vadd.f32 %v4027, %v4043
      %v4052 = vadd.f32 %v4028, %v4044
      %v4053 = vadd.f32 %v4029, %v4045
      %v4054 = vadd.f32 %v4030, %v4046
      %v4055 = vadd.f32 %v4031, %v4047
      %v4056 = vadd.f32 %v4032, %v4048
      %v4057 = vmul.f32 %v3736, %v4025
      %v4058 = vmul.f32 %v3738, %v4026
      %v4059 = vmul.f32 %v3807, %v4027
      %v4060 = vmul.f32 %v3809, %v4028
      %v4061 = vmul.f32 %v3878, %v4029
      %v4062 = vmul.f32 %v3880, %v4030
      %v4063 = vmul.f32 %v3949, %v4031
      %v4064 = vmul.f32 %v3951, %v4032
      %v4065 = vrcp.pop %v4049
      %v4066 = vmul.f32 %v4057, %v4065
      %v4067 = vrcp.pop %v4050
      %v4068 = vmul.f32 %v4058, %v4067
      %v4069 = vrcp.pop %v4051
      %v4070 = vmul.f32 %v4059, %v4069
      %v4071 = vrcp.pop %v4052
      %v4072 = vmul.f32 %v4060, %v4071
      %v4073 = vrcp.pop %v4053
      %v4074 = vmul.f32 %v4061, %v4073
      %v4075 = vrcp.pop %v4054
      %v4076 = vmul.f32 %v4062, %v4075
      %v4077 = vrcp.pop %v4055
      %v4078 = vmul.f32 %v4063, %v4077
      %v4079 = vrcp.pop %v4056
      %v4080 = vmul.f32 %v4064, %v4079
      %v4081 = vld [vmem:[%s9] sm:$0xff]
      %v4082 = vld [vmem:[%s10] sm:$0xff]
      %4084 = vset.pattern.permute.xlu0 0
      %4085 = vperm.xlu0 %4084, %v4082
      %v4086 = vpop.permute.xlu0 %4085
      %v4092 = vcombine.high %v407, %v407
      %v4093 = vcombine.high %v408, %v408
      %v4094 = vcombine.high %v409, %v409
      %v4095 = vcombine.high %v410, %v410
      %vm4096 = vcmask 31744
      %v4098 = vsel %vm4096, %v4081, 0
      %v4100 = vsel %vm2470, %v407, 0
      %v4102 = vsel %vm2470, %v4092, 0
      %v4104 = vsel %vm2470, %v408, 0
      %v4106 = vsel %vm2470, %v4093, 0
      %v4108 = vsel %vm2470, %v409, 0
      %v4110 = vsel %vm2470, %v4094, 0
      %v4112 = vsel %vm2470, %v410, 0
      %v4114 = vsel %vm2470, %v4095, 0
      %4116 = vmatprep.subr.mxu0 0.0
      %4117 = vmatpush1.msra.mxu0 0.0
      %4118 = vmatprep.subr.mxu0 0.0
      %4119 = vmatpush1.msra.mxu0 0.0
      %4120 = vmatprep.subr.mxu0 0.0
      %4121 = vmatpush1.msra.mxu0 0.0
      %4122 = vmatprep.subr.mxu0 0.0
      %4123 = vmatpush1.msra.mxu0 0.0
      %4124 = vmatprep.subr.mxu0 0.0
      %4125 = vmatpush1.msra.mxu0 0.0
      %4126 = vmatprep.subr.mxu0 0.0
      %4127 = vmatpush1.msra.mxu0 0.0
      %4128 = vmatprep.subr.mxu0 0.0
      %4129 = vmatpush1.msra.mxu0 0.0
      %4130 = vmatprep.subr.mxu0 0.0
      %4131 = vmatpush1.msra.mxu0 0.0
      %4132 = vmatprep.subr.mxu0 0.0
      %4133 = vmatpush1.msra.mxu0 0.0
      %4134 = vmatprep.subr.mxu0 0.0
      %4135 = vmatpush1.msra.mxu0 0.0
      %4136 = vmatprep.subr.mxu0 0.0
      %4137 = vmatpush1.msra.mxu0 0.0
      %4138 = vmatprep.subr.mxu0 0.0
      %4139 = vmatpush1.msra.mxu0 0.0
      %4140 = vmatprep.subr.mxu0 0.0
      %4141 = vmatpush1.msra.mxu0 0.0
      %4142 = vmatprep.subr.mxu0 0.0
      %4143 = vmatpush1.msra.mxu0 0.0
      %4144 = vmatprep.subr.mxu0 0.0
      %4145 = vmatpush1.msra.mxu0 0.0
      %4146 = vmatprep.subr.mxu0 %v4102
      %4147 = vmatpush1.msra.mxu0 %v4100
      %4148 = vmatprep.subr.mxu0 0.0
      %4149 = vmatpush2.msra.mxu0 0.0
      %4150 = vmatprep.subr.mxu0 0.0
      %4151 = vmatpush2.msra.mxu0 0.0
      %4152 = vmatprep.subr.mxu0 0.0
      %4153 = vmatpush2.msra.mxu0 0.0
      %4154 = vmatprep.subr.mxu0 0.0
      %4155 = vmatpush2.msra.mxu0 0.0
      %4156 = vmatprep.subr.mxu0 0.0
      %4157 = vmatpush2.msra.mxu0 0.0
      %4158 = vmatprep.subr.mxu0 0.0
      %4159 = vmatpush2.msra.mxu0 0.0
      %4160 = vmatprep.subr.mxu0 0.0
      %4161 = vmatpush2.msra.mxu0 0.0
      %4162 = vmatprep.subr.mxu0 0.0
      %4163 = vmatpush2.msra.mxu0 0.0
      %4164 = vmatprep.subr.mxu0 0.0
      %4165 = vmatpush2.msra.mxu0 0.0
      %4166 = vmatprep.subr.mxu0 0.0
      %4167 = vmatpush2.msra.mxu0 0.0
      %4168 = vmatprep.subr.mxu0 0.0
      %4169 = vmatpush2.msra.mxu0 0.0
      %4170 = vmatprep.subr.mxu0 0.0
      %4171 = vmatpush2.msra.mxu0 0.0
      %4172 = vmatprep.subr.mxu0 0.0
      %4173 = vmatpush2.msra.mxu0 0.0
      %4174 = vmatprep.subr.mxu0 0.0
      %4175 = vmatpush2.msra.mxu0 0.0
      %4176 = vmatprep.subr.mxu0 0.0
      %4177 = vmatpush2.msra.mxu0 0.0
      %4178 = vmatprep.subr.mxu0 0.0
      %4179 = vmatpush2.msra.mxu0 0.0
      %4180 = vmatprep.mubr.f32.mxu0 0.0
      %4181 = vmatmul.mubr.f32.gmra.mxu0 %v4098
      %v4182 = vpop.f32.mrf.mxu0
      %v4183 = vadd.f32 %v4086, %v4182
      %v4184 = vpop.f32.mrf.mxu0
      %v4185 = vadd.f32 %v4086, %v4184
      %4186 = vdwg.mxu0
      %4187 = vmatprep.subr.mxu0 0.0
      %4188 = vmatpush1.msra.mxu0 0.0
      %4189 = vmatprep.subr.mxu0 0.0
      %4190 = vmatpush1.msra.mxu0 0.0
      %4191 = vmatprep.subr.mxu0 0.0
      %4192 = vmatpush1.msra.mxu0 0.0
      %4193 = vmatprep.subr.mxu0 0.0
      %4194 = vmatpush1.msra.mxu0 0.0
      %4195 = vmatprep.subr.mxu0 0.0
      %4196 = vmatpush1.msra.mxu0 0.0
      %4197 = vmatprep.subr.mxu0 0.0
      %4198 = vmatpush1.msra.mxu0 0.0
      %4199 = vmatprep.subr.mxu0 0.0
      %4200 = vmatpush1.msra.mxu0 0.0
      %4201 = vmatprep.subr.mxu0 0.0
      %4202 = vmatpush1.msra.mxu0 0.0
      %4203 = vmatprep.subr.mxu0 0.0
      %4204 = vmatpush1.msra.mxu0 0.0
      %4205 = vmatprep.subr.mxu0 0.0
      %4206 = vmatpush1.msra.mxu0 0.0
      %4207 = vmatprep.subr.mxu0 0.0
      %4208 = vmatpush1.msra.mxu0 0.0
      %4209 = vmatprep.subr.mxu0 0.0
      %4210 = vmatpush1.msra.mxu0 0.0
      %4211 = vmatprep.subr.mxu0 0.0
      %4212 = vmatpush1.msra.mxu0 0.0
      %4213 = vmatprep.subr.mxu0 0.0
      %4214 = vmatpush1.msra.mxu0 0.0
      %4215 = vmatprep.subr.mxu0 0.0
      %4216 = vmatpush1.msra.mxu0 0.0
      %4217 = vmatprep.subr.mxu0 %v4106
      %4218 = vmatpush1.msra.mxu0 %v4104
      %4219 = vmatprep.subr.mxu0 0.0
      %4220 = vmatpush2.msra.mxu0 0.0
      %4221 = vmatprep.subr.mxu0 0.0
      %4222 = vmatpush2.msra.mxu0 0.0
      %4223 = vmatprep.subr.mxu0 0.0
      %4224 = vmatpush2.msra.mxu0 0.0
      %4225 = vmatprep.subr.mxu0 0.0
      %4226 = vmatpush2.msra.mxu0 0.0
      %4227 = vmatprep.subr.mxu0 0.0
      %4228 = vmatpush2.msra.mxu0 0.0
      %4229 = vmatprep.subr.mxu0 0.0
      %4230 = vmatpush2.msra.mxu0 0.0
      %4231 = vmatprep.subr.mxu0 0.0
      %4232 = vmatpush2.msra.mxu0 0.0
      %4233 = vmatprep.subr.mxu0 0.0
      %4234 = vmatpush2.msra.mxu0 0.0
      %4235 = vmatprep.subr.mxu0 0.0
      %4236 = vmatpush2.msra.mxu0 0.0
      %4237 = vmatprep.subr.mxu0 0.0
      %4238 = vmatpush2.msra.mxu0 0.0
      %4239 = vmatprep.subr.mxu0 0.0
      %4240 = vmatpush2.msra.mxu0 0.0
      %4241 = vmatprep.subr.mxu0 0.0
      %4242 = vmatpush2.msra.mxu0 0.0
      %4243 = vmatprep.subr.mxu0 0.0
      %4244 = vmatpush2.msra.mxu0 0.0
      %4245 = vmatprep.subr.mxu0 0.0
      %4246 = vmatpush2.msra.mxu0 0.0
      %4247 = vmatprep.subr.mxu0 0.0
      %4248 = vmatpush2.msra.mxu0 0.0
      %4249 = vmatprep.subr.mxu0 0.0
      %4250 = vmatpush2.msra.mxu0 0.0
      %4251 = vmatprep.mubr.f32.mxu0 0.0
      %4252 = vmatmul.mubr.f32.gmra.mxu0 %v4098
      %v4253 = vpop.f32.mrf.mxu0
      %v4254 = vadd.f32 %v4086, %v4253
      %v4255 = vpop.f32.mrf.mxu0
      %v4256 = vadd.f32 %v4086, %v4255
      %4257 = vdwg.mxu0
      %4258 = vmatprep.subr.mxu0 0.0
      %4259 = vmatpush1.msra.mxu0 0.0
      %4260 = vmatprep.subr.mxu0 0.0
      %4261 = vmatpush1.msra.mxu0 0.0
      %4262 = vmatprep.subr.mxu0 0.0
      %4263 = vmatpush1.msra.mxu0 0.0
      %4264 = vmatprep.subr.mxu0 0.0
      %4265 = vmatpush1.msra.mxu0 0.0
      %4266 = vmatprep.subr.mxu0 0.0
      %4267 = vmatpush1.msra.mxu0 0.0
      %4268 = vmatprep.subr.mxu0 0.0
      %4269 = vmatpush1.msra.mxu0 0.0
      %4270 = vmatprep.subr.mxu0 0.0
      %4271 = vmatpush1.msra.mxu0 0.0
      %4272 = vmatprep.subr.mxu0 0.0
      %4273 = vmatpush1.msra.mxu0 0.0
      %4274 = vmatprep.subr.mxu0 0.0
      %4275 = vmatpush1.msra.mxu0 0.0
      %4276 = vmatprep.subr.mxu0 0.0
      %4277 = vmatpush1.msra.mxu0 0.0
      %4278 = vmatprep.subr.mxu0 0.0
      %4279 = vmatpush1.msra.mxu0 0.0
      %4280 = vmatprep.subr.mxu0 0.0
      %4281 = vmatpush1.msra.mxu0 0.0
      %4282 = vmatprep.subr.mxu0 0.0
      %4283 = vmatpush1.msra.mxu0 0.0
      %4284 = vmatprep.subr.mxu0 0.0
      %4285 = vmatpush1.msra.mxu0 0.0
      %4286 = vmatprep.subr.mxu0 0.0
      %4287 = vmatpush1.msra.mxu0 0.0
      %4288 = vmatprep.subr.mxu0 %v4110
      %4289 = vmatpush1.msra.mxu0 %v4108
      %4290 = vmatprep.subr.mxu0 0.0
      %4291 = vmatpush2.msra.mxu0 0.0
      %4292 = vmatprep.subr.mxu0 0.0
      %4293 = vmatpush2.msra.mxu0 0.0
      %4294 = vmatprep.subr.mxu0 0.0
      %4295 = vmatpush2.msra.mxu0 0.0
      %4296 = vmatprep.subr.mxu0 0.0
      %4297 = vmatpush2.msra.mxu0 0.0
      %4298 = vmatprep.subr.mxu0 0.0
      %4299 = vmatpush2.msra.mxu0 0.0
      %4300 = vmatprep.subr.mxu0 0.0
      %4301 = vmatpush2.msra.mxu0 0.0
      %4302 = vmatprep.subr.mxu0 0.0
      %4303 = vmatpush2.msra.mxu0 0.0
      %4304 = vmatprep.subr.mxu0 0.0
      %4305 = vmatpush2.msra.mxu0 0.0
      %4306 = vmatprep.subr.mxu0 0.0
      %4307 = vmatpush2.msra.mxu0 0.0
      %4308 = vmatprep.subr.mxu0 0.0
      %4309 = vmatpush2.msra.mxu0 0.0
      %4310 = vmatprep.subr.mxu0 0.0
      %4311 = vmatpush2.msra.mxu0 0.0
      %4312 = vmatprep.subr.mxu0 0.0
      %4313 = vmatpush2.msra.mxu0 0.0
      %4314 = vmatprep.subr.mxu0 0.0
      %4315 = vmatpush2.msra.mxu0 0.0
      %4316 = vmatprep.subr.mxu0 0.0
      %4317 = vmatpush2.msra.mxu0 0.0
      %4318 = vmatprep.subr.mxu0 0.0
      %4319 = vmatpush2.msra.mxu0 0.0
      %4320 = vmatprep.subr.mxu0 0.0
      %4321 = vmatpush2.msra.mxu0 0.0
      %4322 = vmatprep.mubr.f32.mxu0 0.0
      %4323 = vmatmul.mubr.f32.gmra.mxu0 %v4098
      %v4324 = vpop.f32.mrf.mxu0
      %v4325 = vadd.f32 %v4086, %v4324
      %v4326 = vpop.f32.mrf.mxu0
      %v4327 = vadd.f32 %v4086, %v4326
      %4328 = vdwg.mxu0
      %4329 = vmatprep.subr.mxu0 0.0
      %4330 = vmatpush1.msra.mxu0 0.0
      %4331 = vmatprep.subr.mxu0 0.0
      %4332 = vmatpush1.msra.mxu0 0.0
      %4333 = vmatprep.subr.mxu0 0.0
      %4334 = vmatpush1.msra.mxu0 0.0
      %4335 = vmatprep.subr.mxu0 0.0
      %4336 = vmatpush1.msra.mxu0 0.0
      %4337 = vmatprep.subr.mxu0 0.0
      %4338 = vmatpush1.msra.mxu0 0.0
      %4339 = vmatprep.subr.mxu0 0.0
      %4340 = vmatpush1.msra.mxu0 0.0
      %4341 = vmatprep.subr.mxu0 0.0
      %4342 = vmatpush1.msra.mxu0 0.0
      %4343 = vmatprep.subr.mxu0 0.0
      %4344 = vmatpush1.msra.mxu0 0.0
      %4345 = vmatprep.subr.mxu0 0.0
      %4346 = vmatpush1.msra.mxu0 0.0
      %4347 = vmatprep.subr.mxu0 0.0
      %4348 = vmatpush1.msra.mxu0 0.0
      %4349 = vmatprep.subr.mxu0 0.0
      %4350 = vmatpush1.msra.mxu0 0.0
      %4351 = vmatprep.subr.mxu0 0.0
      %4352 = vmatpush1.msra.mxu0 0.0
      %4353 = vmatprep.subr.mxu0 0.0
      %4354 = vmatpush1.msra.mxu0 0.0
      %4355 = vmatprep.subr.mxu0 0.0
      %4356 = vmatpush1.msra.mxu0 0.0
      %4357 = vmatprep.subr.mxu0 0.0
      %4358 = vmatpush1.msra.mxu0 0.0
      %4359 = vmatprep.subr.mxu0 %v4114
      %4360 = vmatpush1.msra.mxu0 %v4112
      %4361 = vmatprep.subr.mxu0 0.0
      %4362 = vmatpush2.msra.mxu0 0.0
      %4363 = vmatprep.subr.mxu0 0.0
      %4364 = vmatpush2.msra.mxu0 0.0
      %4365 = vmatprep.subr.mxu0 0.0
      %4366 = vmatpush2.msra.mxu0 0.0
      %4367 = vmatprep.subr.mxu0 0.0
      %4368 = vmatpush2.msra.mxu0 0.0
      %4369 = vmatprep.subr.mxu0 0.0
      %4370 = vmatpush2.msra.mxu0 0.0
      %4371 = vmatprep.subr.mxu0 0.0
      %4372 = vmatpush2.msra.mxu0 0.0
      %4373 = vmatprep.subr.mxu0 0.0
      %4374 = vmatpush2.msra.mxu0 0.0
      %4375 = vmatprep.subr.mxu0 0.0
      %4376 = vmatpush2.msra.mxu0 0.0
      %4377 = vmatprep.subr.mxu0 0.0
      %4378 = vmatpush2.msra.mxu0 0.0
      %4379 = vmatprep.subr.mxu0 0.0
      %4380 = vmatpush2.msra.mxu0 0.0
      %4381 = vmatprep.subr.mxu0 0.0
      %4382 = vmatpush2.msra.mxu0 0.0
      %4383 = vmatprep.subr.mxu0 0.0
      %4384 = vmatpush2.msra.mxu0 0.0
      %4385 = vmatprep.subr.mxu0 0.0
      %4386 = vmatpush2.msra.mxu0 0.0
      %4387 = vmatprep.subr.mxu0 0.0
      %4388 = vmatpush2.msra.mxu0 0.0
      %4389 = vmatprep.subr.mxu0 0.0
      %4390 = vmatpush2.msra.mxu0 0.0
      %4391 = vmatprep.subr.mxu0 0.0
      %4392 = vmatpush2.msra.mxu0 0.0
      %4393 = vmatprep.mubr.f32.mxu0 0.0
      %4394 = vmatmul.mubr.f32.gmra.mxu0 %v4098
      %v4395 = vpop.f32.mrf.mxu0
      %v4396 = vadd.f32 %v4086, %v4395
      %v4397 = vpop.f32.mrf.mxu0
      %v4398 = vadd.f32 %v4086, %v4397
      %4399 = vdwg.mxu0
      %v4400 = vadd.f32 %v4066, %v4183
      %v4401 = vadd.f32 %v4068, %v4185
      %v4402 = vadd.f32 %v4070, %v4254
      %v4403 = vadd.f32 %v4072, %v4256
      %v4404 = vadd.f32 %v4074, %v4325
      %v4405 = vadd.f32 %v4076, %v4327
      %v4406 = vadd.f32 %v4078, %v4396
      %v4407 = vadd.f32 %v4080, %v4398
      %4408 = vst [vmem:[%s406] sm:$0xff] %v4400
      %4409 = vst [vmem:[%s406 + $0x8] sm:$0xff] %v4401
      %4410 = vst [vmem:[%s406 + $0x10] sm:$0xff] %v4402
      %4411 = vst [vmem:[%s406 + $0x18] sm:$0xff] %v4403
      %4412 = vst [vmem:[%s406 + $0x20] sm:$0xff] %v4404
      %4413 = vst [vmem:[%s406 + $0x28] sm:$0xff] %v4405
      %4414 = vst [vmem:[%s406 + $0x30] sm:$0xff] %v4406
      %4415 = vst [vmem:[%s406 + $0x38] sm:$0xff] %v4407
      %p4416 = scmp.lt.s32.totalorder %s22, 1
      %s4417 = scalar_select %p4416, %s22, 1
      %s4418 = smul.addr %s4417, 8
      %s4419 = smul.addr %s4418, 8
      %s4420 = scalar_lea.vmem %s11, %s4419
      // Predicated region
      $region65: #{up_unet_block.1} parent=63 // pred_check
        %p4421 = pneg %p281
      $region66: #{up_unet_block.1} parent=63 // pred_check_branch
        %4423 = sbr.rel (%p4421) target = $region68
      $region67: #{up_unet_block.1} parent=63 // pred_region
        _
      $region68: #{up_unet_block.1} parent=63 // pred_fallthru
        _
    $region64: #{up_unet_block.1} parent=5 // pred_fallthru
      _
    %p4424 = scmp.le.s32.totalorder 2, %s17
    // Predicated region
    $region69: #{up_unet_block.1} parent=5 // pred_check
      %p4425 = pneg %p4424
    $region70: #{up_unet_block.1} parent=5 // pred_check_branch
      %4427 = sbr.rel (%p4425) target = $region72
    $region71: #{up_unet_block.1} parent=5 // pred_region
      %s4428 = ssub.s32 %s17, 2
      // Predicated region
      $region73: #{up_unet_block.1} parent=71 // pred_check
        %p4429 = pneg %p287
      $region74: #{up_unet_block.1} parent=71 // pred_check_branch
        %4431 = sbr.rel (%p4429) target = $region76
      $region75: #{up_unet_block.1} parent=71 // pred_region
        %p4432 = scmp.lt.s32.totalorder %s23, 1
        %s4433 = scalar_select %p4432, %s23, 1
        %s4434 = smul.addr %s4433, 8
        %s4435 = smul.addr %s4434, 8
        %s4436 = scalar_lea.vmem %s11, %s4435
      $region76: #{up_unet_block.1} parent=71 // pred_fallthru
        _
    $region72: #{up_unet_block.1} parent=5 // pred_fallthru
      _
  $region6: #{up_unet_block.1} parent=0 // loop_footer
    %s21 = sadd.s32 1, %s17
  $region7: #{up_unet_block.1} parent=0 // loop_footer_branch
    %16 = sbr.rel target = $region3
  $region8: #{up_unet_block.1} parent=0 // loop_exit
    _

</llo_original>
